<compile_context>
chip_gen: v6e
topology: v6e:2x2x1
jax: 0.10.0
libtpu: 0.0.40
codegen_flags: <defaults>
</compile_context>

<pallas_src>
import jax
import jax.numpy as jnp
from jax.experimental import pallas as pl
from jax.experimental.pallas import tpu as pltpu

EPS = 1e-5
LANE = 128                      # TPU lane width: keep channel dims lane-dense
MXU_DTYPE = jnp.bfloat16        # MXU operand dtype (f32 accumulation preserved)
VMEM_LIMIT = 32 * 1024 * 1024   # explicit scoped-VMEM budget (fits v5e/v6e/v7x)


def _round_up(x, m):
    return (x + m - 1) // m * m


# ---------------------------------------------------------------------------
# Kernel 1: 3x3 conv (3 aligned row-tap matmuls over a column-im2col'd input)
#           + bias + fused per-image BatchNorm partial stats (sum, sum-of-sq).
# Grid: one image per step, "parallel".
# ---------------------------------------------------------------------------
def conv3x3_stats_kernel(xcat_ref, w_ref, b_ref, y_ref, stats_ref):
    hp2, w_dim, k3 = xcat_ref.shape          # (H+2, W, 3*Cin_p), bf16
    h_dim = hp2 - 2
    m = h_dim * w_dim
    cpo = y_ref.shape[-1]

    acc = jnp.zeros((m, cpo), jnp.float32)
    # Three row taps: H-axis slices are on an untiled dim -> always aligned
    # (no sublane relayout). The three column taps were folded into the lane
    # (channel) axis by the wrapper, so each tap is a single lane-dense MXU
    # matmul with K = 3*Cin_p, bf16 operands, f32 accumulation.
    for di in range(3):
        patch = xcat_ref[di:di + h_dim, :, :].reshape(m, k3)
        acc = acc + jnp.dot(patch, w_ref[di],
                            preferred_element_type=jnp.float32)

    h = acc + b_ref[...]                      # (M, Cout_p) f32, pre-BN
    y_ref[...] = h
    # Single-pass BN statistics for this image (finalized globally outside the
    # grid -> exact cross-tile batch statistics).
    stats_ref[...] = jnp.concatenate(
        [jnp.sum(h, axis=0, keepdims=True),
         jnp.sum(h * h, axis=0, keepdims=True)], axis=0)


# ---------------------------------------------------------------------------
# Kernel 2: y = relu(x * scale + shift)  (BatchNorm affine + ReLU), tiled over
# lane-dense (rows, 128*k) blocks.
# ---------------------------------------------------------------------------
def bn_relu_kernel(x_ref, scale_ref, shift_ref, o_ref):
    y = x_ref[...] * scale_ref[...] + shift_ref[...]
    o_ref[...] = jnp.maximum(y, 0.0).astype(o_ref.dtype)


# ---------------------------------------------------------------------------
# Wrapper-side layout glue (pure data movement, no module compute).
# ---------------------------------------------------------------------------
def _pad_channels(x_nhwc, cp):
    c = x_nhwc.shape[-1]
    return jnp.pad(x_nhwc, ((0, 0), (0, 0), (0, 0), (0, cp - c)))


def _shift_triple(x_nhwc, dtype):
    """(N,H,W,C) -> (N,H+2,W,3C): 1-px zero halo, with the three column taps
    folded into the channel (lane) axis: out[n,hp,w,dj*C+c] = xpad[n,hp,w+dj,c]."""
    _, _, w, _ = x_nhwc.shape
    xp = jnp.pad(x_nhwc, ((0, 0), (1, 1), (1, 1), (0, 0)))
    cols = [xp[:, :, dj:dj + w, :] for dj in range(3)]
    return jnp.concatenate(cols, axis=-1).astype(dtype)


def _pack_weights(w_hwio, cpi, cpo, dtype):
    """(3,3,Cin,Cout) HWIO -> (3, 3*Cin_p, Cout_p): one lane-dense slab per
    kernel row; K ordering matches _shift_triple's channel layout.
    (A PyTorch Conv2d weight (Cout,Cin,3,3) maps to HWIO via transpose(2,3,1,0).)"""
    kh, kw, cin, cout = w_hwio.shape
    wp = jnp.zeros((kh, kw, cpi, cpo), jnp.float32)
    wp = wp.at[:, :, :cin, :cout].set(w_hwio.astype(jnp.float32))
    return wp.reshape(kh, kw * cpi, cpo).astype(dtype)


def _pad_row(v, cp):
    c = v.shape[-1]
    return jnp.pad(v.reshape(1, c).astype(jnp.float32), ((0, 0), (0, cp - c)))


# ---------------------------------------------------------------------------
# pallas_call wrappers
# ---------------------------------------------------------------------------
def _conv3x3_stats(xcat, w_row, b_row, h, w, cpo):
    n = xcat.shape[0]
    k3 = xcat.shape[-1]
    m = h * w
    return pl.pallas_call(
        conv3x3_stats_kernel,
        grid=(n,),
        in_specs=[
            pl.BlockSpec((None, h + 2, w, k3), lambda i: (i, 0, 0, 0)),
            pl.BlockSpec((3, k3, cpo), lambda i: (0, 0, 0)),
            pl.BlockSpec((1, cpo), lambda i: (0, 0)),
        ],
        out_specs=(
            pl.BlockSpec((None, m, cpo), lambda i: (i, 0, 0)),
            pl.BlockSpec((None, 2, cpo), lambda i: (i, 0, 0)),
        ),
        out_shape=(
            jax.ShapeDtypeStruct((n, m, cpo), jnp.float32),   # pre-BN activation
            jax.ShapeDtypeStruct((n, 2, cpo), jnp.float32),   # per-image (sum, sumsq)
        ),
        compiler_params=pltpu.CompilerParams(
            dimension_semantics=("parallel",),
            vmem_limit_bytes=VMEM_LIMIT),
    )(xcat, w_row, b_row)


def _bn_relu(y_pre, scale, shift, out_dtype, tile_m=256):
    mtot, cpo = y_pre.shape
    tm = tile_m if (tile_m <= mtot and mtot % tile_m == 0) else mtot
    return pl.pallas_call(
        bn_relu_kernel,
        grid=(mtot // tm,),
        in_specs=[
            pl.BlockSpec((tm, cpo), lambda i: (i, 0)),
            pl.BlockSpec((1, cpo), lambda i: (0, 0)),
            pl.BlockSpec((1, cpo), lambda i: (0, 0)),
        ],
        out_specs=pl.BlockSpec((tm, cpo), lambda i: (i, 0)),
        out_shape=jax.ShapeDtypeStruct((mtot, cpo), out_dtype),
        compiler_params=pltpu.CompilerParams(
            dimension_semantics=("parallel",),
            vmem_limit_bytes=VMEM_LIMIT),
    )(y_pre, scale, shift)


def _bn_affine(stats, gamma_row, beta_row, count):
    # Finalize the global (cross-tile) training-mode BatchNorm statistics and
    # fold them with gamma/beta into a single per-channel (scale, shift).
    s = jnp.sum(stats, axis=0)                       # (2, Cout_p)
    mean = s[0] / count
    var = jnp.maximum(s[1] / count - mean * mean, 0.0)   # biased var (PyTorch BN)
    inv = jax.lax.rsqrt(var + EPS)
    scale = gamma_row * inv                          # (1, Cout_p)
    shift = beta_row - mean * scale
    return scale, shift


@jax.jit
def double_conv_forward(x_nchw, params):
    n, cin, h, w = x_nchw.shape
    cout = params["w1"].shape[-1]
    cpi = _round_up(cin, LANE)
    cpo = _round_up(cout, LANE)
    m = n * h * w

    # ---- layout glue: NCHW -> NHWC, lane-dense (128-padded) channels ----
    x_nhwc = _pad_channels(jnp.transpose(x_nchw, (0, 2, 3, 1)), cpi)

    w1 = _pack_weights(params["w1"], cpi, cpo, MXU_DTYPE)
    w2 = _pack_weights(params["w2"], cpo, cpo, MXU_DTYPE)
    b1, b2 = _pad_row(params["b1"], cpo), _pad_row(params["b2"], cpo)
    g1, g2 = _pad_row(params["g1"], cpo), _pad_row(params["g2"], cpo)
    t1, t2 = _pad_row(params["bt1"], cpo), _pad_row(params["bt2"], cpo)

    # ---- block 1: conv -> (global) BN -> ReLU ----
    xcat1 = _shift_triple(x_nhwc, MXU_DTYPE)
    y1_pre, st1 = _conv3x3_stats(xcat1, w1, b1, h, w, cpo)
    sc1, sh1 = _bn_affine(st1, g1, t1, m)
    y1 = _bn_relu(y1_pre.reshape(m, cpo), sc1, sh1, MXU_DTYPE)

    # ---- block 2: conv -> (global) BN -> ReLU ----
    xcat2 = _shift_triple(y1.reshape(n, h, w, cpo), MXU_DTYPE)
    y2_pre, st2 = _conv3x3_stats(xcat2, w2, b2, h, w, cpo)
    sc2, sh2 = _bn_affine(st2, g2, t2, m)
    y2 = _bn_relu(y2_pre.reshape(m, cpo), sc2, sh2, jnp.float32)

    out = y2.reshape(n, h, w, cpo)[..., :cout]
    return jnp.transpose(out, (0, 3, 1, 2))          # back to NCHW (PyTorch layout)


# ---------------------------------------------------------------------------
# Pure-JAX f32 reference (exact PyTorch DoubleConv training-mode semantics).
# ---------------------------------------------------------------------------
def double_conv_ref(x_nchw, params):
    def block(x, w_hwio, b, g, bt):
        cout = w_hwio.shape[-1]
        y = jax.lax.conv_general_dilated(
            x, jnp.transpose(w_hwio, (3, 2, 0, 1)),          # HWIO -> OIHW
            window_strides=(1, 1), padding=((1, 1), (1, 1)),
            dimension_numbers=("NCHW", "OIHW", "NCHW"))
        y = y + b.reshape(1, cout, 1, 1)
        mean = jnp.mean(y, axis=(0, 2, 3), keepdims=True)
        var = jnp.mean((y - mean) ** 2, axis=(0, 2, 3), keepdims=True)
        y = (y - mean) * jax.lax.rsqrt(var + EPS) * g.reshape(1, cout, 1, 1) \
            + bt.reshape(1, cout, 1, 1)
        return jnp.maximum(y, 0.0)

    x = block(x_nchw, params["w1"], params["b1"], params["g1"], params["bt1"])
    x = block(x, params["w2"], params["b2"], params["g2"], params["bt2"])
    return x


if __name__ == "__main__":
    key = jax.random.PRNGKey(0)
    N, Cin, H, W = 2, 4, 16, 16
    Cout = 8
    ks = jax.random.split(key, 9)
    # Conv weights in HWIO (3,3,Cin,Cout); BN gamma/beta and conv biases as (Cout,).
    params = {
        "w1": 0.1 * jax.random.normal(ks[0], (3, 3, Cin, Cout), jnp.float32),
        "b1": 0.1 * jax.random.normal(ks[1], (Cout,), jnp.float32),
        "g1": 1.0 + 0.1 * jax.random.normal(ks[2], (Cout,), jnp.float32),
        "bt1": 0.1 * jax.random.normal(ks[3], (Cout,), jnp.float32),
        "w2": 0.1 * jax.random.normal(ks[4], (3, 3, Cout, Cout), jnp.float32),
        "b2": 0.1 * jax.random.normal(ks[5], (Cout,), jnp.float32),
        "g2": 1.0 + 0.1 * jax.random.normal(ks[6], (Cout,), jnp.float32),
        "bt2": 0.1 * jax.random.normal(ks[7], (Cout,), jnp.float32),
    }
    x = jax.random.normal(ks[8], (N, Cin, H, W), jnp.float32)

    out = jax.block_until_ready(double_conv_forward(x, params))
    ref = jax.block_until_ready(double_conv_ref(x, params))

    assert out.shape == (N, Cout, H, W), out.shape
    # Tolerance reflects bf16 MXU operands (with f32 accumulation and f32 BN
    # statistics) vs. the pure-f32 reference; set MXU_DTYPE=jnp.float32 for
    # bit-tighter agreement.
    max_err = float(jnp.max(jnp.abs(out - ref)))
    assert jnp.allclose(out, ref, rtol=5e-2, atol=5e-2), max_err
    print("KERNEL_OK")
</pallas_src>

<mosaic_0001>
module attributes {stable_mosaic.version = 11 : i64} {
  func.func @conv3x3_stats_kernel(%arg0: i32, %arg1: memref<1x18x16x384xbf16, #tpu.memory_space<vmem>>, %arg2: memref<3x384x128xbf16, #tpu.memory_space<vmem>>, %arg3: memref<1x128xf32, #tpu.memory_space<vmem>>, %arg4: memref<1x256x128xf32, #tpu.memory_space<vmem>>, %arg5: memref<1x2x128xf32, #tpu.memory_space<vmem>>) attributes {dimension_semantics = [#tpu.dimension_semantics<parallel>], iteration_bounds = array<i64: 2>, scalar_prefetch = 0 : i64, scratch_operands = 0 : i64, tpu.core_type = #tpu.core_type<tc>, window_params = [{transform_indices = @transform_0, window_bounds = array<i64: 1, 18, 16, 384>}, {pipeline_mode = #tpu.pipeline_mode<synchronous>, transform_indices = @transform_1, window_bounds = array<i64: 3, 384, 128>}, {pipeline_mode = #tpu.pipeline_mode<synchronous>, transform_indices = @transform_2, window_bounds = array<i64: 1, 128>}, {transform_indices = @transform_3, window_bounds = array<i64: 1, 256, 128>}, {transform_indices = @transform_4, window_bounds = array<i64: 1, 2, 128>}]} {
    %cst = arith.constant 0.000000e+00 : f32
    %0 = vector.broadcast %cst : f32 to vector<256x128xf32>
    %c0 = arith.constant 0 : index
    %c0_0 = arith.constant 0 : index
    %c0_1 = arith.constant 0 : index
    %c0_2 = arith.constant 0 : index
    %1 = vector.load %arg1[%c0, %c0_0, %c0_1, %c0_2] : memref<1x18x16x384xbf16, #tpu.memory_space<vmem>>, vector<1x16x16x384xbf16>
    %2 = vector.shape_cast %1 : vector<1x16x16x384xbf16> to vector<16x16x384xbf16>
    %3 = vector.shape_cast %2 : vector<16x16x384xbf16> to vector<256x384xbf16>
    %c0_3 = arith.constant 0 : index
    %c0_4 = arith.constant 0 : index
    %c0_5 = arith.constant 0 : index
    %4 = vector.load %arg2[%c0_3, %c0_4, %c0_5] : memref<3x384x128xbf16, #tpu.memory_space<vmem>>, vector<1x384x128xbf16>
    %5 = vector.shape_cast %4 : vector<1x384x128xbf16> to vector<384x128xbf16>
    %cst_6 = arith.constant dense<0.000000e+00> : vector<256x128xf32>
    %6 = tpu.matmul %3, %5, %cst_6 {dimension_numbers = #tpu.dot_dimension_numbers<[1], [0], [0], [1], [0, 0, 1, 1], [], []>} : vector<256x384xbf16>, vector<384x128xbf16>, vector<256x128xf32> -> vector<256x128xf32>
    %7 = arith.addf %0, %6 : vector<256x128xf32>
    %c0_7 = arith.constant 0 : index
    %c1 = arith.constant 1 : index
    %c0_8 = arith.constant 0 : index
    %c0_9 = arith.constant 0 : index
    %8 = vector.load %arg1[%c0_7, %c1, %c0_8, %c0_9] : memref<1x18x16x384xbf16, #tpu.memory_space<vmem>>, vector<1x16x16x384xbf16>
    %9 = vector.shape_cast %8 : vector<1x16x16x384xbf16> to vector<16x16x384xbf16>
    %10 = vector.shape_cast %9 : vector<16x16x384xbf16> to vector<256x384xbf16>
    %c1_10 = arith.constant 1 : index
    %c0_11 = arith.constant 0 : index
    %c0_12 = arith.constant 0 : index
    %11 = vector.load %arg2[%c1_10, %c0_11, %c0_12] : memref<3x384x128xbf16, #tpu.memory_space<vmem>>, vector<1x384x128xbf16>
    %12 = vector.shape_cast %11 : vector<1x384x128xbf16> to vector<384x128xbf16>
    %cst_13 = arith.constant dense<0.000000e+00> : vector<256x128xf32>
    %13 = tpu.matmul %10, %12, %cst_13 {dimension_numbers = #tpu.dot_dimension_numbers<[1], [0], [0], [1], [0, 0, 1, 1], [], []>} : vector<256x384xbf16>, vector<384x128xbf16>, vector<256x128xf32> -> vector<256x128xf32>
    %14 = arith.addf %7, %13 : vector<256x128xf32>
    %c0_14 = arith.constant 0 : index
    %c2 = arith.constant 2 : index
    %c0_15 = arith.constant 0 : index
    %c0_16 = arith.constant 0 : index
    %15 = vector.load %arg1[%c0_14, %c2, %c0_15, %c0_16] : memref<1x18x16x384xbf16, #tpu.memory_space<vmem>>, vector<1x16x16x384xbf16>
    %16 = vector.shape_cast %15 : vector<1x16x16x384xbf16> to vector<16x16x384xbf16>
    %17 = vector.shape_cast %16 : vector<16x16x384xbf16> to vector<256x384xbf16>
    %c2_17 = arith.constant 2 : index
    %c0_18 = arith.constant 0 : index
    %c0_19 = arith.constant 0 : index
    %18 = vector.load %arg2[%c2_17, %c0_18, %c0_19] : memref<3x384x128xbf16, #tpu.memory_space<vmem>>, vector<1x384x128xbf16>
    %19 = vector.shape_cast %18 : vector<1x384x128xbf16> to vector<384x128xbf16>
    %cst_20 = arith.constant dense<0.000000e+00> : vector<256x128xf32>
    %20 = tpu.matmul %17, %19, %cst_20 {dimension_numbers = #tpu.dot_dimension_numbers<[1], [0], [0], [1], [0, 0, 1, 1], [], []>} : vector<256x384xbf16>, vector<384x128xbf16>, vector<256x128xf32> -> vector<256x128xf32>
    %21 = arith.addf %14, %20 : vector<256x128xf32>
    %c0_21 = arith.constant 0 : index
    %c0_22 = arith.constant 0 : index
    %22 = vector.load %arg3[%c0_21, %c0_22] : memref<1x128xf32, #tpu.memory_space<vmem>>, vector<1x128xf32>
    %23 = vector.broadcast %22 : vector<1x128xf32> to vector<256x128xf32>
    %24 = arith.addf %21, %23 : vector<256x128xf32>
    %c0_23 = arith.constant 0 : index
    %c0_24 = arith.constant 0 : index
    %c0_25 = arith.constant 0 : index
    %25 = vector.load %arg4[%c0_23, %c0_24, %c0_25] : memref<1x256x128xf32, #tpu.memory_space<vmem>>, vector<1x256x128xf32>
    %26 = vector.shape_cast %25 : vector<1x256x128xf32> to vector<256x128xf32>
    %27 = vector.shape_cast %24 : vector<256x128xf32> to vector<1x256x128xf32>
    tpu.vector_store %arg4[%c0_23, %c0_24, %c0_25], %27 {strides = array<i32>} : memref<1x256x128xf32, #tpu.memory_space<vmem>>, vector<1x256x128xf32>,
    %cst_26 = arith.constant dense<0.000000e+00> : vector<128xf32>
    %28 = vector.multi_reduction <add>, %24, %cst_26 [0] : vector<256x128xf32> to vector<128xf32>
    %29 = vector.shape_cast %28 : vector<128xf32> to vector<1x128xf32>
    %30 = arith.mulf %24, %24 : vector<256x128xf32>
    %cst_27 = arith.constant dense<0.000000e+00> : vector<128xf32>
    %31 = vector.multi_reduction <add>, %30, %cst_27 [0] : vector<256x128xf32> to vector<128xf32>
    %32 = vector.shape_cast %31 : vector<128xf32> to vector<1x128xf32>
    %33 = tpu.concatenate %29, %32 in 0 : vector<1x128xf32>, vector<1x128xf32> -> vector<2x128xf32>
    %c0_28 = arith.constant 0 : index
    %c0_29 = arith.constant 0 : index
    %c0_30 = arith.constant 0 : index
    %34 = vector.load %arg5[%c0_28, %c0_29, %c0_30] : memref<1x2x128xf32, #tpu.memory_space<vmem>>, vector<1x2x128xf32>
    %35 = vector.shape_cast %34 : vector<1x2x128xf32> to vector<2x128xf32>
    %36 = vector.shape_cast %33 : vector<2x128xf32> to vector<1x2x128xf32>
    tpu.vector_store %arg5[%c0_28, %c0_29, %c0_30], %36 {strides = array<i32>} : memref<1x2x128xf32, #tpu.memory_space<vmem>>, vector<1x2x128xf32>,
    return
  }
  func.func @transform_0(%arg0: i32) -> (i32, i32, i32, i32) {
    %c0_i32 = arith.constant 0 : i32
    %c0_i32_0 = arith.constant 0 : i32
    %c0_i32_1 = arith.constant 0 : i32
    %c0_i32_2 = arith.constant 0 : i32
    return %arg0, %c0_i32, %c0_i32_0, %c0_i32_1 : i32, i32, i32, i32
  }
  func.func @transform_1(%arg0: i32) -> (i32, i32, i32) {
    %c0_i32 = arith.constant 0 : i32
    %c0_i32_0 = arith.constant 0 : i32
    %c0_i32_1 = arith.constant 0 : i32
    %c0_i32_2 = arith.constant 0 : i32
    return %c0_i32, %c0_i32_0, %c0_i32_1 : i32, i32, i32
  }
  func.func @transform_2(%arg0: i32) -> (i32, i32) {
    %c0_i32 = arith.constant 0 : i32
    %c0_i32_0 = arith.constant 0 : i32
    %c0_i32_1 = arith.constant 0 : i32
    return %c0_i32, %c0_i32_0 : i32, i32
  }
  func.func @transform_3(%arg0: i32) -> (i32, i32, i32) {
    %c0_i32 = arith.constant 0 : i32
    %c0_i32_0 = arith.constant 0 : i32
    %c0_i32_1 = arith.constant 0 : i32
    return %arg0, %c0_i32, %c0_i32_0 : i32, i32, i32
  }
  func.func @transform_4(%arg0: i32) -> (i32, i32, i32) {
    %c0_i32 = arith.constant 0 : i32
    %c0_i32_0 = arith.constant 0 : i32
    %c0_i32_1 = arith.constant 0 : i32
    return %arg0, %c0_i32, %c0_i32_0 : i32, i32, i32
  }
}

module attributes {stable_mosaic.version = 11 : i64} {
  func.func @bn_relu_kernel(%arg0: i32, %arg1: memref<256x128xf32, #tpu.memory_space<vmem>>, %arg2: memref<1x128xf32, #tpu.memory_space<vmem>>, %arg3: memref<1x128xf32, #tpu.memory_space<vmem>>, %arg4: memref<256x128xbf16, #tpu.memory_space<vmem>>) attributes {dimension_semantics = [#tpu.dimension_semantics<parallel>], iteration_bounds = array<i64: 2>, scalar_prefetch = 0 : i64, scratch_operands = 0 : i64, tpu.core_type = #tpu.core_type<tc>, window_params = [{transform_indices = @transform_0, window_bounds = array<i64: 256, 128>}, {pipeline_mode = #tpu.pipeline_mode<synchronous>, transform_indices = @transform_1, window_bounds = array<i64: 1, 128>}, {pipeline_mode = #tpu.pipeline_mode<synchronous>, transform_indices = @transform_2, window_bounds = array<i64: 1, 128>}, {transform_indices = @transform_3, window_bounds = array<i64: 256, 128>}]} {
    %c0 = arith.constant 0 : index
    %c0_0 = arith.constant 0 : index
    %0 = vector.load %arg1[%c0, %c0_0] : memref<256x128xf32, #tpu.memory_space<vmem>>, vector<256x128xf32>
    %c0_1 = arith.constant 0 : index
    %c0_2 = arith.constant 0 : index
    %1 = vector.load %arg2[%c0_1, %c0_2] : memref<1x128xf32, #tpu.memory_space<vmem>>, vector<1x128xf32>
    %2 = vector.broadcast %1 : vector<1x128xf32> to vector<256x128xf32>
    %3 = arith.mulf %0, %2 : vector<256x128xf32>
    %c0_3 = arith.constant 0 : index
    %c0_4 = arith.constant 0 : index
    %4 = vector.load %arg3[%c0_3, %c0_4] : memref<1x128xf32, #tpu.memory_space<vmem>>, vector<1x128xf32>
    %5 = vector.broadcast %4 : vector<1x128xf32> to vector<256x128xf32>
    %6 = arith.addf %3, %5 : vector<256x128xf32>
    %cst = arith.constant 0.000000e+00 : f32
    %7 = vector.broadcast %cst : f32 to vector<256x128xf32>
    %8 = arith.maximumf %6, %7 : vector<256x128xf32>
    %9 = arith.truncf %8 : vector<256x128xf32> to vector<256x128xbf16>
    %c0_5 = arith.constant 0 : index
    %c0_6 = arith.constant 0 : index
    %10 = vector.load %arg4[%c0_5, %c0_6] : memref<256x128xbf16, #tpu.memory_space<vmem>>, vector<256x128xbf16>
    tpu.vector_store %arg4[%c0_5, %c0_6], %9 {strides = array<i32>} : memref<256x128xbf16, #tpu.memory_space<vmem>>, vector<256x128xbf16>,
    return
  }
  func.func @transform_0(%arg0: i32) -> (i32, i32) {
    %c0_i32 = arith.constant 0 : i32
    %c0_i32_0 = arith.constant 0 : i32
    return %arg0, %c0_i32 : i32, i32
  }
  func.func @transform_1(%arg0: i32) -> (i32, i32) {
    %c0_i32 = arith.constant 0 : i32
    %c0_i32_0 = arith.constant 0 : i32
    %c0_i32_1 = arith.constant 0 : i32
    return %c0_i32, %c0_i32_0 : i32, i32
  }
  func.func @transform_2(%arg0: i32) -> (i32, i32) {
    %c0_i32 = arith.constant 0 : i32
    %c0_i32_0 = arith.constant 0 : i32
    %c0_i32_1 = arith.constant 0 : i32
    return %c0_i32, %c0_i32_0 : i32, i32
  }
  func.func @transform_3(%arg0: i32) -> (i32, i32) {
    %c0_i32 = arith.constant 0 : i32
    %c0_i32_0 = arith.constant 0 : i32
    return %arg0, %c0_i32 : i32, i32
  }
}

module attributes {stable_mosaic.version = 11 : i64} {
  func.func @bn_relu_kernel(%arg0: i32, %arg1: memref<256x128xf32, #tpu.memory_space<vmem>>, %arg2: memref<1x128xf32, #tpu.memory_space<vmem>>, %arg3: memref<1x128xf32, #tpu.memory_space<vmem>>, %arg4: memref<256x128xf32, #tpu.memory_space<vmem>>) attributes {dimension_semantics = [#tpu.dimension_semantics<parallel>], iteration_bounds = array<i64: 2>, scalar_prefetch = 0 : i64, scratch_operands = 0 : i64, tpu.core_type = #tpu.core_type<tc>, window_params = [{transform_indices = @transform_0, window_bounds = array<i64: 256, 128>}, {pipeline_mode = #tpu.pipeline_mode<synchronous>, transform_indices = @transform_1, window_bounds = array<i64: 1, 128>}, {pipeline_mode = #tpu.pipeline_mode<synchronous>, transform_indices = @transform_2, window_bounds = array<i64: 1, 128>}, {transform_indices = @transform_3, window_bounds = array<i64: 256, 128>}]} {
    %c0 = arith.constant 0 : index
    %c0_0 = arith.constant 0 : index
    %0 = vector.load %arg1[%c0, %c0_0] : memref<256x128xf32, #tpu.memory_space<vmem>>, vector<256x128xf32>
    %c0_1 = arith.constant 0 : index
    %c0_2 = arith.constant 0 : index
    %1 = vector.load %arg2[%c0_1, %c0_2] : memref<1x128xf32, #tpu.memory_space<vmem>>, vector<1x128xf32>
    %2 = vector.broadcast %1 : vector<1x128xf32> to vector<256x128xf32>
    %3 = arith.mulf %0, %2 : vector<256x128xf32>
    %c0_3 = arith.constant 0 : index
    %c0_4 = arith.constant 0 : index
    %4 = vector.load %arg3[%c0_3, %c0_4] : memref<1x128xf32, #tpu.memory_space<vmem>>, vector<1x128xf32>
    %5 = vector.broadcast %4 : vector<1x128xf32> to vector<256x128xf32>
    %6 = arith.addf %3, %5 : vector<256x128xf32>
    %cst = arith.constant 0.000000e+00 : f32
    %7 = vector.broadcast %cst : f32 to vector<256x128xf32>
    %8 = arith.maximumf %6, %7 : vector<256x128xf32>
    %c0_5 = arith.constant 0 : index
    %c0_6 = arith.constant 0 : index
    %9 = vector.load %arg4[%c0_5, %c0_6] : memref<256x128xf32, #tpu.memory_space<vmem>>, vector<256x128xf32>
    tpu.vector_store %arg4[%c0_5, %c0_6], %8 {strides = array<i32>} : memref<256x128xf32, #tpu.memory_space<vmem>>, vector<256x128xf32>,
    return
  }
  func.func @transform_0(%arg0: i32) -> (i32, i32) {
    %c0_i32 = arith.constant 0 : i32
    %c0_i32_0 = arith.constant 0 : i32
    return %arg0, %c0_i32 : i32, i32
  }
  func.func @transform_1(%arg0: i32) -> (i32, i32) {
    %c0_i32 = arith.constant 0 : i32
    %c0_i32_0 = arith.constant 0 : i32
    %c0_i32_1 = arith.constant 0 : i32
    return %c0_i32, %c0_i32_0 : i32, i32
  }
  func.func @transform_2(%arg0: i32) -> (i32, i32) {
    %c0_i32 = arith.constant 0 : i32
    %c0_i32_0 = arith.constant 0 : i32
    %c0_i32_1 = arith.constant 0 : i32
    return %c0_i32, %c0_i32_0 : i32, i32
  }
  func.func @transform_3(%arg0: i32) -> (i32, i32) {
    %c0_i32 = arith.constant 0 : i32
    %c0_i32_0 = arith.constant 0 : i32
    return %arg0, %c0_i32 : i32, i32
  }
}

</mosaic_0001>

<llo_original>
// kernel: double_conv_forward.5
$region0: #{double_conv_forward.5}
  #allocation0 [shape = 'u32[]', space=smem, size = 0x4, offset = 0x4, fixed_abs, tag = 'smem constant byte address 0x4 - core index']
  #allocation1 [shape = 'u32[144,128]{1,0:T(1,128)}', space=vmem, size = 0x12000, scoped, tag = 'internal scratch']
  %s0 = inlined_call_operand.vmem [shape: f32[512,128], index: 0, kind: input, shape index: {}]
  %s1 = inlined_call_operand.vmem [shape: f32[1,128], index: 1, kind: input, shape index: {}]
  %s2 = inlined_call_operand.vmem [shape: f32[1,128], index: 2, kind: input, shape index: {}]
  %s3 = inlined_call_operand.vmem [shape: bf16[512,128], index: 3, kind: output, shape index: {}]
  %s4 = sld [smem:[#allocation0]]
  $region45: #{double_conv_forward.5} parent=0
    _
  %s6 = ssub.s32 1, %s4
  %s7 = scalar_select 0, %s6, %s4
  loop: start=0, step=1, limit=4
  $region2: #{double_conv_forward.5} parent=0 // loop_pre_header
    _
  $region3: #{double_conv_forward.5} parent=0 // loop_header
    %s9 = sphi 0, %s13
    %p10 = scmp.ge.s32.totalorder %s9, 4
    %s19 = sphi 0, %s21
    %s22 = sphi 0, %s19
    %s23 = sphi 0, %s22
    %s39 = sphi 0, %s23
    %s43 = sphi 0, %s43
    %s45 = sphi 0, %s43
    %s46 = sphi 0, %s45
    %s60 = sphi 0, %s46
    %s64 = sphi 0, %s64
    %s66 = sphi 0, %s64
    %s67 = sphi 0, %s66
    %s81 = sphi 0, %s67
    %s87 = sphi 0, %s89
    %s90 = sphi 0, %s87
    %s91 = sphi 0, %s90
    %s107 = sphi 0, %s91
  $region4: #{double_conv_forward.5} parent=0 // loop_header_branch
    %12 = sbr.rel (%p10) target = $region8
  $region5: #{double_conv_forward.5} parent=0 // loop_body
    %s14 = ssub.s32 %s9, 1
    %s15 = ssub.s32 %s9, 2
    %s16 = sadd.s32 %s9, 1
    %s17 = ssub.s32 %s9, %s16
    %p18 = scmp.eq.s32.totalorder %s17, 0
    %s20 = sadd.s32 %s19, 1
    %s21 = scalar_select %p18, %s19, %s20
    %p24 = pneg %p18
    %p25 = scmp.eq.s32.totalorder %s9, 1
    %p26 = por %p24, %p25
    %p27 = scmp.ne.s32.totalorder %s19, %s22
    %p28 = scmp.eq.s32.totalorder %s9, 0
    %p29 = por %p27, %p28
    %p30 = scmp.ne.s32.totalorder %s19, %s22
    %p31 = scmp.eq.s32.totalorder %s14, 1
    %p32 = por %p30, %p31
    %p33 = scmp.ne.s32.totalorder %s22, %s23
    %p34 = scmp.eq.s32.totalorder %s14, 0
    %p35 = por %p33, %p34
    %p36 = scmp.ne.s32.totalorder %s22, %s23
    %p37 = scmp.eq.s32.totalorder %s15, 1
    %p38 = por %p36, %p37
    %p40 = scmp.ne.s32.totalorder %s23, %s39
    %p41 = scmp.eq.s32.totalorder %s15, 0
    %p42 = por %p40, %p41
    %s44 = sadd.s32 %s43, 1
    %p47 = scmp.eq.s32.totalorder %s9, 1
    %p48 = scmp.ne.s32.totalorder %s43, %s45
    %p49 = scmp.eq.s32.totalorder %s9, 0
    %p50 = por %p48, %p49
    %p51 = scmp.ne.s32.totalorder %s43, %s45
    %p52 = scmp.eq.s32.totalorder %s14, 1
    %p53 = por %p51, %p52
    %p54 = scmp.ne.s32.totalorder %s45, %s46
    %p55 = scmp.eq.s32.totalorder %s14, 0
    %p56 = por %p54, %p55
    %p57 = scmp.ne.s32.totalorder %s45, %s46
    %p58 = scmp.eq.s32.totalorder %s15, 1
    %p59 = por %p57, %p58
    %p61 = scmp.ne.s32.totalorder %s46, %s60
    %p62 = scmp.eq.s32.totalorder %s15, 0
    %p63 = por %p61, %p62
    %s65 = sadd.s32 %s64, 1
    %p68 = scmp.eq.s32.totalorder %s9, 1
    %p69 = scmp.ne.s32.totalorder %s64, %s66
    %p70 = scmp.eq.s32.totalorder %s9, 0
    %p71 = por %p69, %p70
    %p72 = scmp.ne.s32.totalorder %s64, %s66
    %p73 = scmp.eq.s32.totalorder %s14, 1
    %p74 = por %p72, %p73
    %p75 = scmp.ne.s32.totalorder %s66, %s67
    %p76 = scmp.eq.s32.totalorder %s14, 0
    %p77 = por %p75, %p76
    %p78 = scmp.ne.s32.totalorder %s66, %s67
    %p79 = scmp.eq.s32.totalorder %s15, 1
    %p80 = por %p78, %p79
    %p82 = scmp.ne.s32.totalorder %s67, %s81
    %p83 = scmp.eq.s32.totalorder %s15, 0
    %p84 = por %p82, %p83
    %s85 = ssub.s32 %s9, %s16
    %p86 = scmp.eq.s32.totalorder %s85, 0
    %s88 = sadd.s32 %s87, 1
    %s89 = scalar_select %p86, %s87, %s88
    %p92 = pneg %p86
    %p93 = scmp.eq.s32.totalorder %s9, 1
    %p94 = por %p92, %p93
    %p95 = scmp.ne.s32.totalorder %s87, %s90
    %p96 = scmp.eq.s32.totalorder %s9, 0
    %p97 = por %p95, %p96
    %p98 = scmp.ne.s32.totalorder %s87, %s90
    %p99 = scmp.eq.s32.totalorder %s14, 1
    %p100 = por %p98, %p99
    %p101 = scmp.ne.s32.totalorder %s90, %s91
    %p102 = scmp.eq.s32.totalorder %s14, 0
    %p103 = por %p101, %p102
    %p104 = scmp.ne.s32.totalorder %s90, %s91
    %p105 = scmp.eq.s32.totalorder %s15, 1
    %p106 = por %p104, %p105
    %p108 = scmp.ne.s32.totalorder %s91, %s107
    %p109 = scmp.eq.s32.totalorder %s15, 0
    %p110 = por %p108, %p109
    %p111 = scmp.le.s32.totalorder 1, %s9
    %p112 = scmp.lt.s32.totalorder %s9, 3
    %p113 = pnand %p111, %p112
    %p114 = pneg %p113
    // Predicated region
    $region9: #{double_conv_forward.5} parent=5 // pred_check
      _
    $region10: #{double_conv_forward.5} parent=5 // pred_check_branch
      %116 = sbr.rel (%p113) target = $region12
    $region11: #{double_conv_forward.5} parent=5 // pred_region
      %s117 = ssub.s32 %s9, 1
      // Predicated region
      $region13: #{double_conv_forward.5} parent=11 // pred_check
        %p118 = pneg %p56
      $region14: #{double_conv_forward.5} parent=11 // pred_check_branch
        %120 = sbr.rel (%p118) target = $region16
      $region15: #{double_conv_forward.5} parent=11 // pred_region
        _
      $region16: #{double_conv_forward.5} parent=11 // pred_fallthru
        _
      // Predicated region
      $region17: #{double_conv_forward.5} parent=11 // pred_check
        %p121 = pneg %p77
      $region18: #{double_conv_forward.5} parent=11 // pred_check_branch
        %123 = sbr.rel (%p121) target = $region20
      $region19: #{double_conv_forward.5} parent=11 // pred_region
        _
      $region20: #{double_conv_forward.5} parent=11 // pred_fallthru
        _
    $region12: #{double_conv_forward.5} parent=5 // pred_fallthru
      _
    %p124 = scmp.lt.s32.totalorder %s9, 2
    // Predicated region
    $region21: #{double_conv_forward.5} parent=5 // pred_check
      %p125 = pneg %p124
    $region22: #{double_conv_forward.5} parent=5 // pred_check_branch
      %127 = sbr.rel (%p125) target = $region24
    $region23: #{double_conv_forward.5} parent=5 // pred_region
      // Predicated region
      $region25: #{double_conv_forward.5} parent=23 // pred_check
        %p128 = pneg %p29
      $region26: #{double_conv_forward.5} parent=23 // pred_check_branch
        %130 = sbr.rel (%p128) target = $region28
      $region27: #{double_conv_forward.5} parent=23 // pred_region
        %s131 = smul.u32 32, %s9
        %p132 = scmp.lt.s32.totalorder %s131, 63
        %s133 = scalar_select %p132, %s131, 63
        %s134 = smul.addr %s133, 8
        %s135 = scalar_lea.vmem %s0, %s134
        %s136 = smul.u32 32, %s9
      $region28: #{double_conv_forward.5} parent=23 // pred_fallthru
        _
    $region24: #{double_conv_forward.5} parent=5 // pred_fallthru
      _
    %p137 = scmp.le.s32.totalorder 1, %s9
    %p138 = scmp.lt.s32.totalorder %s9, 3
    %p139 = pnand %p137, %p138
    %p140 = pneg %p139
    // Predicated region
    $region29: #{double_conv_forward.5} parent=5 // pred_check
      _
    $region30: #{double_conv_forward.5} parent=5 // pred_check_branch
      %142 = sbr.rel (%p139) target = $region32
    $region31: #{double_conv_forward.5} parent=5 // pred_region
      %s143 = ssub.s32 %s9, 1
      %s144 = smul.u32 32, %s14
      %p145 = scmp.lt.s32.totalorder %s144, 63
      %s146 = scalar_select %p145, %s144, 63
      %s147 = smul.addr %s146, 8
      %s148 = scalar_lea.vmem %s0, %s147
      %p149 = pneg %p35
      %p150 = pneg %p32
      %p151 = pneg %p56
      %p152 = pneg %p53
      %p153 = pneg %p77
      %p154 = pneg %p74
      %p155 = pneg %p103
      %p156 = pneg %p100
      %s157 = smul.u32 32, %s14
      %p158 = scmp.lt.s32.totalorder %s157, 63
      %s159 = scalar_select %p158, %s157, 63
      %s160 = smul.addr %s159, 4
      %s161 = scalar_lea.vmem %s3, %s160
      %s162 = smul.u32 32, %s14
      %p163 = scmp.lt.s32.totalorder %s162, 63
      %s164 = scalar_select %p163, %s162, 63
      %s165 = smul.addr %s164, 8
      %s166 = scalar_lea.vmem %s0, %s165
      %s167 = smul.u32 32, %s14
      %s168 = smul.u32 32, %s14
      %p169 = scmp.lt.s32.totalorder %s168, 63
      %s170 = scalar_select %p169, %s168, 63
      %s171 = smul.addr %s170, 4
      %s172 = scalar_lea.vmem %s3, %s171
      %s173 = smul.u32 32, %s14
      %v174 = vld [vmem:[%s166] sm:$0xff]
      %v175 = vld [vmem:[%s166 + $0x8] sm:$0xff]
      %v176 = vld [vmem:[%s166 + $0x10] sm:$0xff]
      %v177 = vld [vmem:[%s166 + $0x18] sm:$0xff]
      %v178 = vld [vmem:[%s166 + $0x20] sm:$0xff]
      %v179 = vld [vmem:[%s166 + $0x28] sm:$0xff]
      %v180 = vld [vmem:[%s166 + $0x30] sm:$0xff]
      %v181 = vld [vmem:[%s166 + $0x38] sm:$0xff]
      %v182 = vld [vmem:[%s166 + $0x40] sm:$0xff]
      %v183 = vld [vmem:[%s166 + $0x48] sm:$0xff]
      %v184 = vld [vmem:[%s166 + $0x50] sm:$0xff]
      %v185 = vld [vmem:[%s166 + $0x58] sm:$0xff]
      %v186 = vld [vmem:[%s166 + $0x60] sm:$0xff]
      %v187 = vld [vmem:[%s166 + $0x68] sm:$0xff]
      %v188 = vld [vmem:[%s166 + $0x70] sm:$0xff]
      %v189 = vld [vmem:[%s166 + $0x78] sm:$0xff]
      %v190 = vld [vmem:[%s166 + $0x80] sm:$0xff]
      %v191 = vld [vmem:[%s166 + $0x88] sm:$0xff]
      %v192 = vld [vmem:[%s166 + $0x90] sm:$0xff]
      %v193 = vld [vmem:[%s166 + $0x98] sm:$0xff]
      %v194 = vld [vmem:[%s166 + $0xa0] sm:$0xff]
      %v195 = vld [vmem:[%s166 + $0xa8] sm:$0xff]
      %v196 = vld [vmem:[%s166 + $0xb0] sm:$0xff]
      %v197 = vld [vmem:[%s166 + $0xb8] sm:$0xff]
      %v198 = vld [vmem:[%s166 + $0xc0] sm:$0xff]
      %v199 = vld [vmem:[%s166 + $0xc8] sm:$0xff]
      %v200 = vld [vmem:[%s166 + $0xd0] sm:$0xff]
      %v201 = vld [vmem:[%s166 + $0xd8] sm:$0xff]
      %v202 = vld [vmem:[%s166 + $0xe0] sm:$0xff]
      %v203 = vld [vmem:[%s166 + $0xe8] sm:$0xff]
      %v204 = vld [vmem:[%s166 + $0xf0] sm:$0xff]
      %v205 = vld [vmem:[%s166 + $0xf8] sm:$0xff]
      %v206 = vld [vmem:[%s1] sm:$0x1]
      %v208 = vlaneseq
      %v209 = vshrl.u32 %v208, 7
      %v210 = vsub.s32 0, %v209
      %v211 = vrot.slane %v206, %v210
      %v213 = vmul.f32 %v174, %v211
      %v214 = vmul.f32 %v175, %v211
      %v215 = vmul.f32 %v176, %v211
      %v216 = vmul.f32 %v177, %v211
      %v217 = vmul.f32 %v178, %v211
      %v218 = vmul.f32 %v179, %v211
      %v219 = vmul.f32 %v180, %v211
      %v220 = vmul.f32 %v181, %v211
      %v221 = vmul.f32 %v182, %v211
      %v222 = vmul.f32 %v183, %v211
      %v223 = vmul.f32 %v184, %v211
      %v224 = vmul.f32 %v185, %v211
      %v225 = vmul.f32 %v186, %v211
      %v226 = vmul.f32 %v187, %v211
      %v227 = vmul.f32 %v188, %v211
      %v228 = vmul.f32 %v189, %v211
      %v229 = vmul.f32 %v190, %v211
      %v230 = vmul.f32 %v191, %v211
      %v231 = vmul.f32 %v192, %v211
      %v232 = vmul.f32 %v193, %v211
      %v233 = vmul.f32 %v194, %v211
      %v234 = vmul.f32 %v195, %v211
      %v235 = vmul.f32 %v196, %v211
      %v236 = vmul.f32 %v197, %v211
      %v237 = vmul.f32 %v198, %v211
      %v238 = vmul.f32 %v199, %v211
      %v239 = vmul.f32 %v200, %v211
      %v240 = vmul.f32 %v201, %v211
      %v241 = vmul.f32 %v202, %v211
      %v242 = vmul.f32 %v203, %v211
      %v243 = vmul.f32 %v204, %v211
      %v244 = vmul.f32 %v205, %v211
      %v245 = vld [vmem:[%s2] sm:$0x1]
      %v247 = vlaneseq
      %v248 = vshrl.u32 %v247, 7
      %v249 = vsub.s32 0, %v248
      %v250 = vrot.slane %v245, %v249
      %v252 = vadd.f32 %v213, %v250
      %v253 = vadd.f32 %v214, %v250
      %v254 = vadd.f32 %v215, %v250
      %v255 = vadd.f32 %v216, %v250
      %v256 = vadd.f32 %v217, %v250
      %v257 = vadd.f32 %v218, %v250
      %v258 = vadd.f32 %v219, %v250
      %v259 = vadd.f32 %v220, %v250
      %v260 = vadd.f32 %v221, %v250
      %v261 = vadd.f32 %v222, %v250
      %v262 = vadd.f32 %v223, %v250
      %v263 = vadd.f32 %v224, %v250
      %v264 = vadd.f32 %v225, %v250
      %v265 = vadd.f32 %v226, %v250
      %v266 = vadd.f32 %v227, %v250
      %v267 = vadd.f32 %v228, %v250
      %v268 = vadd.f32 %v229, %v250
      %v269 = vadd.f32 %v230, %v250
      %v270 = vadd.f32 %v231, %v250
      %v271 = vadd.f32 %v232, %v250
      %v272 = vadd.f32 %v233, %v250
      %v273 = vadd.f32 %v234, %v250
      %v274 = vadd.f32 %v235, %v250
      %v275 = vadd.f32 %v236, %v250
      %v276 = vadd.f32 %v237, %v250
      %v277 = vadd.f32 %v238, %v250
      %v278 = vadd.f32 %v239, %v250
      %v279 = vadd.f32 %v240, %v250
      %v280 = vadd.f32 %v241, %v250
      %v281 = vadd.f32 %v242, %v250
      %v282 = vadd.f32 %v243, %v250
      %v283 = vadd.f32 %v244, %v250
      %v284 = vmax.f32 %v252, 0.0
      %v285 = vmax.f32 %v253, 0.0
      %v286 = vmax.f32 %v254, 0.0
      %v287 = vmax.f32 %v255, 0.0
      %v288 = vmax.f32 %v256, 0.0
      %v289 = vmax.f32 %v257, 0.0
      %v290 = vmax.f32 %v258, 0.0
      %v291 = vmax.f32 %v259, 0.0
      %v292 = vmax.f32 %v260, 0.0
      %v293 = vmax.f32 %v261, 0.0
      %v294 = vmax.f32 %v262, 0.0
      %v295 = vmax.f32 %v263, 0.0
      %v296 = vmax.f32 %v264, 0.0
      %v297 = vmax.f32 %v265, 0.0
      %v298 = vmax.f32 %v266, 0.0
      %v299 = vmax.f32 %v267, 0.0
      %v300 = vmax.f32 %v268, 0.0
      %v301 = vmax.f32 %v269, 0.0
      %v302 = vmax.f32 %v270, 0.0
      %v303 = vmax.f32 %v271, 0.0
      %v304 = vmax.f32 %v272, 0.0
      %v305 = vmax.f32 %v273, 0.0
      %v306 = vmax.f32 %v274, 0.0
      %v307 = vmax.f32 %v275, 0.0
      %v308 = vmax.f32 %v276, 0.0
      %v309 = vmax.f32 %v277, 0.0
      %v310 = vmax.f32 %v278, 0.0
      %v311 = vmax.f32 %v279, 0.0
      %v312 = vmax.f32 %v280, 0.0
      %v313 = vmax.f32 %v281, 0.0
      %v314 = vmax.f32 %v282, 0.0
      %v315 = vmax.f32 %v283, 0.0
      %v316 = vpack.c.bf16 %v285, %v284
      %v317 = vpack.c.bf16 %v287, %v286
      %v318 = vpack.c.bf16 %v289, %v288
      %v319 = vpack.c.bf16 %v291, %v290
      %v320 = vpack.c.bf16 %v293, %v292
      %v321 = vpack.c.bf16 %v295, %v294
      %v322 = vpack.c.bf16 %v297, %v296
      %v323 = vpack.c.bf16 %v299, %v298
      %v324 = vpack.c.bf16 %v301, %v300
      %v325 = vpack.c.bf16 %v303, %v302
      %v326 = vpack.c.bf16 %v305, %v304
      %v327 = vpack.c.bf16 %v307, %v306
      %v328 = vpack.c.bf16 %v309, %v308
      %v329 = vpack.c.bf16 %v311, %v310
      %v330 = vpack.c.bf16 %v313, %v312
      %v331 = vpack.c.bf16 %v315, %v314
      %v348 = vunpack.c.l.b16 %v316
      %v349 = vunpack.c.h.b16 %v316
      %v350 = vunpack.c.l.b16 %v317
      %v351 = vunpack.c.h.b16 %v317
      %v352 = vunpack.c.l.b16 %v318
      %v353 = vunpack.c.h.b16 %v318
      %v354 = vunpack.c.l.b16 %v319
      %v355 = vunpack.c.h.b16 %v319
      %v356 = vunpack.c.l.b16 %v320
      %v357 = vunpack.c.h.b16 %v320
      %v358 = vunpack.c.l.b16 %v321
      %v359 = vunpack.c.h.b16 %v321
      %v360 = vunpack.c.l.b16 %v322
      %v361 = vunpack.c.h.b16 %v322
      %v362 = vunpack.c.l.b16 %v323
      %v363 = vunpack.c.h.b16 %v323
      %v364 = vunpack.c.l.b16 %v324
      %v365 = vunpack.c.h.b16 %v324
      %v366 = vunpack.c.l.b16 %v325
      %v367 = vunpack.c.h.b16 %v325
      %v368 = vunpack.c.l.b16 %v326
      %v369 = vunpack.c.h.b16 %v326
      %v370 = vunpack.c.l.b16 %v327
      %v371 = vunpack.c.h.b16 %v327
      %v372 = vunpack.c.l.b16 %v328
      %v373 = vunpack.c.h.b16 %v328
      %v374 = vunpack.c.l.b16 %v329
      %v375 = vunpack.c.h.b16 %v329
      %v376 = vunpack.c.l.b16 %v330
      %v377 = vunpack.c.h.b16 %v330
      %v378 = vunpack.c.l.b16 %v331
      %v379 = vunpack.c.h.b16 %v331
      %v380 = vpack.c.b16 %v348, %v348
      %v381 = vpack.c.b16 %v349, %v349
      %v382 = vpack.c.b16 %v350, %v350
      %v383 = vpack.c.b16 %v351, %v351
      %v384 = vpack.c.b16 %v352, %v352
      %v385 = vpack.c.b16 %v353, %v353
      %v386 = vpack.c.b16 %v354, %v354
      %v387 = vpack.c.b16 %v355, %v355
      %v388 = vpack.c.b16 %v356, %v356
      %v389 = vpack.c.b16 %v357, %v357
      %v390 = vpack.c.b16 %v358, %v358
      %v391 = vpack.c.b16 %v359, %v359
      %v392 = vpack.c.b16 %v360, %v360
      %v393 = vpack.c.b16 %v361, %v361
      %v394 = vpack.c.b16 %v362, %v362
      %v395 = vpack.c.b16 %v363, %v363
      %v396 = vpack.c.b16 %v364, %v364
      %v397 = vpack.c.b16 %v365, %v365
      %v398 = vpack.c.b16 %v366, %v366
      %v399 = vpack.c.b16 %v367, %v367
      %v400 = vpack.c.b16 %v368, %v368
      %v401 = vpack.c.b16 %v369, %v369
      %v402 = vpack.c.b16 %v370, %v370
      %v403 = vpack.c.b16 %v371, %v371
      %v404 = vpack.c.b16 %v372, %v372
      %v405 = vpack.c.b16 %v373, %v373
      %v406 = vpack.c.b16 %v374, %v374
      %v407 = vpack.c.b16 %v375, %v375
      %v408 = vpack.c.b16 %v376, %v376
      %v409 = vpack.c.b16 %v377, %v377
      %v410 = vpack.c.b16 %v378, %v378
      %v411 = vpack.c.b16 %v379, %v379
      %444 = vst [vmem:[%s172] sm:$0xf] %v380
      %445 = vst [vmem:[%s172 + $0x4] sm:$0xf] %v381
      %446 = vst [vmem:[%s172 + $0x8] sm:$0xf] %v382
      %447 = vst [vmem:[%s172 + $0xc] sm:$0xf] %v383
      %448 = vst [vmem:[%s172 + $0x10] sm:$0xf] %v384
      %449 = vst [vmem:[%s172 + $0x14] sm:$0xf] %v385
      %450 = vst [vmem:[%s172 + $0x18] sm:$0xf] %v386
      %451 = vst [vmem:[%s172 + $0x1c] sm:$0xf] %v387
      %452 = vst [vmem:[%s172 + $0x20] sm:$0xf] %v388
      %453 = vst [vmem:[%s172 + $0x24] sm:$0xf] %v389
      %454 = vst [vmem:[%s172 + $0x28] sm:$0xf] %v390
      %455 = vst [vmem:[%s172 + $0x2c] sm:$0xf] %v391
      %456 = vst [vmem:[%s172 + $0x30] sm:$0xf] %v392
      %457 = vst [vmem:[%s172 + $0x34] sm:$0xf] %v393
      %458 = vst [vmem:[%s172 + $0x38] sm:$0xf] %v394
      %459 = vst [vmem:[%s172 + $0x3c] sm:$0xf] %v395
      %460 = vst [vmem:[%s172 + $0x40] sm:$0xf] %v396
      %461 = vst [vmem:[%s172 + $0x44] sm:$0xf] %v397
      %462 = vst [vmem:[%s172 + $0x48] sm:$0xf] %v398
      %463 = vst [vmem:[%s172 + $0x4c] sm:$0xf] %v399
      %464 = vst [vmem:[%s172 + $0x50] sm:$0xf] %v400
      %465 = vst [vmem:[%s172 + $0x54] sm:$0xf] %v401
      %466 = vst [vmem:[%s172 + $0x58] sm:$0xf] %v402
      %467 = vst [vmem:[%s172 + $0x5c] sm:$0xf] %v403
      %468 = vst [vmem:[%s172 + $0x60] sm:$0xf] %v404
      %469 = vst [vmem:[%s172 + $0x64] sm:$0xf] %v405
      %470 = vst [vmem:[%s172 + $0x68] sm:$0xf] %v406
      %471 = vst [vmem:[%s172 + $0x6c] sm:$0xf] %v407
      %472 = vst [vmem:[%s172 + $0x70] sm:$0xf] %v408
      %473 = vst [vmem:[%s172 + $0x74] sm:$0xf] %v409
      %474 = vst [vmem:[%s172 + $0x78] sm:$0xf] %v410
      %475 = vst [vmem:[%s172 + $0x7c] sm:$0xf] %v411
      %s476 = smul.u32 32, %s14
      %p477 = scmp.lt.s32.totalorder %s476, 63
      %s478 = scalar_select %p477, %s476, 63
      %s479 = smul.addr %s478, 4
      %s480 = scalar_lea.vmem %s3, %s479
      // Predicated region
      $region33: #{double_conv_forward.5} parent=31 // pred_check
        %p481 = pneg %p100
      $region34: #{double_conv_forward.5} parent=31 // pred_check_branch
        %483 = sbr.rel (%p481) target = $region36
      $region35: #{double_conv_forward.5} parent=31 // pred_region
        %s484 = smul.u32 32, %s14
      $region36: #{double_conv_forward.5} parent=31 // pred_fallthru
        _
    $region32: #{double_conv_forward.5} parent=5 // pred_fallthru
      _
    %p485 = scmp.le.s32.totalorder 2, %s9
    // Predicated region
    $region37: #{double_conv_forward.5} parent=5 // pred_check
      %p486 = pneg %p485
    $region38: #{double_conv_forward.5} parent=5 // pred_check_branch
      %488 = sbr.rel (%p486) target = $region40
    $region39: #{double_conv_forward.5} parent=5 // pred_region
      %s489 = ssub.s32 %s9, 2
      // Predicated region
      $region41: #{double_conv_forward.5} parent=39 // pred_check
        %p490 = pneg %p106
      $region42: #{double_conv_forward.5} parent=39 // pred_check_branch
        %492 = sbr.rel (%p490) target = $region44
      $region43: #{double_conv_forward.5} parent=39 // pred_region
        %s493 = smul.u32 32, %s15
        %p494 = scmp.lt.s32.totalorder %s493, 63
        %s495 = scalar_select %p494, %s493, 63
        %s496 = smul.addr %s495, 4
        %s497 = scalar_lea.vmem %s3, %s496
      $region44: #{double_conv_forward.5} parent=39 // pred_fallthru
        _
    $region40: #{double_conv_forward.5} parent=5 // pred_fallthru
      _
  $region6: #{double_conv_forward.5} parent=0 // loop_footer
    %s13 = sadd.s32 1, %s9
  $region7: #{double_conv_forward.5} parent=0 // loop_footer_branch
    %8 = sbr.rel target = $region3
  $region8: #{double_conv_forward.5} parent=0 // loop_exit
    _

// kernel: double_conv_forward.7
$region0: #{double_conv_forward.7}
  #allocation0 [shape = 'u32[]', space=smem, size = 0x4, offset = 0x4, fixed_abs, tag = 'smem constant byte address 0x4 - core index']
  #allocation1 [shape = 'u32[144,128]{1,0:T(1,128)}', space=vmem, size = 0x12000, scoped, tag = 'internal scratch']
  %s0 = inlined_call_operand.vmem [shape: f32[512,128], index: 0, kind: input, shape index: {}]
  %s1 = inlined_call_operand.vmem [shape: f32[1,128], index: 1, kind: input, shape index: {}]
  %s2 = inlined_call_operand.vmem [shape: f32[1,128], index: 2, kind: input, shape index: {}]
  %s3 = inlined_call_operand.vmem [shape: f32[512,128], index: 3, kind: output, shape index: {}]
  %s4 = sld [smem:[#allocation0]]
  $region45: #{double_conv_forward.7} parent=0
    _
  %s6 = ssub.s32 1, %s4
  %s7 = scalar_select 0, %s6, %s4
  loop: start=0, step=1, limit=4
  $region2: #{double_conv_forward.7} parent=0 // loop_pre_header
    _
  $region3: #{double_conv_forward.7} parent=0 // loop_header
    %s9 = sphi 0, %s13
    %p10 = scmp.ge.s32.totalorder %s9, 4
    %s19 = sphi 0, %s21
    %s22 = sphi 0, %s19
    %s23 = sphi 0, %s22
    %s39 = sphi 0, %s23
    %s43 = sphi 0, %s43
    %s45 = sphi 0, %s43
    %s46 = sphi 0, %s45
    %s60 = sphi 0, %s46
    %s64 = sphi 0, %s64
    %s66 = sphi 0, %s64
    %s67 = sphi 0, %s66
    %s81 = sphi 0, %s67
    %s87 = sphi 0, %s89
    %s90 = sphi 0, %s87
    %s91 = sphi 0, %s90
    %s107 = sphi 0, %s91
  $region4: #{double_conv_forward.7} parent=0 // loop_header_branch
    %12 = sbr.rel (%p10) target = $region8
  $region5: #{double_conv_forward.7} parent=0 // loop_body
    %s14 = ssub.s32 %s9, 1
    %s15 = ssub.s32 %s9, 2
    %s16 = sadd.s32 %s9, 1
    %s17 = ssub.s32 %s9, %s16
    %p18 = scmp.eq.s32.totalorder %s17, 0
    %s20 = sadd.s32 %s19, 1
    %s21 = scalar_select %p18, %s19, %s20
    %p24 = pneg %p18
    %p25 = scmp.eq.s32.totalorder %s9, 1
    %p26 = por %p24, %p25
    %p27 = scmp.ne.s32.totalorder %s19, %s22
    %p28 = scmp.eq.s32.totalorder %s9, 0
    %p29 = por %p27, %p28
    %p30 = scmp.ne.s32.totalorder %s19, %s22
    %p31 = scmp.eq.s32.totalorder %s14, 1
    %p32 = por %p30, %p31
    %p33 = scmp.ne.s32.totalorder %s22, %s23
    %p34 = scmp.eq.s32.totalorder %s14, 0
    %p35 = por %p33, %p34
    %p36 = scmp.ne.s32.totalorder %s22, %s23
    %p37 = scmp.eq.s32.totalorder %s15, 1
    %p38 = por %p36, %p37
    %p40 = scmp.ne.s32.totalorder %s23, %s39
    %p41 = scmp.eq.s32.totalorder %s15, 0
    %p42 = por %p40, %p41
    %s44 = sadd.s32 %s43, 1
    %p47 = scmp.eq.s32.totalorder %s9, 1
    %p48 = scmp.ne.s32.totalorder %s43, %s45
    %p49 = scmp.eq.s32.totalorder %s9, 0
    %p50 = por %p48, %p49
    %p51 = scmp.ne.s32.totalorder %s43, %s45
    %p52 = scmp.eq.s32.totalorder %s14, 1
    %p53 = por %p51, %p52
    %p54 = scmp.ne.s32.totalorder %s45, %s46
    %p55 = scmp.eq.s32.totalorder %s14, 0
    %p56 = por %p54, %p55
    %p57 = scmp.ne.s32.totalorder %s45, %s46
    %p58 = scmp.eq.s32.totalorder %s15, 1
    %p59 = por %p57, %p58
    %p61 = scmp.ne.s32.totalorder %s46, %s60
    %p62 = scmp.eq.s32.totalorder %s15, 0
    %p63 = por %p61, %p62
    %s65 = sadd.s32 %s64, 1
    %p68 = scmp.eq.s32.totalorder %s9, 1
    %p69 = scmp.ne.s32.totalorder %s64, %s66
    %p70 = scmp.eq.s32.totalorder %s9, 0
    %p71 = por %p69, %p70
    %p72 = scmp.ne.s32.totalorder %s64, %s66
    %p73 = scmp.eq.s32.totalorder %s14, 1
    %p74 = por %p72, %p73
    %p75 = scmp.ne.s32.totalorder %s66, %s67
    %p76 = scmp.eq.s32.totalorder %s14, 0
    %p77 = por %p75, %p76
    %p78 = scmp.ne.s32.totalorder %s66, %s67
    %p79 = scmp.eq.s32.totalorder %s15, 1
    %p80 = por %p78, %p79
    %p82 = scmp.ne.s32.totalorder %s67, %s81
    %p83 = scmp.eq.s32.totalorder %s15, 0
    %p84 = por %p82, %p83
    %s85 = ssub.s32 %s9, %s16
    %p86 = scmp.eq.s32.totalorder %s85, 0
    %s88 = sadd.s32 %s87, 1
    %s89 = scalar_select %p86, %s87, %s88
    %p92 = pneg %p86
    %p93 = scmp.eq.s32.totalorder %s9, 1
    %p94 = por %p92, %p93
    %p95 = scmp.ne.s32.totalorder %s87, %s90
    %p96 = scmp.eq.s32.totalorder %s9, 0
    %p97 = por %p95, %p96
    %p98 = scmp.ne.s32.totalorder %s87, %s90
    %p99 = scmp.eq.s32.totalorder %s14, 1
    %p100 = por %p98, %p99
    %p101 = scmp.ne.s32.totalorder %s90, %s91
    %p102 = scmp.eq.s32.totalorder %s14, 0
    %p103 = por %p101, %p102
    %p104 = scmp.ne.s32.totalorder %s90, %s91
    %p105 = scmp.eq.s32.totalorder %s15, 1
    %p106 = por %p104, %p105
    %p108 = scmp.ne.s32.totalorder %s91, %s107
    %p109 = scmp.eq.s32.totalorder %s15, 0
    %p110 = por %p108, %p109
    %p111 = scmp.le.s32.totalorder 1, %s9
    %p112 = scmp.lt.s32.totalorder %s9, 3
    %p113 = pnand %p111, %p112
    %p114 = pneg %p113
    // Predicated region
    $region9: #{double_conv_forward.7} parent=5 // pred_check
      _
    $region10: #{double_conv_forward.7} parent=5 // pred_check_branch
      %116 = sbr.rel (%p113) target = $region12
    $region11: #{double_conv_forward.7} parent=5 // pred_region
      %s117 = ssub.s32 %s9, 1
      // Predicated region
      $region13: #{double_conv_forward.7} parent=11 // pred_check
        %p118 = pneg %p56
      $region14: #{double_conv_forward.7} parent=11 // pred_check_branch
        %120 = sbr.rel (%p118) target = $region16
      $region15: #{double_conv_forward.7} parent=11 // pred_region
        _
      $region16: #{double_conv_forward.7} parent=11 // pred_fallthru
        _
      // Predicated region
      $region17: #{double_conv_forward.7} parent=11 // pred_check
        %p121 = pneg %p77
      $region18: #{double_conv_forward.7} parent=11 // pred_check_branch
        %123 = sbr.rel (%p121) target = $region20
      $region19: #{double_conv_forward.7} parent=11 // pred_region
        _
      $region20: #{double_conv_forward.7} parent=11 // pred_fallthru
        _
    $region12: #{double_conv_forward.7} parent=5 // pred_fallthru
      _
    %p124 = scmp.lt.s32.totalorder %s9, 2
    // Predicated region
    $region21: #{double_conv_forward.7} parent=5 // pred_check
      %p125 = pneg %p124
    $region22: #{double_conv_forward.7} parent=5 // pred_check_branch
      %127 = sbr.rel (%p125) target = $region24
    $region23: #{double_conv_forward.7} parent=5 // pred_region
      // Predicated region
      $region25: #{double_conv_forward.7} parent=23 // pred_check
        %p128 = pneg %p29
      $region26: #{double_conv_forward.7} parent=23 // pred_check_branch
        %130 = sbr.rel (%p128) target = $region28
      $region27: #{double_conv_forward.7} parent=23 // pred_region
        %s131 = smul.u32 32, %s9
        %p132 = scmp.lt.s32.totalorder %s131, 63
        %s133 = scalar_select %p132, %s131, 63
        %s134 = smul.addr %s133, 8
        %s135 = scalar_lea.vmem %s0, %s134
        %s136 = smul.u32 32, %s9
      $region28: #{double_conv_forward.7} parent=23 // pred_fallthru
        _
    $region24: #{double_conv_forward.7} parent=5 // pred_fallthru
      _
    %p137 = scmp.le.s32.totalorder 1, %s9
    %p138 = scmp.lt.s32.totalorder %s9, 3
    %p139 = pnand %p137, %p138
    %p140 = pneg %p139
    // Predicated region
    $region29: #{double_conv_forward.7} parent=5 // pred_check
      _
    $region30: #{double_conv_forward.7} parent=5 // pred_check_branch
      %142 = sbr.rel (%p139) target = $region32
    $region31: #{double_conv_forward.7} parent=5 // pred_region
      %s143 = ssub.s32 %s9, 1
      %s144 = smul.u32 32, %s14
      %p145 = scmp.lt.s32.totalorder %s144, 63
      %s146 = scalar_select %p145, %s144, 63
      %s147 = smul.addr %s146, 8
      %s148 = scalar_lea.vmem %s0, %s147
      %p149 = pneg %p35
      %p150 = pneg %p32
      %p151 = pneg %p56
      %p152 = pneg %p53
      %p153 = pneg %p77
      %p154 = pneg %p74
      %p155 = pneg %p103
      %p156 = pneg %p100
      %s157 = smul.u32 32, %s14
      %p158 = scmp.lt.s32.totalorder %s157, 63
      %s159 = scalar_select %p158, %s157, 63
      %s160 = smul.addr %s159, 8
      %s161 = scalar_lea.vmem %s3, %s160
      %s162 = smul.u32 32, %s14
      %p163 = scmp.lt.s32.totalorder %s162, 63
      %s164 = scalar_select %p163, %s162, 63
      %s165 = smul.addr %s164, 8
      %s166 = scalar_lea.vmem %s0, %s165
      %s167 = smul.u32 32, %s14
      %s168 = smul.u32 32, %s14
      %p169 = scmp.lt.s32.totalorder %s168, 63
      %s170 = scalar_select %p169, %s168, 63
      %s171 = smul.addr %s170, 8
      %s172 = scalar_lea.vmem %s3, %s171
      %s173 = smul.u32 32, %s14
      %v174 = vld [vmem:[%s166] sm:$0xff]
      %v175 = vld [vmem:[%s166 + $0x8] sm:$0xff]
      %v176 = vld [vmem:[%s166 + $0x10] sm:$0xff]
      %v177 = vld [vmem:[%s166 + $0x18] sm:$0xff]
      %v178 = vld [vmem:[%s166 + $0x20] sm:$0xff]
      %v179 = vld [vmem:[%s166 + $0x28] sm:$0xff]
      %v180 = vld [vmem:[%s166 + $0x30] sm:$0xff]
      %v181 = vld [vmem:[%s166 + $0x38] sm:$0xff]
      %v182 = vld [vmem:[%s166 + $0x40] sm:$0xff]
      %v183 = vld [vmem:[%s166 + $0x48] sm:$0xff]
      %v184 = vld [vmem:[%s166 + $0x50] sm:$0xff]
      %v185 = vld [vmem:[%s166 + $0x58] sm:$0xff]
      %v186 = vld [vmem:[%s166 + $0x60] sm:$0xff]
      %v187 = vld [vmem:[%s166 + $0x68] sm:$0xff]
      %v188 = vld [vmem:[%s166 + $0x70] sm:$0xff]
      %v189 = vld [vmem:[%s166 + $0x78] sm:$0xff]
      %v190 = vld [vmem:[%s166 + $0x80] sm:$0xff]
      %v191 = vld [vmem:[%s166 + $0x88] sm:$0xff]
      %v192 = vld [vmem:[%s166 + $0x90] sm:$0xff]
      %v193 = vld [vmem:[%s166 + $0x98] sm:$0xff]
      %v194 = vld [vmem:[%s166 + $0xa0] sm:$0xff]
      %v195 = vld [vmem:[%s166 + $0xa8] sm:$0xff]
      %v196 = vld [vmem:[%s166 + $0xb0] sm:$0xff]
      %v197 = vld [vmem:[%s166 + $0xb8] sm:$0xff]
      %v198 = vld [vmem:[%s166 + $0xc0] sm:$0xff]
      %v199 = vld [vmem:[%s166 + $0xc8] sm:$0xff]
      %v200 = vld [vmem:[%s166 + $0xd0] sm:$0xff]
      %v201 = vld [vmem:[%s166 + $0xd8] sm:$0xff]
      %v202 = vld [vmem:[%s166 + $0xe0] sm:$0xff]
      %v203 = vld [vmem:[%s166 + $0xe8] sm:$0xff]
      %v204 = vld [vmem:[%s166 + $0xf0] sm:$0xff]
      %v205 = vld [vmem:[%s166 + $0xf8] sm:$0xff]
      %v206 = vld [vmem:[%s1] sm:$0x1]
      %v208 = vlaneseq
      %v209 = vshrl.u32 %v208, 7
      %v210 = vsub.s32 0, %v209
      %v211 = vrot.slane %v206, %v210
      %v213 = vmul.f32 %v174, %v211
      %v214 = vmul.f32 %v175, %v211
      %v215 = vmul.f32 %v176, %v211
      %v216 = vmul.f32 %v177, %v211
      %v217 = vmul.f32 %v178, %v211
      %v218 = vmul.f32 %v179, %v211
      %v219 = vmul.f32 %v180, %v211
      %v220 = vmul.f32 %v181, %v211
      %v221 = vmul.f32 %v182, %v211
      %v222 = vmul.f32 %v183, %v211
      %v223 = vmul.f32 %v184, %v211
      %v224 = vmul.f32 %v185, %v211
      %v225 = vmul.f32 %v186, %v211
      %v226 = vmul.f32 %v187, %v211
      %v227 = vmul.f32 %v188, %v211
      %v228 = vmul.f32 %v189, %v211
      %v229 = vmul.f32 %v190, %v211
      %v230 = vmul.f32 %v191, %v211
      %v231 = vmul.f32 %v192, %v211
      %v232 = vmul.f32 %v193, %v211
      %v233 = vmul.f32 %v194, %v211
      %v234 = vmul.f32 %v195, %v211
      %v235 = vmul.f32 %v196, %v211
      %v236 = vmul.f32 %v197, %v211
      %v237 = vmul.f32 %v198, %v211
      %v238 = vmul.f32 %v199, %v211
      %v239 = vmul.f32 %v200, %v211
      %v240 = vmul.f32 %v201, %v211
      %v241 = vmul.f32 %v202, %v211
      %v242 = vmul.f32 %v203, %v211
      %v243 = vmul.f32 %v204, %v211
      %v244 = vmul.f32 %v205, %v211
      %v245 = vld [vmem:[%s2] sm:$0x1]
      %v247 = vlaneseq
      %v248 = vshrl.u32 %v247, 7
      %v249 = vsub.s32 0, %v248
      %v250 = vrot.slane %v245, %v249
      %v252 = vadd.f32 %v213, %v250
      %v253 = vadd.f32 %v214, %v250
      %v254 = vadd.f32 %v215, %v250
      %v255 = vadd.f32 %v216, %v250
      %v256 = vadd.f32 %v217, %v250
      %v257 = vadd.f32 %v218, %v250
      %v258 = vadd.f32 %v219, %v250
      %v259 = vadd.f32 %v220, %v250
      %v260 = vadd.f32 %v221, %v250
      %v261 = vadd.f32 %v222, %v250
      %v262 = vadd.f32 %v223, %v250
      %v263 = vadd.f32 %v224, %v250
      %v264 = vadd.f32 %v225, %v250
      %v265 = vadd.f32 %v226, %v250
      %v266 = vadd.f32 %v227, %v250
      %v267 = vadd.f32 %v228, %v250
      %v268 = vadd.f32 %v229, %v250
      %v269 = vadd.f32 %v230, %v250
      %v270 = vadd.f32 %v231, %v250
      %v271 = vadd.f32 %v232, %v250
      %v272 = vadd.f32 %v233, %v250
      %v273 = vadd.f32 %v234, %v250
      %v274 = vadd.f32 %v235, %v250
      %v275 = vadd.f32 %v236, %v250
      %v276 = vadd.f32 %v237, %v250
      %v277 = vadd.f32 %v238, %v250
      %v278 = vadd.f32 %v239, %v250
      %v279 = vadd.f32 %v240, %v250
      %v280 = vadd.f32 %v241, %v250
      %v281 = vadd.f32 %v242, %v250
      %v282 = vadd.f32 %v243, %v250
      %v283 = vadd.f32 %v244, %v250
      %v284 = vmax.f32 %v252, 0.0
      %v285 = vmax.f32 %v253, 0.0
      %v286 = vmax.f32 %v254, 0.0
      %v287 = vmax.f32 %v255, 0.0
      %v288 = vmax.f32 %v256, 0.0
      %v289 = vmax.f32 %v257, 0.0
      %v290 = vmax.f32 %v258, 0.0
      %v291 = vmax.f32 %v259, 0.0
      %v292 = vmax.f32 %v260, 0.0
      %v293 = vmax.f32 %v261, 0.0
      %v294 = vmax.f32 %v262, 0.0
      %v295 = vmax.f32 %v263, 0.0
      %v296 = vmax.f32 %v264, 0.0
      %v297 = vmax.f32 %v265, 0.0
      %v298 = vmax.f32 %v266, 0.0
      %v299 = vmax.f32 %v267, 0.0
      %v300 = vmax.f32 %v268, 0.0
      %v301 = vmax.f32 %v269, 0.0
      %v302 = vmax.f32 %v270, 0.0
      %v303 = vmax.f32 %v271, 0.0
      %v304 = vmax.f32 %v272, 0.0
      %v305 = vmax.f32 %v273, 0.0
      %v306 = vmax.f32 %v274, 0.0
      %v307 = vmax.f32 %v275, 0.0
      %v308 = vmax.f32 %v276, 0.0
      %v309 = vmax.f32 %v277, 0.0
      %v310 = vmax.f32 %v278, 0.0
      %v311 = vmax.f32 %v279, 0.0
      %v312 = vmax.f32 %v280, 0.0
      %v313 = vmax.f32 %v281, 0.0
      %v314 = vmax.f32 %v282, 0.0
      %v315 = vmax.f32 %v283, 0.0
      %316 = vst [vmem:[%s172] sm:$0xff] %v284
      %317 = vst [vmem:[%s172 + $0x8] sm:$0xff] %v285
      %318 = vst [vmem:[%s172 + $0x10] sm:$0xff] %v286
      %319 = vst [vmem:[%s172 + $0x18] sm:$0xff] %v287
      %320 = vst [vmem:[%s172 + $0x20] sm:$0xff] %v288
      %321 = vst [vmem:[%s172 + $0x28] sm:$0xff] %v289
      %322 = vst [vmem:[%s172 + $0x30] sm:$0xff] %v290
      %323 = vst [vmem:[%s172 + $0x38] sm:$0xff] %v291
      %324 = vst [vmem:[%s172 + $0x40] sm:$0xff] %v292
      %325 = vst [vmem:[%s172 + $0x48] sm:$0xff] %v293
      %326 = vst [vmem:[%s172 + $0x50] sm:$0xff] %v294
      %327 = vst [vmem:[%s172 + $0x58] sm:$0xff] %v295
      %328 = vst [vmem:[%s172 + $0x60] sm:$0xff] %v296
      %329 = vst [vmem:[%s172 + $0x68] sm:$0xff] %v297
      %330 = vst [vmem:[%s172 + $0x70] sm:$0xff] %v298
      %331 = vst [vmem:[%s172 + $0x78] sm:$0xff] %v299
      %332 = vst [vmem:[%s172 + $0x80] sm:$0xff] %v300
      %333 = vst [vmem:[%s172 + $0x88] sm:$0xff] %v301
      %334 = vst [vmem:[%s172 + $0x90] sm:$0xff] %v302
      %335 = vst [vmem:[%s172 + $0x98] sm:$0xff] %v303
      %336 = vst [vmem:[%s172 + $0xa0] sm:$0xff] %v304
      %337 = vst [vmem:[%s172 + $0xa8] sm:$0xff] %v305
      %338 = vst [vmem:[%s172 + $0xb0] sm:$0xff] %v306
      %339 = vst [vmem:[%s172 + $0xb8] sm:$0xff] %v307
      %340 = vst [vmem:[%s172 + $0xc0] sm:$0xff] %v308
      %341 = vst [vmem:[%s172 + $0xc8] sm:$0xff] %v309
      %342 = vst [vmem:[%s172 + $0xd0] sm:$0xff] %v310
      %343 = vst [vmem:[%s172 + $0xd8] sm:$0xff] %v311
      %344 = vst [vmem:[%s172 + $0xe0] sm:$0xff] %v312
      %345 = vst [vmem:[%s172 + $0xe8] sm:$0xff] %v313
      %346 = vst [vmem:[%s172 + $0xf0] sm:$0xff] %v314
      %347 = vst [vmem:[%s172 + $0xf8] sm:$0xff] %v315
      %s348 = smul.u32 32, %s14
      %p349 = scmp.lt.s32.totalorder %s348, 63
      %s350 = scalar_select %p349, %s348, 63
      %s351 = smul.addr %s350, 8
      %s352 = scalar_lea.vmem %s3, %s351
      // Predicated region
      $region33: #{double_conv_forward.7} parent=31 // pred_check
        %p353 = pneg %p100
      $region34: #{double_conv_forward.7} parent=31 // pred_check_branch
        %355 = sbr.rel (%p353) target = $region36
      $region35: #{double_conv_forward.7} parent=31 // pred_region
        %s356 = smul.u32 32, %s14
      $region36: #{double_conv_forward.7} parent=31 // pred_fallthru
        _
    $region32: #{double_conv_forward.7} parent=5 // pred_fallthru
      _
    %p357 = scmp.le.s32.totalorder 2, %s9
    // Predicated region
    $region37: #{double_conv_forward.7} parent=5 // pred_check
      %p358 = pneg %p357
    $region38: #{double_conv_forward.7} parent=5 // pred_check_branch
      %360 = sbr.rel (%p358) target = $region40
    $region39: #{double_conv_forward.7} parent=5 // pred_region
      %s361 = ssub.s32 %s9, 2
      // Predicated region
      $region41: #{double_conv_forward.7} parent=39 // pred_check
        %p362 = pneg %p106
      $region42: #{double_conv_forward.7} parent=39 // pred_check_branch
        %364 = sbr.rel (%p362) target = $region44
      $region43: #{double_conv_forward.7} parent=39 // pred_region
        %s365 = smul.u32 32, %s15
        %p366 = scmp.lt.s32.totalorder %s365, 63
        %s367 = scalar_select %p366, %s365, 63
        %s368 = smul.addr %s367, 8
        %s369 = scalar_lea.vmem %s3, %s368
      $region44: #{double_conv_forward.7} parent=39 // pred_fallthru
        _
    $region40: #{double_conv_forward.7} parent=5 // pred_fallthru
      _
  $region6: #{double_conv_forward.7} parent=0 // loop_footer
    %s13 = sadd.s32 1, %s9
  $region7: #{double_conv_forward.7} parent=0 // loop_footer_branch
    %8 = sbr.rel target = $region3
  $region8: #{double_conv_forward.7} parent=0 // loop_exit
    _

// kernel: double_conv_forward.4
$region0: #{double_conv_forward.4}
  #allocation0 [shape = 'u32[]', space=smem, size = 0x4, offset = 0x4, fixed_abs, tag = 'smem constant byte address 0x4 - core index']
  #allocation1 [shape = 'u32[144,128]{1,0:T(1,128)}', space=vmem, size = 0x12000, scoped, tag = 'internal scratch']
  %s0 = inlined_call_operand.vmem [shape: bf16[2,18,16,384], index: 0, kind: input, shape index: {}]
  %s1 = inlined_call_operand.vmem [shape: bf16[3,384,128], index: 1, kind: input, shape index: {}]
  %s2 = inlined_call_operand.vmem [shape: f32[1,128], index: 2, kind: input, shape index: {}]
  %s3 = inlined_call_operand.vmem [shape: f32[2,256,128], index: 3, kind: output, shape index: {0}]
  %s4 = inlined_call_operand.vmem [shape: f32[2,2,128], index: 4, kind: output, shape index: {1}]
  %5 = xla_tuple %s3, %s4
  %s6 = sld [smem:[#allocation0]]
  $region53: #{double_conv_forward.4} parent=0
    _
  %s8 = ssub.s32 1, %s6
  %s9 = scalar_select 0, %s8, %s6
  loop: start=0, step=1, limit=4
  $region2: #{double_conv_forward.4} parent=0 // loop_pre_header
    _
  $region3: #{double_conv_forward.4} parent=0 // loop_header
    %s11 = sphi 0, %s15
    %p12 = scmp.ge.s32.totalorder %s11, 4
    %s21 = sphi 0, %s23
    %s24 = sphi 0, %s21
    %s25 = sphi 0, %s24
    %s41 = sphi 0, %s25
    %s45 = sphi 0, %s45
    %s47 = sphi 0, %s45
    %s48 = sphi 0, %s47
    %s62 = sphi 0, %s48
    %s66 = sphi 0, %s66
    %s68 = sphi 0, %s66
    %s69 = sphi 0, %s68
    %s83 = sphi 0, %s69
    %s89 = sphi 0, %s91
    %s92 = sphi 0, %s89
    %s93 = sphi 0, %s92
    %s109 = sphi 0, %s93
    %s115 = sphi 0, %s117
    %s118 = sphi 0, %s115
    %s119 = sphi 0, %s118
    %s135 = sphi 0, %s119
  $region4: #{double_conv_forward.4} parent=0 // loop_header_branch
    %14 = sbr.rel (%p12) target = $region8
  $region5: #{double_conv_forward.4} parent=0 // loop_body
    %s16 = ssub.s32 %s11, 1
    %s17 = ssub.s32 %s11, 2
    %s18 = sadd.s32 %s11, 1
    %s19 = ssub.s32 %s11, %s18
    %p20 = scmp.eq.s32.totalorder %s19, 0
    %s22 = sadd.s32 %s21, 1
    %s23 = scalar_select %p20, %s21, %s22
    %p26 = pneg %p20
    %p27 = scmp.eq.s32.totalorder %s11, 1
    %p28 = por %p26, %p27
    %p29 = scmp.ne.s32.totalorder %s21, %s24
    %p30 = scmp.eq.s32.totalorder %s11, 0
    %p31 = por %p29, %p30
    %p32 = scmp.ne.s32.totalorder %s21, %s24
    %p33 = scmp.eq.s32.totalorder %s16, 1
    %p34 = por %p32, %p33
    %p35 = scmp.ne.s32.totalorder %s24, %s25
    %p36 = scmp.eq.s32.totalorder %s16, 0
    %p37 = por %p35, %p36
    %p38 = scmp.ne.s32.totalorder %s24, %s25
    %p39 = scmp.eq.s32.totalorder %s17, 1
    %p40 = por %p38, %p39
    %p42 = scmp.ne.s32.totalorder %s25, %s41
    %p43 = scmp.eq.s32.totalorder %s17, 0
    %p44 = por %p42, %p43
    %s46 = sadd.s32 %s45, 1
    %p49 = scmp.eq.s32.totalorder %s11, 1
    %p50 = scmp.ne.s32.totalorder %s45, %s47
    %p51 = scmp.eq.s32.totalorder %s11, 0
    %p52 = por %p50, %p51
    %p53 = scmp.ne.s32.totalorder %s45, %s47
    %p54 = scmp.eq.s32.totalorder %s16, 1
    %p55 = por %p53, %p54
    %p56 = scmp.ne.s32.totalorder %s47, %s48
    %p57 = scmp.eq.s32.totalorder %s16, 0
    %p58 = por %p56, %p57
    %p59 = scmp.ne.s32.totalorder %s47, %s48
    %p60 = scmp.eq.s32.totalorder %s17, 1
    %p61 = por %p59, %p60
    %p63 = scmp.ne.s32.totalorder %s48, %s62
    %p64 = scmp.eq.s32.totalorder %s17, 0
    %p65 = por %p63, %p64
    %s67 = sadd.s32 %s66, 1
    %p70 = scmp.eq.s32.totalorder %s11, 1
    %p71 = scmp.ne.s32.totalorder %s66, %s68
    %p72 = scmp.eq.s32.totalorder %s11, 0
    %p73 = por %p71, %p72
    %p74 = scmp.ne.s32.totalorder %s66, %s68
    %p75 = scmp.eq.s32.totalorder %s16, 1
    %p76 = por %p74, %p75
    %p77 = scmp.ne.s32.totalorder %s68, %s69
    %p78 = scmp.eq.s32.totalorder %s16, 0
    %p79 = por %p77, %p78
    %p80 = scmp.ne.s32.totalorder %s68, %s69
    %p81 = scmp.eq.s32.totalorder %s17, 1
    %p82 = por %p80, %p81
    %p84 = scmp.ne.s32.totalorder %s69, %s83
    %p85 = scmp.eq.s32.totalorder %s17, 0
    %p86 = por %p84, %p85
    %s87 = ssub.s32 %s11, %s18
    %p88 = scmp.eq.s32.totalorder %s87, 0
    %s90 = sadd.s32 %s89, 1
    %s91 = scalar_select %p88, %s89, %s90
    %p94 = pneg %p88
    %p95 = scmp.eq.s32.totalorder %s11, 1
    %p96 = por %p94, %p95
    %p97 = scmp.ne.s32.totalorder %s89, %s92
    %p98 = scmp.eq.s32.totalorder %s11, 0
    %p99 = por %p97, %p98
    %p100 = scmp.ne.s32.totalorder %s89, %s92
    %p101 = scmp.eq.s32.totalorder %s16, 1
    %p102 = por %p100, %p101
    %p103 = scmp.ne.s32.totalorder %s92, %s93
    %p104 = scmp.eq.s32.totalorder %s16, 0
    %p105 = por %p103, %p104
    %p106 = scmp.ne.s32.totalorder %s92, %s93
    %p107 = scmp.eq.s32.totalorder %s17, 1
    %p108 = por %p106, %p107
    %p110 = scmp.ne.s32.totalorder %s93, %s109
    %p111 = scmp.eq.s32.totalorder %s17, 0
    %p112 = por %p110, %p111
    %s113 = ssub.s32 %s11, %s18
    %p114 = scmp.eq.s32.totalorder %s113, 0
    %s116 = sadd.s32 %s115, 1
    %s117 = scalar_select %p114, %s115, %s116
    %p120 = pneg %p114
    %p121 = scmp.eq.s32.totalorder %s11, 1
    %p122 = por %p120, %p121
    %p123 = scmp.ne.s32.totalorder %s115, %s118
    %p124 = scmp.eq.s32.totalorder %s11, 0
    %p125 = por %p123, %p124
    %p126 = scmp.ne.s32.totalorder %s115, %s118
    %p127 = scmp.eq.s32.totalorder %s16, 1
    %p128 = por %p126, %p127
    %p129 = scmp.ne.s32.totalorder %s118, %s119
    %p130 = scmp.eq.s32.totalorder %s16, 0
    %p131 = por %p129, %p130
    %p132 = scmp.ne.s32.totalorder %s118, %s119
    %p133 = scmp.eq.s32.totalorder %s17, 1
    %p134 = por %p132, %p133
    %p136 = scmp.ne.s32.totalorder %s119, %s135
    %p137 = scmp.eq.s32.totalorder %s17, 0
    %p138 = por %p136, %p137
    %p139 = scmp.le.s32.totalorder 1, %s11
    %p140 = scmp.lt.s32.totalorder %s11, 3
    %p141 = pnand %p139, %p140
    %p142 = pneg %p141
    // Predicated region
    $region9: #{double_conv_forward.4} parent=5 // pred_check
      _
    $region10: #{double_conv_forward.4} parent=5 // pred_check_branch
      %144 = sbr.rel (%p141) target = $region12
    $region11: #{double_conv_forward.4} parent=5 // pred_region
      %s145 = ssub.s32 %s11, 1
      // Predicated region
      $region13: #{double_conv_forward.4} parent=11 // pred_check
        %p146 = pneg %p58
      $region14: #{double_conv_forward.4} parent=11 // pred_check_branch
        %148 = sbr.rel (%p146) target = $region16
      $region15: #{double_conv_forward.4} parent=11 // pred_region
        _
      $region16: #{double_conv_forward.4} parent=11 // pred_fallthru
        _
      // Predicated region
      $region17: #{double_conv_forward.4} parent=11 // pred_check
        %p149 = pneg %p79
      $region18: #{double_conv_forward.4} parent=11 // pred_check_branch
        %151 = sbr.rel (%p149) target = $region20
      $region19: #{double_conv_forward.4} parent=11 // pred_region
        _
      $region20: #{double_conv_forward.4} parent=11 // pred_fallthru
        _
    $region12: #{double_conv_forward.4} parent=5 // pred_fallthru
      _
    %p152 = scmp.lt.s32.totalorder %s11, 2
    // Predicated region
    $region21: #{double_conv_forward.4} parent=5 // pred_check
      %p153 = pneg %p152
    $region22: #{double_conv_forward.4} parent=5 // pred_check_branch
      %155 = sbr.rel (%p153) target = $region24
    $region23: #{double_conv_forward.4} parent=5 // pred_region
      // Predicated region
      $region25: #{double_conv_forward.4} parent=23 // pred_check
        %p156 = pneg %p31
      $region26: #{double_conv_forward.4} parent=23 // pred_check_branch
        %158 = sbr.rel (%p156) target = $region28
      $region27: #{double_conv_forward.4} parent=23 // pred_region
        %p159 = scmp.lt.s32.totalorder %s11, 1
        %s160 = scalar_select %p159, %s11, 1
        %s161 = smul.addr %s160, 108
        %s162 = smul.addr %s161, 4
        %s163 = scalar_lea.vmem %s0, %s162
      $region28: #{double_conv_forward.4} parent=23 // pred_fallthru
        _
    $region24: #{double_conv_forward.4} parent=5 // pred_fallthru
      _
    %p164 = scmp.le.s32.totalorder 1, %s11
    %p165 = scmp.lt.s32.totalorder %s11, 3
    %p166 = pnand %p164, %p165
    %p167 = pneg %p166
    // Predicated region
    $region29: #{double_conv_forward.4} parent=5 // pred_check
      _
    $region30: #{double_conv_forward.4} parent=5 // pred_check_branch
      %169 = sbr.rel (%p166) target = $region32
    $region31: #{double_conv_forward.4} parent=5 // pred_region
      %s170 = ssub.s32 %s11, 1
      %p171 = scmp.lt.s32.totalorder %s16, 1
      %s172 = scalar_select %p171, %s16, 1
      %s173 = smul.addr %s172, 108
      %s174 = smul.addr %s173, 4
      %s175 = scalar_lea.vmem %s0, %s174
      %p176 = pneg %p37
      %p177 = pneg %p34
      %p178 = pneg %p58
      %p179 = pneg %p55
      %p180 = pneg %p79
      %p181 = pneg %p76
      %p182 = pneg %p105
      %p183 = pneg %p102
      %p184 = scmp.lt.s32.totalorder %s16, 1
      %s185 = scalar_select %p184, %s16, 1
      %s186 = smul.addr %s185, 32
      %s187 = smul.addr %s186, 8
      %s188 = scalar_lea.vmem %s3, %s187
      %p189 = pneg %p131
      %p190 = pneg %p128
      %p191 = scmp.lt.s32.totalorder %s16, 1
      %s192 = scalar_select %p191, %s16, 1
      %s193 = smul.addr %s192, 2
      %s194 = scalar_lea.vmem %s4, %s193
      %p195 = scmp.lt.s32.totalorder %s16, 1
      %s196 = scalar_select %p195, %s16, 1
      %s197 = smul.addr %s196, 108
      %s198 = smul.addr %s197, 4
      %s199 = scalar_lea.vmem %s0, %s198
      %p200 = scmp.lt.s32.totalorder %s16, 1
      %s201 = scalar_select %p200, %s16, 1
      %s202 = smul.addr %s201, 32
      %s203 = smul.addr %s202, 8
      %s204 = scalar_lea.vmem %s3, %s203
      %p205 = scmp.lt.s32.totalorder %s16, 1
      %s206 = scalar_select %p205, %s16, 1
      %s207 = smul.addr %s206, 2
      %s208 = scalar_lea.vmem %s4, %s207
      %v210 = vld [vmem:[%s199] sm:$0xff]
      %v211 = vld [vmem:[%s199 + $0x8] sm:$0xf]
      %v212 = vld [vmem:[%s199 + $0xc] sm:$0xff]
      %v213 = vld [vmem:[%s199 + $0x14] sm:$0xf]
      %v214 = vld [vmem:[%s199 + $0x18] sm:$0xff]
      %v215 = vld [vmem:[%s199 + $0x20] sm:$0xf]
      %v216 = vld [vmem:[%s199 + $0x24] sm:$0xff]
      %v217 = vld [vmem:[%s199 + $0x2c] sm:$0xf]
      %v218 = vld [vmem:[%s199 + $0x30] sm:$0xff]
      %v219 = vld [vmem:[%s199 + $0x38] sm:$0xf]
      %v220 = vld [vmem:[%s199 + $0x3c] sm:$0xff]
      %v221 = vld [vmem:[%s199 + $0x44] sm:$0xf]
      %v222 = vld [vmem:[%s199 + $0x48] sm:$0xff]
      %v223 = vld [vmem:[%s199 + $0x50] sm:$0xf]
      %v224 = vld [vmem:[%s199 + $0x54] sm:$0xff]
      %v225 = vld [vmem:[%s199 + $0x5c] sm:$0xf]
      %v226 = vld [vmem:[%s199 + $0x60] sm:$0xff]
      %v227 = vld [vmem:[%s199 + $0x68] sm:$0xf]
      %v228 = vld [vmem:[%s199 + $0x6c] sm:$0xff]
      %v229 = vld [vmem:[%s199 + $0x74] sm:$0xf]
      %v230 = vld [vmem:[%s199 + $0x78] sm:$0xff]
      %v231 = vld [vmem:[%s199 + $0x80] sm:$0xf]
      %v232 = vld [vmem:[%s199 + $0x84] sm:$0xff]
      %v233 = vld [vmem:[%s199 + $0x8c] sm:$0xf]
      %v234 = vld [vmem:[%s199 + $0x90] sm:$0xff]
      %v235 = vld [vmem:[%s199 + $0x98] sm:$0xf]
      %v236 = vld [vmem:[%s199 + $0x9c] sm:$0xff]
      %v237 = vld [vmem:[%s199 + $0xa4] sm:$0xf]
      %v238 = vld [vmem:[%s199 + $0xa8] sm:$0xff]
      %v239 = vld [vmem:[%s199 + $0xb0] sm:$0xf]
      %v240 = vld [vmem:[%s199 + $0xb4] sm:$0xff]
      %v241 = vld [vmem:[%s199 + $0xbc] sm:$0xf]
      %v242 = vld [vmem:[%s199 + $0xc0] sm:$0xff]
      %v243 = vld [vmem:[%s199 + $0xc8] sm:$0xf]
      %v244 = vld [vmem:[%s199 + $0xcc] sm:$0xff]
      %v245 = vld [vmem:[%s199 + $0xd4] sm:$0xf]
      %v246 = vld [vmem:[%s199 + $0xd8] sm:$0xff]
      %v247 = vld [vmem:[%s199 + $0xe0] sm:$0xf]
      %v248 = vld [vmem:[%s199 + $0xe4] sm:$0xff]
      %v249 = vld [vmem:[%s199 + $0xec] sm:$0xf]
      %v250 = vld [vmem:[%s199 + $0xf0] sm:$0xff]
      %v251 = vld [vmem:[%s199 + $0xf8] sm:$0xf]
      %v252 = vld [vmem:[%s199 + $0xfc] sm:$0xff]
      %v253 = vld [vmem:[%s199 + $0x104] sm:$0xf]
      %v254 = vld [vmem:[%s199 + $0x108] sm:$0xff]
      %v255 = vld [vmem:[%s199 + $0x110] sm:$0xf]
      %v256 = vld [vmem:[%s199 + $0x114] sm:$0xff]
      %v257 = vld [vmem:[%s199 + $0x11c] sm:$0xf]
      %v258 = vld [vmem:[%s199 + $0x120] sm:$0xff]
      %v259 = vld [vmem:[%s199 + $0x128] sm:$0xf]
      %v260 = vld [vmem:[%s199 + $0x12c] sm:$0xff]
      %v261 = vld [vmem:[%s199 + $0x134] sm:$0xf]
      %v262 = vld [vmem:[%s199 + $0x138] sm:$0xff]
      %v263 = vld [vmem:[%s199 + $0x140] sm:$0xf]
      %v264 = vld [vmem:[%s199 + $0x144] sm:$0xff]
      %v265 = vld [vmem:[%s199 + $0x14c] sm:$0xf]
      %v266 = vld [vmem:[%s199 + $0x150] sm:$0xff]
      %v267 = vld [vmem:[%s199 + $0x158] sm:$0xf]
      %v268 = vld [vmem:[%s199 + $0x15c] sm:$0xff]
      %v269 = vld [vmem:[%s199 + $0x164] sm:$0xf]
      %v270 = vld [vmem:[%s199 + $0x168] sm:$0xff]
      %v271 = vld [vmem:[%s199 + $0x170] sm:$0xf]
      %v272 = vld [vmem:[%s199 + $0x174] sm:$0xff]
      %v273 = vld [vmem:[%s199 + $0x17c] sm:$0xf]
      %v274 = vld [vmem:[%s1] sm:$0xf]
      %v275 = vld [vmem:[%s1 + $0x4] sm:$0xf]
      %v276 = vld [vmem:[%s1 + $0x8] sm:$0xf]
      %v277 = vld [vmem:[%s1 + $0xc] sm:$0xf]
      %v278 = vld [vmem:[%s1 + $0x10] sm:$0xf]
      %v279 = vld [vmem:[%s1 + $0x14] sm:$0xf]
      %v280 = vld [vmem:[%s1 + $0x18] sm:$0xf]
      %v281 = vld [vmem:[%s1 + $0x1c] sm:$0xf]
      %v282 = vld [vmem:[%s1 + $0x20] sm:$0xf]
      %v283 = vld [vmem:[%s1 + $0x24] sm:$0xf]
      %v284 = vld [vmem:[%s1 + $0x28] sm:$0xf]
      %v285 = vld [vmem:[%s1 + $0x2c] sm:$0xf]
      %v286 = vld [vmem:[%s1 + $0x30] sm:$0xf]
      %v287 = vld [vmem:[%s1 + $0x34] sm:$0xf]
      %v288 = vld [vmem:[%s1 + $0x38] sm:$0xf]
      %v289 = vld [vmem:[%s1 + $0x3c] sm:$0xf]
      %v290 = vld [vmem:[%s1 + $0x40] sm:$0xf]
      %v291 = vld [vmem:[%s1 + $0x44] sm:$0xf]
      %v292 = vld [vmem:[%s1 + $0x48] sm:$0xf]
      %v293 = vld [vmem:[%s1 + $0x4c] sm:$0xf]
      %v294 = vld [vmem:[%s1 + $0x50] sm:$0xf]
      %v295 = vld [vmem:[%s1 + $0x54] sm:$0xf]
      %v296 = vld [vmem:[%s1 + $0x58] sm:$0xf]
      %v297 = vld [vmem:[%s1 + $0x5c] sm:$0xf]
      %v298 = vld [vmem:[%s1 + $0x60] sm:$0xf]
      %v299 = vld [vmem:[%s1 + $0x64] sm:$0xf]
      %v300 = vld [vmem:[%s1 + $0x68] sm:$0xf]
      %v301 = vld [vmem:[%s1 + $0x6c] sm:$0xf]
      %v302 = vld [vmem:[%s1 + $0x70] sm:$0xf]
      %v303 = vld [vmem:[%s1 + $0x74] sm:$0xf]
      %v304 = vld [vmem:[%s1 + $0x78] sm:$0xf]
      %v305 = vld [vmem:[%s1 + $0x7c] sm:$0xf]
      %v306 = vld [vmem:[%s1 + $0x80] sm:$0xf]
      %v307 = vld [vmem:[%s1 + $0x84] sm:$0xf]
      %v308 = vld [vmem:[%s1 + $0x88] sm:$0xf]
      %v309 = vld [vmem:[%s1 + $0x8c] sm:$0xf]
      %v310 = vld [vmem:[%s1 + $0x90] sm:$0xf]
      %v311 = vld [vmem:[%s1 + $0x94] sm:$0xf]
      %v312 = vld [vmem:[%s1 + $0x98] sm:$0xf]
      %v313 = vld [vmem:[%s1 + $0x9c] sm:$0xf]
      %v314 = vld [vmem:[%s1 + $0xa0] sm:$0xf]
      %v315 = vld [vmem:[%s1 + $0xa4] sm:$0xf]
      %v316 = vld [vmem:[%s1 + $0xa8] sm:$0xf]
      %v317 = vld [vmem:[%s1 + $0xac] sm:$0xf]
      %v318 = vld [vmem:[%s1 + $0xb0] sm:$0xf]
      %v319 = vld [vmem:[%s1 + $0xb4] sm:$0xf]
      %v320 = vld [vmem:[%s1 + $0xb8] sm:$0xf]
      %v321 = vld [vmem:[%s1 + $0xbc] sm:$0xf]
      %s322 = scalar_lea.vmem %s199, 24
      %v323 = vld [vmem:[%s322] sm:$0xff]
      %v324 = vld [vmem:[%s322 + $0x8] sm:$0xf]
      %v325 = vld [vmem:[%s322 + $0xc] sm:$0xff]
      %v326 = vld [vmem:[%s322 + $0x14] sm:$0xf]
      %v327 = vld [vmem:[%s322 + $0x18] sm:$0xff]
      %v328 = vld [vmem:[%s322 + $0x20] sm:$0xf]
      %v329 = vld [vmem:[%s322 + $0x24] sm:$0xff]
      %v330 = vld [vmem:[%s322 + $0x2c] sm:$0xf]
      %v331 = vld [vmem:[%s322 + $0x30] sm:$0xff]
      %v332 = vld [vmem:[%s322 + $0x38] sm:$0xf]
      %v333 = vld [vmem:[%s322 + $0x3c] sm:$0xff]
      %v334 = vld [vmem:[%s322 + $0x44] sm:$0xf]
      %v335 = vld [vmem:[%s322 + $0x48] sm:$0xff]
      %v336 = vld [vmem:[%s322 + $0x50] sm:$0xf]
      %v337 = vld [vmem:[%s322 + $0x54] sm:$0xff]
      %v338 = vld [vmem:[%s322 + $0x5c] sm:$0xf]
      %v339 = vld [vmem:[%s322 + $0x60] sm:$0xff]
      %v340 = vld [vmem:[%s322 + $0x68] sm:$0xf]
      %v341 = vld [vmem:[%s322 + $0x6c] sm:$0xff]
      %v342 = vld [vmem:[%s322 + $0x74] sm:$0xf]
      %v343 = vld [vmem:[%s322 + $0x78] sm:$0xff]
      %v344 = vld [vmem:[%s322 + $0x80] sm:$0xf]
      %v345 = vld [vmem:[%s322 + $0x84] sm:$0xff]
      %v346 = vld [vmem:[%s322 + $0x8c] sm:$0xf]
      %v347 = vld [vmem:[%s322 + $0x90] sm:$0xff]
      %v348 = vld [vmem:[%s322 + $0x98] sm:$0xf]
      %v349 = vld [vmem:[%s322 + $0x9c] sm:$0xff]
      %v350 = vld [vmem:[%s322 + $0xa4] sm:$0xf]
      %v351 = vld [vmem:[%s322 + $0xa8] sm:$0xff]
      %v352 = vld [vmem:[%s322 + $0xb0] sm:$0xf]
      %v353 = vld [vmem:[%s322 + $0xb4] sm:$0xff]
      %v354 = vld [vmem:[%s322 + $0xbc] sm:$0xf]
      %v355 = vld [vmem:[%s322 + $0xc0] sm:$0xff]
      %v356 = vld [vmem:[%s322 + $0xc8] sm:$0xf]
      %v357 = vld [vmem:[%s322 + $0xcc] sm:$0xff]
      %v358 = vld [vmem:[%s322 + $0xd4] sm:$0xf]
      %v359 = vld [vmem:[%s322 + $0xd8] sm:$0xff]
      %v360 = vld [vmem:[%s322 + $0xe0] sm:$0xf]
      %v361 = vld [vmem:[%s322 + $0xe4] sm:$0xff]
      %v362 = vld [vmem:[%s322 + $0xec] sm:$0xf]
      %v363 = vld [vmem:[%s322 + $0xf0] sm:$0xff]
      %v364 = vld [vmem:[%s322 + $0xf8] sm:$0xf]
      %v365 = vld [vmem:[%s322 + $0xfc] sm:$0xff]
      %v366 = vld [vmem:[%s322 + $0x104] sm:$0xf]
      %v367 = vld [vmem:[%s322 + $0x108] sm:$0xff]
      %v368 = vld [vmem:[%s322 + $0x110] sm:$0xf]
      %v369 = vld [vmem:[%s322 + $0x114] sm:$0xff]
      %v370 = vld [vmem:[%s322 + $0x11c] sm:$0xf]
      %v371 = vld [vmem:[%s322 + $0x120] sm:$0xff]
      %v372 = vld [vmem:[%s322 + $0x128] sm:$0xf]
      %v373 = vld [vmem:[%s322 + $0x12c] sm:$0xff]
      %v374 = vld [vmem:[%s322 + $0x134] sm:$0xf]
      %v375 = vld [vmem:[%s322 + $0x138] sm:$0xff]
      %v376 = vld [vmem:[%s322 + $0x140] sm:$0xf]
      %v377 = vld [vmem:[%s322 + $0x144] sm:$0xff]
      %v378 = vld [vmem:[%s322 + $0x14c] sm:$0xf]
      %v379 = vld [vmem:[%s322 + $0x150] sm:$0xff]
      %v380 = vld [vmem:[%s322 + $0x158] sm:$0xf]
      %v381 = vld [vmem:[%s322 + $0x15c] sm:$0xff]
      %v382 = vld [vmem:[%s322 + $0x164] sm:$0xf]
      %v383 = vld [vmem:[%s322 + $0x168] sm:$0xff]
      %v384 = vld [vmem:[%s322 + $0x170] sm:$0xf]
      %v385 = vld [vmem:[%s322 + $0x174] sm:$0xff]
      %v386 = vld [vmem:[%s322 + $0x17c] sm:$0xf]
      %s387 = scalar_lea.vmem %s1, 192
      %v388 = vld [vmem:[%s387] sm:$0xf]
      %v389 = vld [vmem:[%s387 + $0x4] sm:$0xf]
      %v390 = vld [vmem:[%s387 + $0x8] sm:$0xf]
      %v391 = vld [vmem:[%s387 + $0xc] sm:$0xf]
      %v392 = vld [vmem:[%s387 + $0x10] sm:$0xf]
      %v393 = vld [vmem:[%s387 + $0x14] sm:$0xf]
      %v394 = vld [vmem:[%s387 + $0x18] sm:$0xf]
      %v395 = vld [vmem:[%s387 + $0x1c] sm:$0xf]
      %v396 = vld [vmem:[%s387 + $0x20] sm:$0xf]
      %v397 = vld [vmem:[%s387 + $0x24] sm:$0xf]
      %v398 = vld [vmem:[%s387 + $0x28] sm:$0xf]
      %v399 = vld [vmem:[%s387 + $0x2c] sm:$0xf]
      %v400 = vld [vmem:[%s387 + $0x30] sm:$0xf]
      %v401 = vld [vmem:[%s387 + $0x34] sm:$0xf]
      %v402 = vld [vmem:[%s387 + $0x38] sm:$0xf]
      %v403 = vld [vmem:[%s387 + $0x3c] sm:$0xf]
      %v404 = vld [vmem:[%s387 + $0x40] sm:$0xf]
      %v405 = vld [vmem:[%s387 + $0x44] sm:$0xf]
      %v406 = vld [vmem:[%s387 + $0x48] sm:$0xf]
      %v407 = vld [vmem:[%s387 + $0x4c] sm:$0xf]
      %v408 = vld [vmem:[%s387 + $0x50] sm:$0xf]
      %v409 = vld [vmem:[%s387 + $0x54] sm:$0xf]
      %v410 = vld [vmem:[%s387 + $0x58] sm:$0xf]
      %v411 = vld [vmem:[%s387 + $0x5c] sm:$0xf]
      %v412 = vld [vmem:[%s387 + $0x60] sm:$0xf]
      %v413 = vld [vmem:[%s387 + $0x64] sm:$0xf]
      %v414 = vld [vmem:[%s387 + $0x68] sm:$0xf]
      %v415 = vld [vmem:[%s387 + $0x6c] sm:$0xf]
      %v416 = vld [vmem:[%s387 + $0x70] sm:$0xf]
      %v417 = vld [vmem:[%s387 + $0x74] sm:$0xf]
      %v418 = vld [vmem:[%s387 + $0x78] sm:$0xf]
      %v419 = vld [vmem:[%s387 + $0x7c] sm:$0xf]
      %v420 = vld [vmem:[%s387 + $0x80] sm:$0xf]
      %v421 = vld [vmem:[%s387 + $0x84] sm:$0xf]
      %v422 = vld [vmem:[%s387 + $0x88] sm:$0xf]
      %v423 = vld [vmem:[%s387 + $0x8c] sm:$0xf]
      %v424 = vld [vmem:[%s387 + $0x90] sm:$0xf]
      %v425 = vld [vmem:[%s387 + $0x94] sm:$0xf]
      %v426 = vld [vmem:[%s387 + $0x98] sm:$0xf]
      %v427 = vld [vmem:[%s387 + $0x9c] sm:$0xf]
      %v428 = vld [vmem:[%s387 + $0xa0] sm:$0xf]
      %v429 = vld [vmem:[%s387 + $0xa4] sm:$0xf]
      %v430 = vld [vmem:[%s387 + $0xa8] sm:$0xf]
      %v431 = vld [vmem:[%s387 + $0xac] sm:$0xf]
      %v432 = vld [vmem:[%s387 + $0xb0] sm:$0xf]
      %v433 = vld [vmem:[%s387 + $0xb4] sm:$0xf]
      %v434 = vld [vmem:[%s387 + $0xb8] sm:$0xf]
      %v435 = vld [vmem:[%s387 + $0xbc] sm:$0xf]
      %v500 = vunpack.c.l.b16 %v323
      %v501 = vunpack.c.h.b16 %v323
      %v502 = vunpack.c.l.b16 %v324
      %v503 = vunpack.c.l.b16 %v325
      %v504 = vunpack.c.h.b16 %v325
      %v505 = vunpack.c.l.b16 %v326
      %v506 = vunpack.c.l.b16 %v327
      %v507 = vunpack.c.h.b16 %v327
      %v508 = vunpack.c.l.b16 %v328
      %v509 = vunpack.c.l.b16 %v329
      %v510 = vunpack.c.h.b16 %v329
      %v511 = vunpack.c.l.b16 %v330
      %v512 = vunpack.c.l.b16 %v331
      %v513 = vunpack.c.h.b16 %v331
      %v514 = vunpack.c.l.b16 %v332
      %v515 = vunpack.c.l.b16 %v333
      %v516 = vunpack.c.h.b16 %v333
      %v517 = vunpack.c.l.b16 %v334
      %v518 = vunpack.c.l.b16 %v335
      %v519 = vunpack.c.h.b16 %v335
      %v520 = vunpack.c.l.b16 %v336
      %v521 = vunpack.c.l.b16 %v337
      %v522 = vunpack.c.h.b16 %v337
      %v523 = vunpack.c.l.b16 %v338
      %v524 = vunpack.c.l.b16 %v339
      %v525 = vunpack.c.h.b16 %v339
      %v526 = vunpack.c.l.b16 %v340
      %v527 = vunpack.c.l.b16 %v341
      %v528 = vunpack.c.h.b16 %v341
      %v529 = vunpack.c.l.b16 %v342
      %v530 = vunpack.c.l.b16 %v343
      %v531 = vunpack.c.h.b16 %v343
      %v532 = vunpack.c.l.b16 %v344
      %v533 = vunpack.c.l.b16 %v345
      %v534 = vunpack.c.h.b16 %v345
      %v535 = vunpack.c.l.b16 %v346
      %v536 = vunpack.c.l.b16 %v347
      %v537 = vunpack.c.h.b16 %v347
      %v538 = vunpack.c.l.b16 %v348
      %v539 = vunpack.c.l.b16 %v349
      %v540 = vunpack.c.h.b16 %v349
      %v541 = vunpack.c.l.b16 %v350
      %v542 = vunpack.c.l.b16 %v351
      %v543 = vunpack.c.h.b16 %v351
      %v544 = vunpack.c.l.b16 %v352
      %v545 = vunpack.c.l.b16 %v353
      %v546 = vunpack.c.h.b16 %v353
      %v547 = vunpack.c.l.b16 %v354
      %v548 = vunpack.c.l.b16 %v355
      %v549 = vunpack.c.h.b16 %v355
      %v550 = vunpack.c.l.b16 %v356
      %v551 = vunpack.c.l.b16 %v357
      %v552 = vunpack.c.h.b16 %v357
      %v553 = vunpack.c.l.b16 %v358
      %v554 = vunpack.c.l.b16 %v359
      %v555 = vunpack.c.h.b16 %v359
      %v556 = vunpack.c.l.b16 %v360
      %v557 = vunpack.c.l.b16 %v361
      %v558 = vunpack.c.h.b16 %v361
      %v559 = vunpack.c.l.b16 %v362
      %v560 = vunpack.c.l.b16 %v363
      %v561 = vunpack.c.h.b16 %v363
      %v562 = vunpack.c.l.b16 %v364
      %v563 = vunpack.c.l.b16 %v365
      %v564 = vunpack.c.h.b16 %v365
      %v565 = vunpack.c.l.b16 %v366
      %v566 = vunpack.c.l.b16 %v367
      %v567 = vunpack.c.h.b16 %v367
      %v568 = vunpack.c.l.b16 %v368
      %v569 = vunpack.c.l.b16 %v369
      %v570 = vunpack.c.h.b16 %v369
      %v571 = vunpack.c.l.b16 %v370
      %v572 = vunpack.c.l.b16 %v371
      %v573 = vunpack.c.h.b16 %v371
      %v574 = vunpack.c.l.b16 %v372
      %v575 = vunpack.c.l.b16 %v373
      %v576 = vunpack.c.h.b16 %v373
      %v577 = vunpack.c.l.b16 %v374
      %v578 = vunpack.c.l.b16 %v375
      %v579 = vunpack.c.h.b16 %v375
      %v580 = vunpack.c.l.b16 %v376
      %v581 = vunpack.c.l.b16 %v377
      %v582 = vunpack.c.h.b16 %v377
      %v583 = vunpack.c.l.b16 %v378
      %v584 = vunpack.c.l.b16 %v379
      %v585 = vunpack.c.h.b16 %v379
      %v586 = vunpack.c.l.b16 %v380
      %v587 = vunpack.c.l.b16 %v381
      %v588 = vunpack.c.h.b16 %v381
      %v589 = vunpack.c.l.b16 %v382
      %v590 = vunpack.c.l.b16 %v383
      %v591 = vunpack.c.h.b16 %v383
      %v592 = vunpack.c.l.b16 %v384
      %v593 = vunpack.c.l.b16 %v385
      %v594 = vunpack.c.h.b16 %v385
      %v595 = vunpack.c.l.b16 %v386
      %v596 = vpack.c.b16 %v503, %v500
      %v597 = vpack.c.b16 %v504, %v501
      %v598 = vpack.c.b16 %v505, %v502
      %v599 = vpack.c.b16 %v509, %v506
      %v600 = vpack.c.b16 %v510, %v507
      %v601 = vpack.c.b16 %v511, %v508
      %v602 = vpack.c.b16 %v515, %v512
      %v603 = vpack.c.b16 %v516, %v513
      %v604 = vpack.c.b16 %v517, %v514
      %v605 = vpack.c.b16 %v521, %v518
      %v606 = vpack.c.b16 %v522, %v519
      %v607 = vpack.c.b16 %v523, %v520
      %v608 = vpack.c.b16 %v527, %v524
      %v609 = vpack.c.b16 %v528, %v525
      %v610 = vpack.c.b16 %v529, %v526
      %v611 = vpack.c.b16 %v533, %v530
      %v612 = vpack.c.b16 %v534, %v531
      %v613 = vpack.c.b16 %v535, %v532
      %v614 = vpack.c.b16 %v539, %v536
      %v615 = vpack.c.b16 %v540, %v537
      %v616 = vpack.c.b16 %v541, %v538
      %v617 = vpack.c.b16 %v545, %v542
      %v618 = vpack.c.b16 %v546, %v543
      %v619 = vpack.c.b16 %v547, %v544
      %v620 = vpack.c.b16 %v551, %v548
      %v621 = vpack.c.b16 %v552, %v549
      %v622 = vpack.c.b16 %v553, %v550
      %v623 = vpack.c.b16 %v557, %v554
      %v624 = vpack.c.b16 %v558, %v555
      %v625 = vpack.c.b16 %v559, %v556
      %v626 = vpack.c.b16 %v563, %v560
      %v627 = vpack.c.b16 %v564, %v561
      %v628 = vpack.c.b16 %v565, %v562
      %v629 = vpack.c.b16 %v569, %v566
      %v630 = vpack.c.b16 %v570, %v567
      %v631 = vpack.c.b16 %v571, %v568
      %v632 = vpack.c.b16 %v575, %v572
      %v633 = vpack.c.b16 %v576, %v573
      %v634 = vpack.c.b16 %v577, %v574
      %v635 = vpack.c.b16 %v581, %v578
      %v636 = vpack.c.b16 %v582, %v579
      %v637 = vpack.c.b16 %v583, %v580
      %v638 = vpack.c.b16 %v587, %v584
      %v639 = vpack.c.b16 %v588, %v585
      %v640 = vpack.c.b16 %v589, %v586
      %v641 = vpack.c.b16 %v593, %v590
      %v642 = vpack.c.b16 %v594, %v591
      %v643 = vpack.c.b16 %v595, %v592
      %v740 = vunpack.c.l.b16 %v388
      %v741 = vunpack.c.l.b16 %v389
      %v742 = vunpack.c.l.b16 %v390
      %v743 = vunpack.c.l.b16 %v391
      %v744 = vunpack.c.l.b16 %v392
      %v745 = vunpack.c.l.b16 %v393
      %v746 = vunpack.c.l.b16 %v394
      %v747 = vunpack.c.l.b16 %v395
      %v748 = vunpack.c.l.b16 %v396
      %v749 = vunpack.c.l.b16 %v397
      %v750 = vunpack.c.l.b16 %v398
      %v751 = vunpack.c.l.b16 %v399
      %v752 = vunpack.c.l.b16 %v400
      %v753 = vunpack.c.l.b16 %v401
      %v754 = vunpack.c.l.b16 %v402
      %v755 = vunpack.c.l.b16 %v403
      %v756 = vunpack.c.l.b16 %v404
      %v757 = vunpack.c.l.b16 %v405
      %v758 = vunpack.c.l.b16 %v406
      %v759 = vunpack.c.l.b16 %v407
      %v760 = vunpack.c.l.b16 %v408
      %v761 = vunpack.c.l.b16 %v409
      %v762 = vunpack.c.l.b16 %v410
      %v763 = vunpack.c.l.b16 %v411
      %v764 = vunpack.c.l.b16 %v412
      %v765 = vunpack.c.l.b16 %v413
      %v766 = vunpack.c.l.b16 %v414
      %v767 = vunpack.c.l.b16 %v415
      %v768 = vunpack.c.l.b16 %v416
      %v769 = vunpack.c.l.b16 %v417
      %v770 = vunpack.c.l.b16 %v418
      %v771 = vunpack.c.l.b16 %v419
      %v772 = vunpack.c.l.b16 %v420
      %v773 = vunpack.c.l.b16 %v421
      %v774 = vunpack.c.l.b16 %v422
      %v775 = vunpack.c.l.b16 %v423
      %v776 = vunpack.c.l.b16 %v424
      %v777 = vunpack.c.l.b16 %v425
      %v778 = vunpack.c.l.b16 %v426
      %v779 = vunpack.c.l.b16 %v427
      %v780 = vunpack.c.l.b16 %v428
      %v781 = vunpack.c.l.b16 %v429
      %v782 = vunpack.c.l.b16 %v430
      %v783 = vunpack.c.l.b16 %v431
      %v784 = vunpack.c.l.b16 %v432
      %v785 = vunpack.c.l.b16 %v433
      %v786 = vunpack.c.l.b16 %v434
      %v787 = vunpack.c.l.b16 %v435
      %v788 = vpack.c.b16 %v741, %v740
      %v789 = vpack.c.b16 %v743, %v742
      %v790 = vpack.c.b16 %v745, %v744
      %v791 = vpack.c.b16 %v747, %v746
      %v792 = vpack.c.b16 %v749, %v748
      %v793 = vpack.c.b16 %v751, %v750
      %v794 = vpack.c.b16 %v753, %v752
      %v795 = vpack.c.b16 %v755, %v754
      %v796 = vpack.c.b16 %v757, %v756
      %v797 = vpack.c.b16 %v759, %v758
      %v798 = vpack.c.b16 %v761, %v760
      %v799 = vpack.c.b16 %v763, %v762
      %v800 = vpack.c.b16 %v765, %v764
      %v801 = vpack.c.b16 %v767, %v766
      %v802 = vpack.c.b16 %v769, %v768
      %v803 = vpack.c.b16 %v771, %v770
      %v804 = vpack.c.b16 %v773, %v772
      %v805 = vpack.c.b16 %v775, %v774
      %v806 = vpack.c.b16 %v777, %v776
      %v807 = vpack.c.b16 %v779, %v778
      %v808 = vpack.c.b16 %v781, %v780
      %v809 = vpack.c.b16 %v783, %v782
      %v810 = vpack.c.b16 %v785, %v784
      %v811 = vpack.c.b16 %v787, %v786
      %836 = vmatprep.subr.bf16.mxu0 0
      %837 = vmatpush1.bf16.msra.mxu0 %v795
      %838 = vmatprep.subr.bf16.mxu0 0
      %839 = vmatpush1.bf16.msra.mxu0 %v794
      %840 = vmatprep.subr.bf16.mxu0 0
      %841 = vmatpush1.bf16.msra.mxu0 %v793
      %842 = vmatprep.subr.bf16.mxu0 0
      %843 = vmatpush1.bf16.msra.mxu0 %v792
      %844 = vmatprep.subr.bf16.mxu0 0
      %845 = vmatpush1.bf16.msra.mxu0 %v791
      %846 = vmatprep.subr.bf16.mxu0 0
      %847 = vmatpush1.bf16.msra.mxu0 %v790
      %848 = vmatprep.subr.bf16.mxu0 0
      %849 = vmatpush1.bf16.msra.mxu0 %v789
      %850 = vmatprep.subr.bf16.mxu0 0
      %851 = vmatpush1.bf16.msra.mxu0 %v788
      %852 = vmatprep.subr.bf16.mxu0 0
      %853 = vmatpush2.bf16.msra.mxu0 %v803
      %854 = vmatprep.subr.bf16.mxu0 0
      %855 = vmatpush2.bf16.msra.mxu0 %v802
      %856 = vmatprep.subr.bf16.mxu0 0
      %857 = vmatpush2.bf16.msra.mxu0 %v801
      %858 = vmatprep.subr.bf16.mxu0 0
      %859 = vmatpush2.bf16.msra.mxu0 %v800
      %860 = vmatprep.subr.bf16.mxu0 0
      %861 = vmatpush2.bf16.msra.mxu0 %v799
      %862 = vmatprep.subr.bf16.mxu0 0
      %863 = vmatpush2.bf16.msra.mxu0 %v798
      %864 = vmatprep.subr.bf16.mxu0 0
      %865 = vmatpush2.bf16.msra.mxu0 %v797
      %866 = vmatprep.subr.bf16.mxu0 0
      %867 = vmatpush2.bf16.msra.mxu0 %v796
      %868 = vmatprep.mubr.bf16.mxu0 %v597
      %869 = vmatmul.mubr.bf16.gmra.mxu0 %v596
      %v870 = vpop.f32.mrf.mxu0
      %v871 = vadd.f32 0.0, %v870
      %v872 = vpop.f32.mrf.mxu0
      %v873 = vpop.f32.mrf.mxu0
      %v874 = vadd.f32 0.0, %v873
      %v875 = vpop.f32.mrf.mxu0
      %876 = vmatprep.mubr.bf16.mxu0 %v600
      %877 = vmatmul.mubr.bf16.gmra.mxu0 %v599
      %v878 = vpop.f32.mrf.mxu0
      %v879 = vadd.f32 0.0, %v878
      %v880 = vpop.f32.mrf.mxu0
      %v881 = vpop.f32.mrf.mxu0
      %v882 = vadd.f32 0.0, %v881
      %v883 = vpop.f32.mrf.mxu0
      %884 = vmatprep.mubr.bf16.mxu0 %v603
      %885 = vmatmul.mubr.bf16.gmra.mxu0 %v602
      %v886 = vpop.f32.mrf.mxu0
      %v887 = vadd.f32 0.0, %v886
      %v888 = vpop.f32.mrf.mxu0
      %v889 = vpop.f32.mrf.mxu0
      %v890 = vadd.f32 0.0, %v889
      %v891 = vpop.f32.mrf.mxu0
      %892 = vmatprep.mubr.bf16.mxu0 %v606
      %893 = vmatmul.mubr.bf16.gmra.mxu0 %v605
      %v894 = vpop.f32.mrf.mxu0
      %v895 = vadd.f32 0.0, %v894
      %v896 = vpop.f32.mrf.mxu0
      %v897 = vpop.f32.mrf.mxu0
      %v898 = vadd.f32 0.0, %v897
      %v899 = vpop.f32.mrf.mxu0
      %900 = vmatprep.mubr.bf16.mxu0 %v609
      %901 = vmatmul.mubr.bf16.gmra.mxu0 %v608
      %v902 = vpop.f32.mrf.mxu0
      %v903 = vadd.f32 0.0, %v902
      %v904 = vpop.f32.mrf.mxu0
      %v905 = vpop.f32.mrf.mxu0
      %v906 = vadd.f32 0.0, %v905
      %v907 = vpop.f32.mrf.mxu0
      %908 = vmatprep.mubr.bf16.mxu0 %v612
      %909 = vmatmul.mubr.bf16.gmra.mxu0 %v611
      %v910 = vpop.f32.mrf.mxu0
      %v911 = vadd.f32 0.0, %v910
      %v912 = vpop.f32.mrf.mxu0
      %v913 = vpop.f32.mrf.mxu0
      %v914 = vadd.f32 0.0, %v913
      %v915 = vpop.f32.mrf.mxu0
      %916 = vmatprep.mubr.bf16.mxu0 %v615
      %917 = vmatmul.mubr.bf16.gmra.mxu0 %v614
      %v918 = vpop.f32.mrf.mxu0
      %v919 = vadd.f32 0.0, %v918
      %v920 = vpop.f32.mrf.mxu0
      %v921 = vpop.f32.mrf.mxu0
      %v922 = vadd.f32 0.0, %v921
      %v923 = vpop.f32.mrf.mxu0
      %924 = vmatprep.mubr.bf16.mxu0 %v618
      %925 = vmatmul.mubr.bf16.gmra.mxu0 %v617
      %v926 = vpop.f32.mrf.mxu0
      %v927 = vadd.f32 0.0, %v926
      %v928 = vpop.f32.mrf.mxu0
      %v929 = vpop.f32.mrf.mxu0
      %v930 = vadd.f32 0.0, %v929
      %v931 = vpop.f32.mrf.mxu0
      %932 = vmatprep.mubr.bf16.mxu0 %v621
      %933 = vmatmul.mubr.bf16.gmra.mxu0 %v620
      %v934 = vpop.f32.mrf.mxu0
      %v935 = vadd.f32 0.0, %v934
      %v936 = vpop.f32.mrf.mxu0
      %v937 = vpop.f32.mrf.mxu0
      %v938 = vadd.f32 0.0, %v937
      %v939 = vpop.f32.mrf.mxu0
      %940 = vmatprep.mubr.bf16.mxu0 %v624
      %941 = vmatmul.mubr.bf16.gmra.mxu0 %v623
      %v942 = vpop.f32.mrf.mxu0
      %v943 = vadd.f32 0.0, %v942
      %v944 = vpop.f32.mrf.mxu0
      %v945 = vpop.f32.mrf.mxu0
      %v946 = vadd.f32 0.0, %v945
      %v947 = vpop.f32.mrf.mxu0
      %948 = vmatprep.mubr.bf16.mxu0 %v627
      %949 = vmatmul.mubr.bf16.gmra.mxu0 %v626
      %v950 = vpop.f32.mrf.mxu0
      %v951 = vadd.f32 0.0, %v950
      %v952 = vpop.f32.mrf.mxu0
      %v953 = vpop.f32.mrf.mxu0
      %v954 = vadd.f32 0.0, %v953
      %v955 = vpop.f32.mrf.mxu0
      %956 = vmatprep.mubr.bf16.mxu0 %v630
      %957 = vmatmul.mubr.bf16.gmra.mxu0 %v629
      %v958 = vpop.f32.mrf.mxu0
      %v959 = vadd.f32 0.0, %v958
      %v960 = vpop.f32.mrf.mxu0
      %v961 = vpop.f32.mrf.mxu0
      %v962 = vadd.f32 0.0, %v961
      %v963 = vpop.f32.mrf.mxu0
      %964 = vmatprep.mubr.bf16.mxu0 %v633
      %965 = vmatmul.mubr.bf16.gmra.mxu0 %v632
      %v966 = vpop.f32.mrf.mxu0
      %v967 = vadd.f32 0.0, %v966
      %v968 = vpop.f32.mrf.mxu0
      %v969 = vpop.f32.mrf.mxu0
      %v970 = vadd.f32 0.0, %v969
      %v971 = vpop.f32.mrf.mxu0
      %972 = vmatprep.mubr.bf16.mxu0 %v636
      %973 = vmatmul.mubr.bf16.gmra.mxu0 %v635
      %v974 = vpop.f32.mrf.mxu0
      %v975 = vadd.f32 0.0, %v974
      %v976 = vpop.f32.mrf.mxu0
      %v977 = vpop.f32.mrf.mxu0
      %v978 = vadd.f32 0.0, %v977
      %v979 = vpop.f32.mrf.mxu0
      %980 = vmatprep.mubr.bf16.mxu0 %v639
      %981 = vmatmul.mubr.bf16.gmra.mxu0 %v638
      %v982 = vpop.f32.mrf.mxu0
      %v983 = vadd.f32 0.0, %v982
      %v984 = vpop.f32.mrf.mxu0
      %v985 = vpop.f32.mrf.mxu0
      %v986 = vadd.f32 0.0, %v985
      %v987 = vpop.f32.mrf.mxu0
      %988 = vmatprep.mubr.bf16.mxu0 %v642
      %989 = vmatmul.mubr.bf16.gmra.mxu0 %v641
      %v990 = vpop.f32.mrf.mxu0
      %v991 = vadd.f32 0.0, %v990
      %v992 = vpop.f32.mrf.mxu0
      %v993 = vpop.f32.mrf.mxu0
      %v994 = vadd.f32 0.0, %v993
      %v995 = vpop.f32.mrf.mxu0
      %996 = vdwg.mxu0
      %997 = vmatprep.subr.bf16.mxu0 0
      %998 = vmatpush1.bf16.msra.mxu0 %v811
      %999 = vmatprep.subr.bf16.mxu0 0
      %1000 = vmatpush1.bf16.msra.mxu0 %v810
      %1001 = vmatprep.subr.bf16.mxu0 0
      %1002 = vmatpush1.bf16.msra.mxu0 %v809
      %1003 = vmatprep.subr.bf16.mxu0 0
      %1004 = vmatpush1.bf16.msra.mxu0 %v808
      %1005 = vmatprep.subr.bf16.mxu0 0
      %1006 = vmatpush1.bf16.msra.mxu0 %v807
      %1007 = vmatprep.subr.bf16.mxu0 0
      %1008 = vmatpush1.bf16.msra.mxu0 %v806
      %1009 = vmatprep.subr.bf16.mxu0 0
      %1010 = vmatpush1.bf16.msra.mxu0 %v805
      %1011 = vmatprep.subr.bf16.mxu0 0
      %1012 = vmatpush1.bf16.msra.mxu0 %v804
      %1013 = vmatprep.subr.bf16.mxu0 0
      %1014 = vmatpush2.bf16.msra.mxu0 0
      %1015 = vmatprep.subr.bf16.mxu0 0
      %1016 = vmatpush2.bf16.msra.mxu0 0
      %1017 = vmatprep.subr.bf16.mxu0 0
      %1018 = vmatpush2.bf16.msra.mxu0 0
      %1019 = vmatprep.subr.bf16.mxu0 0
      %1020 = vmatpush2.bf16.msra.mxu0 0
      %1021 = vmatprep.subr.bf16.mxu0 0
      %1022 = vmatpush2.bf16.msra.mxu0 0
      %1023 = vmatprep.subr.bf16.mxu0 0
      %1024 = vmatpush2.bf16.msra.mxu0 0
      %1025 = vmatprep.subr.bf16.mxu0 0
      %1026 = vmatpush2.bf16.msra.mxu0 0
      %1027 = vmatprep.subr.bf16.mxu0 0
      %1028 = vmatpush2.bf16.msra.mxu0 0
      %1029 = vmatprep.mubr.bf16.mxu0 0
      %1030 = vmatmul.mubr.bf16.gmra.mxu0 %v598
      %v1031 = vpop.f32.mrf.mxu0
      %v1032 = vadd.f32 %v871, %v1031
      %v1033 = vpop.f32.mrf.mxu0
      %v1034 = vpop.f32.mrf.mxu0
      %v1035 = vadd.f32 %v874, %v1034
      %v1036 = vpop.f32.mrf.mxu0
      %1037 = vmatprep.mubr.bf16.mxu0 0
      %1038 = vmatmul.mubr.bf16.gmra.mxu0 %v601
      %v1039 = vpop.f32.mrf.mxu0
      %v1040 = vadd.f32 %v879, %v1039
      %v1041 = vpop.f32.mrf.mxu0
      %v1042 = vpop.f32.mrf.mxu0
      %v1043 = vadd.f32 %v882, %v1042
      %v1044 = vpop.f32.mrf.mxu0
      %1045 = vmatprep.mubr.bf16.mxu0 0
      %1046 = vmatmul.mubr.bf16.gmra.mxu0 %v604
      %v1047 = vpop.f32.mrf.mxu0
      %v1048 = vadd.f32 %v887, %v1047
      %v1049 = vpop.f32.mrf.mxu0
      %v1050 = vpop.f32.mrf.mxu0
      %v1051 = vadd.f32 %v890, %v1050
      %v1052 = vpop.f32.mrf.mxu0
      %1053 = vmatprep.mubr.bf16.mxu0 0
      %1054 = vmatmul.mubr.bf16.gmra.mxu0 %v607
      %v1055 = vpop.f32.mrf.mxu0
      %v1056 = vadd.f32 %v895, %v1055
      %v1057 = vpop.f32.mrf.mxu0
      %v1058 = vpop.f32.mrf.mxu0
      %v1059 = vadd.f32 %v898, %v1058
      %v1060 = vpop.f32.mrf.mxu0
      %1061 = vmatprep.mubr.bf16.mxu0 0
      %1062 = vmatmul.mubr.bf16.gmra.mxu0 %v610
      %v1063 = vpop.f32.mrf.mxu0
      %v1064 = vadd.f32 %v903, %v1063
      %v1065 = vpop.f32.mrf.mxu0
      %v1066 = vpop.f32.mrf.mxu0
      %v1067 = vadd.f32 %v906, %v1066
      %v1068 = vpop.f32.mrf.mxu0
      %1069 = vmatprep.mubr.bf16.mxu0 0
      %1070 = vmatmul.mubr.bf16.gmra.mxu0 %v613
      %v1071 = vpop.f32.mrf.mxu0
      %v1072 = vadd.f32 %v911, %v1071
      %v1073 = vpop.f32.mrf.mxu0
      %v1074 = vpop.f32.mrf.mxu0
      %v1075 = vadd.f32 %v914, %v1074
      %v1076 = vpop.f32.mrf.mxu0
      %1077 = vmatprep.mubr.bf16.mxu0 0
      %1078 = vmatmul.mubr.bf16.gmra.mxu0 %v616
      %v1079 = vpop.f32.mrf.mxu0
      %v1080 = vadd.f32 %v919, %v1079
      %v1081 = vpop.f32.mrf.mxu0
      %v1082 = vpop.f32.mrf.mxu0
      %v1083 = vadd.f32 %v922, %v1082
      %v1084 = vpop.f32.mrf.mxu0
      %1085 = vmatprep.mubr.bf16.mxu0 0
      %1086 = vmatmul.mubr.bf16.gmra.mxu0 %v619
      %v1087 = vpop.f32.mrf.mxu0
      %v1088 = vadd.f32 %v927, %v1087
      %v1089 = vpop.f32.mrf.mxu0
      %v1090 = vpop.f32.mrf.mxu0
      %v1091 = vadd.f32 %v930, %v1090
      %v1092 = vpop.f32.mrf.mxu0
      %1093 = vmatprep.mubr.bf16.mxu0 0
      %1094 = vmatmul.mubr.bf16.gmra.mxu0 %v622
      %v1095 = vpop.f32.mrf.mxu0
      %v1096 = vadd.f32 %v935, %v1095
      %v1097 = vpop.f32.mrf.mxu0
      %v1098 = vpop.f32.mrf.mxu0
      %v1099 = vadd.f32 %v938, %v1098
      %v1100 = vpop.f32.mrf.mxu0
      %1101 = vmatprep.mubr.bf16.mxu0 0
      %1102 = vmatmul.mubr.bf16.gmra.mxu0 %v625
      %v1103 = vpop.f32.mrf.mxu0
      %v1104 = vadd.f32 %v943, %v1103
      %v1105 = vpop.f32.mrf.mxu0
      %v1106 = vpop.f32.mrf.mxu0
      %v1107 = vadd.f32 %v946, %v1106
      %v1108 = vpop.f32.mrf.mxu0
      %1109 = vmatprep.mubr.bf16.mxu0 0
      %1110 = vmatmul.mubr.bf16.gmra.mxu0 %v628
      %v1111 = vpop.f32.mrf.mxu0
      %v1112 = vadd.f32 %v951, %v1111
      %v1113 = vpop.f32.mrf.mxu0
      %v1114 = vpop.f32.mrf.mxu0
      %v1115 = vadd.f32 %v954, %v1114
      %v1116 = vpop.f32.mrf.mxu0
      %1117 = vmatprep.mubr.bf16.mxu0 0
      %1118 = vmatmul.mubr.bf16.gmra.mxu0 %v631
      %v1119 = vpop.f32.mrf.mxu0
      %v1120 = vadd.f32 %v959, %v1119
      %v1121 = vpop.f32.mrf.mxu0
      %v1122 = vpop.f32.mrf.mxu0
      %v1123 = vadd.f32 %v962, %v1122
      %v1124 = vpop.f32.mrf.mxu0
      %1125 = vmatprep.mubr.bf16.mxu0 0
      %1126 = vmatmul.mubr.bf16.gmra.mxu0 %v634
      %v1127 = vpop.f32.mrf.mxu0
      %v1128 = vadd.f32 %v967, %v1127
      %v1129 = vpop.f32.mrf.mxu0
      %v1130 = vpop.f32.mrf.mxu0
      %v1131 = vadd.f32 %v970, %v1130
      %v1132 = vpop.f32.mrf.mxu0
      %1133 = vmatprep.mubr.bf16.mxu0 0
      %1134 = vmatmul.mubr.bf16.gmra.mxu0 %v637
      %v1135 = vpop.f32.mrf.mxu0
      %v1136 = vadd.f32 %v975, %v1135
      %v1137 = vpop.f32.mrf.mxu0
      %v1138 = vpop.f32.mrf.mxu0
      %v1139 = vadd.f32 %v978, %v1138
      %v1140 = vpop.f32.mrf.mxu0
      %1141 = vmatprep.mubr.bf16.mxu0 0
      %1142 = vmatmul.mubr.bf16.gmra.mxu0 %v640
      %v1143 = vpop.f32.mrf.mxu0
      %v1144 = vadd.f32 %v983, %v1143
      %v1145 = vpop.f32.mrf.mxu0
      %v1146 = vpop.f32.mrf.mxu0
      %v1147 = vadd.f32 %v986, %v1146
      %v1148 = vpop.f32.mrf.mxu0
      %1149 = vmatprep.mubr.bf16.mxu0 0
      %1150 = vmatmul.mubr.bf16.gmra.mxu0 %v643
      %v1151 = vpop.f32.mrf.mxu0
      %v1152 = vadd.f32 %v991, %v1151
      %v1153 = vpop.f32.mrf.mxu0
      %v1154 = vpop.f32.mrf.mxu0
      %v1155 = vadd.f32 %v994, %v1154
      %v1156 = vpop.f32.mrf.mxu0
      %1157 = vdwg.mxu0
      %v1222 = vunpack.c.l.b16 %v210
      %v1223 = vunpack.c.h.b16 %v210
      %v1224 = vunpack.c.l.b16 %v211
      %v1225 = vunpack.c.l.b16 %v212
      %v1226 = vunpack.c.h.b16 %v212
      %v1227 = vunpack.c.l.b16 %v213
      %v1228 = vunpack.c.l.b16 %v214
      %v1229 = vunpack.c.h.b16 %v214
      %v1230 = vunpack.c.l.b16 %v215
      %v1231 = vunpack.c.l.b16 %v216
      %v1232 = vunpack.c.h.b16 %v216
      %v1233 = vunpack.c.l.b16 %v217
      %v1234 = vunpack.c.l.b16 %v218
      %v1235 = vunpack.c.h.b16 %v218
      %v1236 = vunpack.c.l.b16 %v219
      %v1237 = vunpack.c.l.b16 %v220
      %v1238 = vunpack.c.h.b16 %v220
      %v1239 = vunpack.c.l.b16 %v221
      %v1240 = vunpack.c.l.b16 %v222
      %v1241 = vunpack.c.h.b16 %v222
      %v1242 = vunpack.c.l.b16 %v223
      %v1243 = vunpack.c.l.b16 %v224
      %v1244 = vunpack.c.h.b16 %v224
      %v1245 = vunpack.c.l.b16 %v225
      %v1246 = vunpack.c.l.b16 %v226
      %v1247 = vunpack.c.h.b16 %v226
      %v1248 = vunpack.c.l.b16 %v227
      %v1249 = vunpack.c.l.b16 %v228
      %v1250 = vunpack.c.h.b16 %v228
      %v1251 = vunpack.c.l.b16 %v229
      %v1252 = vunpack.c.l.b16 %v230
      %v1253 = vunpack.c.h.b16 %v230
      %v1254 = vunpack.c.l.b16 %v231
      %v1255 = vunpack.c.l.b16 %v232
      %v1256 = vunpack.c.h.b16 %v232
      %v1257 = vunpack.c.l.b16 %v233
      %v1258 = vunpack.c.l.b16 %v234
      %v1259 = vunpack.c.h.b16 %v234
      %v1260 = vunpack.c.l.b16 %v235
      %v1261 = vunpack.c.l.b16 %v236
      %v1262 = vunpack.c.h.b16 %v236
      %v1263 = vunpack.c.l.b16 %v237
      %v1264 = vunpack.c.l.b16 %v238
      %v1265 = vunpack.c.h.b16 %v238
      %v1266 = vunpack.c.l.b16 %v239
      %v1267 = vunpack.c.l.b16 %v240
      %v1268 = vunpack.c.h.b16 %v240
      %v1269 = vunpack.c.l.b16 %v241
      %v1270 = vunpack.c.l.b16 %v242
      %v1271 = vunpack.c.h.b16 %v242
      %v1272 = vunpack.c.l.b16 %v243
      %v1273 = vunpack.c.l.b16 %v244
      %v1274 = vunpack.c.h.b16 %v244
      %v1275 = vunpack.c.l.b16 %v245
      %v1276 = vunpack.c.l.b16 %v246
      %v1277 = vunpack.c.h.b16 %v246
      %v1278 = vunpack.c.l.b16 %v247
      %v1279 = vunpack.c.l.b16 %v248
      %v1280 = vunpack.c.h.b16 %v248
      %v1281 = vunpack.c.l.b16 %v249
      %v1282 = vunpack.c.l.b16 %v250
      %v1283 = vunpack.c.h.b16 %v250
      %v1284 = vunpack.c.l.b16 %v251
      %v1285 = vunpack.c.l.b16 %v252
      %v1286 = vunpack.c.h.b16 %v252
      %v1287 = vunpack.c.l.b16 %v253
      %v1288 = vunpack.c.l.b16 %v254
      %v1289 = vunpack.c.h.b16 %v254
      %v1290 = vunpack.c.l.b16 %v255
      %v1291 = vunpack.c.l.b16 %v256
      %v1292 = vunpack.c.h.b16 %v256
      %v1293 = vunpack.c.l.b16 %v257
      %v1294 = vunpack.c.l.b16 %v258
      %v1295 = vunpack.c.h.b16 %v258
      %v1296 = vunpack.c.l.b16 %v259
      %v1297 = vunpack.c.l.b16 %v260
      %v1298 = vunpack.c.h.b16 %v260
      %v1299 = vunpack.c.l.b16 %v261
      %v1300 = vunpack.c.l.b16 %v262
      %v1301 = vunpack.c.h.b16 %v262
      %v1302 = vunpack.c.l.b16 %v263
      %v1303 = vunpack.c.l.b16 %v264
      %v1304 = vunpack.c.h.b16 %v264
      %v1305 = vunpack.c.l.b16 %v265
      %v1306 = vunpack.c.l.b16 %v266
      %v1307 = vunpack.c.h.b16 %v266
      %v1308 = vunpack.c.l.b16 %v267
      %v1309 = vunpack.c.l.b16 %v268
      %v1310 = vunpack.c.h.b16 %v268
      %v1311 = vunpack.c.l.b16 %v269
      %v1312 = vunpack.c.l.b16 %v270
      %v1313 = vunpack.c.h.b16 %v270
      %v1314 = vunpack.c.l.b16 %v271
      %v1315 = vunpack.c.l.b16 %v272
      %v1316 = vunpack.c.h.b16 %v272
      %v1317 = vunpack.c.l.b16 %v273
      %v1318 = vpack.c.b16 %v1225, %v1222
      %v1319 = vpack.c.b16 %v1226, %v1223
      %v1320 = vpack.c.b16 %v1227, %v1224
      %v1321 = vpack.c.b16 %v1231, %v1228
      %v1322 = vpack.c.b16 %v1232, %v1229
      %v1323 = vpack.c.b16 %v1233, %v1230
      %v1324 = vpack.c.b16 %v1237, %v1234
      %v1325 = vpack.c.b16 %v1238, %v1235
      %v1326 = vpack.c.b16 %v1239, %v1236
      %v1327 = vpack.c.b16 %v1243, %v1240
      %v1328 = vpack.c.b16 %v1244, %v1241
      %v1329 = vpack.c.b16 %v1245, %v1242
      %v1330 = vpack.c.b16 %v1249, %v1246
      %v1331 = vpack.c.b16 %v1250, %v1247
      %v1332 = vpack.c.b16 %v1251, %v1248
      %v1333 = vpack.c.b16 %v1255, %v1252
      %v1334 = vpack.c.b16 %v1256, %v1253
      %v1335 = vpack.c.b16 %v1257, %v1254
      %v1336 = vpack.c.b16 %v1261, %v1258
      %v1337 = vpack.c.b16 %v1262, %v1259
      %v1338 = vpack.c.b16 %v1263, %v1260
      %v1339 = vpack.c.b16 %v1267, %v1264
      %v1340 = vpack.c.b16 %v1268, %v1265
      %v1341 = vpack.c.b16 %v1269, %v1266
      %v1342 = vpack.c.b16 %v1273, %v1270
      %v1343 = vpack.c.b16 %v1274, %v1271
      %v1344 = vpack.c.b16 %v1275, %v1272
      %v1345 = vpack.c.b16 %v1279, %v1276
      %v1346 = vpack.c.b16 %v1280, %v1277
      %v1347 = vpack.c.b16 %v1281, %v1278
      %v1348 = vpack.c.b16 %v1285, %v1282
      %v1349 = vpack.c.b16 %v1286, %v1283
      %v1350 = vpack.c.b16 %v1287, %v1284
      %v1351 = vpack.c.b16 %v1291, %v1288
      %v1352 = vpack.c.b16 %v1292, %v1289
      %v1353 = vpack.c.b16 %v1293, %v1290
      %v1354 = vpack.c.b16 %v1297, %v1294
      %v1355 = vpack.c.b16 %v1298, %v1295
      %v1356 = vpack.c.b16 %v1299, %v1296
      %v1357 = vpack.c.b16 %v1303, %v1300
      %v1358 = vpack.c.b16 %v1304, %v1301
      %v1359 = vpack.c.b16 %v1305, %v1302
      %v1360 = vpack.c.b16 %v1309, %v1306
      %v1361 = vpack.c.b16 %v1310, %v1307
      %v1362 = vpack.c.b16 %v1311, %v1308
      %v1363 = vpack.c.b16 %v1315, %v1312
      %v1364 = vpack.c.b16 %v1316, %v1313
      %v1365 = vpack.c.b16 %v1317, %v1314
      %v1462 = vunpack.c.l.b16 %v274
      %v1463 = vunpack.c.l.b16 %v275
      %v1464 = vunpack.c.l.b16 %v276
      %v1465 = vunpack.c.l.b16 %v277
      %v1466 = vunpack.c.l.b16 %v278
      %v1467 = vunpack.c.l.b16 %v279
      %v1468 = vunpack.c.l.b16 %v280
      %v1469 = vunpack.c.l.b16 %v281
      %v1470 = vunpack.c.l.b16 %v282
      %v1471 = vunpack.c.l.b16 %v283
      %v1472 = vunpack.c.l.b16 %v284
      %v1473 = vunpack.c.l.b16 %v285
      %v1474 = vunpack.c.l.b16 %v286
      %v1475 = vunpack.c.l.b16 %v287
      %v1476 = vunpack.c.l.b16 %v288
      %v1477 = vunpack.c.l.b16 %v289
      %v1478 = vunpack.c.l.b16 %v290
      %v1479 = vunpack.c.l.b16 %v291
      %v1480 = vunpack.c.l.b16 %v292
      %v1481 = vunpack.c.l.b16 %v293
      %v1482 = vunpack.c.l.b16 %v294
      %v1483 = vunpack.c.l.b16 %v295
      %v1484 = vunpack.c.l.b16 %v296
      %v1485 = vunpack.c.l.b16 %v297
      %v1486 = vunpack.c.l.b16 %v298
      %v1487 = vunpack.c.l.b16 %v299
      %v1488 = vunpack.c.l.b16 %v300
      %v1489 = vunpack.c.l.b16 %v301
      %v1490 = vunpack.c.l.b16 %v302
      %v1491 = vunpack.c.l.b16 %v303
      %v1492 = vunpack.c.l.b16 %v304
      %v1493 = vunpack.c.l.b16 %v305
      %v1494 = vunpack.c.l.b16 %v306
      %v1495 = vunpack.c.l.b16 %v307
      %v1496 = vunpack.c.l.b16 %v308
      %v1497 = vunpack.c.l.b16 %v309
      %v1498 = vunpack.c.l.b16 %v310
      %v1499 = vunpack.c.l.b16 %v311
      %v1500 = vunpack.c.l.b16 %v312
      %v1501 = vunpack.c.l.b16 %v313
      %v1502 = vunpack.c.l.b16 %v314
      %v1503 = vunpack.c.l.b16 %v315
      %v1504 = vunpack.c.l.b16 %v316
      %v1505 = vunpack.c.l.b16 %v317
      %v1506 = vunpack.c.l.b16 %v318
      %v1507 = vunpack.c.l.b16 %v319
      %v1508 = vunpack.c.l.b16 %v320
      %v1509 = vunpack.c.l.b16 %v321
      %v1510 = vpack.c.b16 %v1463, %v1462
      %v1511 = vpack.c.b16 %v1465, %v1464
      %v1512 = vpack.c.b16 %v1467, %v1466
      %v1513 = vpack.c.b16 %v1469, %v1468
      %v1514 = vpack.c.b16 %v1471, %v1470
      %v1515 = vpack.c.b16 %v1473, %v1472
      %v1516 = vpack.c.b16 %v1475, %v1474
      %v1517 = vpack.c.b16 %v1477, %v1476
      %v1518 = vpack.c.b16 %v1479, %v1478
      %v1519 = vpack.c.b16 %v1481, %v1480
      %v1520 = vpack.c.b16 %v1483, %v1482
      %v1521 = vpack.c.b16 %v1485, %v1484
      %v1522 = vpack.c.b16 %v1487, %v1486
      %v1523 = vpack.c.b16 %v1489, %v1488
      %v1524 = vpack.c.b16 %v1491, %v1490
      %v1525 = vpack.c.b16 %v1493, %v1492
      %v1526 = vpack.c.b16 %v1495, %v1494
      %v1527 = vpack.c.b16 %v1497, %v1496
      %v1528 = vpack.c.b16 %v1499, %v1498
      %v1529 = vpack.c.b16 %v1501, %v1500
      %v1530 = vpack.c.b16 %v1503, %v1502
      %v1531 = vpack.c.b16 %v1505, %v1504
      %v1532 = vpack.c.b16 %v1507, %v1506
      %v1533 = vpack.c.b16 %v1509, %v1508
      %1558 = vmatprep.subr.bf16.mxu0 0
      %1559 = vmatpush1.bf16.msra.mxu0 %v1517
      %1560 = vmatprep.subr.bf16.mxu0 0
      %1561 = vmatpush1.bf16.msra.mxu0 %v1516
      %1562 = vmatprep.subr.bf16.mxu0 0
      %1563 = vmatpush1.bf16.msra.mxu0 %v1515
      %1564 = vmatprep.subr.bf16.mxu0 0
      %1565 = vmatpush1.bf16.msra.mxu0 %v1514
      %1566 = vmatprep.subr.bf16.mxu0 0
      %1567 = vmatpush1.bf16.msra.mxu0 %v1513
      %1568 = vmatprep.subr.bf16.mxu0 0
      %1569 = vmatpush1.bf16.msra.mxu0 %v1512
      %1570 = vmatprep.subr.bf16.mxu0 0
      %1571 = vmatpush1.bf16.msra.mxu0 %v1511
      %1572 = vmatprep.subr.bf16.mxu0 0
      %1573 = vmatpush1.bf16.msra.mxu0 %v1510
      %1574 = vmatprep.subr.bf16.mxu0 0
      %1575 = vmatpush2.bf16.msra.mxu0 %v1525
      %1576 = vmatprep.subr.bf16.mxu0 0
      %1577 = vmatpush2.bf16.msra.mxu0 %v1524
      %1578 = vmatprep.subr.bf16.mxu0 0
      %1579 = vmatpush2.bf16.msra.mxu0 %v1523
      %1580 = vmatprep.subr.bf16.mxu0 0
      %1581 = vmatpush2.bf16.msra.mxu0 %v1522
      %1582 = vmatprep.subr.bf16.mxu0 0
      %1583 = vmatpush2.bf16.msra.mxu0 %v1521
      %1584 = vmatprep.subr.bf16.mxu0 0
      %1585 = vmatpush2.bf16.msra.mxu0 %v1520
      %1586 = vmatprep.subr.bf16.mxu0 0
      %1587 = vmatpush2.bf16.msra.mxu0 %v1519
      %1588 = vmatprep.subr.bf16.mxu0 0
      %1589 = vmatpush2.bf16.msra.mxu0 %v1518
      %1590 = vmatprep.mubr.bf16.mxu0 %v1319
      %1591 = vmatmul.mubr.bf16.gmra.mxu0 %v1318
      %v1592 = vpop.f32.mrf.mxu0
      %v1593 = vadd.f32 %v1032, %v1592
      %v1594 = vpop.f32.mrf.mxu0
      %v1595 = vpop.f32.mrf.mxu0
      %v1596 = vadd.f32 %v1035, %v1595
      %v1597 = vpop.f32.mrf.mxu0
      %1598 = vmatprep.mubr.bf16.mxu0 %v1322
      %1599 = vmatmul.mubr.bf16.gmra.mxu0 %v1321
      %v1600 = vpop.f32.mrf.mxu0
      %v1601 = vadd.f32 %v1040, %v1600
      %v1602 = vpop.f32.mrf.mxu0
      %v1603 = vpop.f32.mrf.mxu0
      %v1604 = vadd.f32 %v1043, %v1603
      %v1605 = vpop.f32.mrf.mxu0
      %1606 = vmatprep.mubr.bf16.mxu0 %v1325
      %1607 = vmatmul.mubr.bf16.gmra.mxu0 %v1324
      %v1608 = vpop.f32.mrf.mxu0
      %v1609 = vadd.f32 %v1048, %v1608
      %v1610 = vpop.f32.mrf.mxu0
      %v1611 = vpop.f32.mrf.mxu0
      %v1612 = vadd.f32 %v1051, %v1611
      %v1613 = vpop.f32.mrf.mxu0
      %1614 = vmatprep.mubr.bf16.mxu0 %v1328
      %1615 = vmatmul.mubr.bf16.gmra.mxu0 %v1327
      %v1616 = vpop.f32.mrf.mxu0
      %v1617 = vadd.f32 %v1056, %v1616
      %v1618 = vpop.f32.mrf.mxu0
      %v1619 = vpop.f32.mrf.mxu0
      %v1620 = vadd.f32 %v1059, %v1619
      %v1621 = vpop.f32.mrf.mxu0
      %1622 = vmatprep.mubr.bf16.mxu0 %v1331
      %1623 = vmatmul.mubr.bf16.gmra.mxu0 %v1330
      %v1624 = vpop.f32.mrf.mxu0
      %v1625 = vadd.f32 %v1064, %v1624
      %v1626 = vpop.f32.mrf.mxu0
      %v1627 = vpop.f32.mrf.mxu0
      %v1628 = vadd.f32 %v1067, %v1627
      %v1629 = vpop.f32.mrf.mxu0
      %1630 = vmatprep.mubr.bf16.mxu0 %v1334
      %1631 = vmatmul.mubr.bf16.gmra.mxu0 %v1333
      %v1632 = vpop.f32.mrf.mxu0
      %v1633 = vadd.f32 %v1072, %v1632
      %v1634 = vpop.f32.mrf.mxu0
      %v1635 = vpop.f32.mrf.mxu0
      %v1636 = vadd.f32 %v1075, %v1635
      %v1637 = vpop.f32.mrf.mxu0
      %1638 = vmatprep.mubr.bf16.mxu0 %v1337
      %1639 = vmatmul.mubr.bf16.gmra.mxu0 %v1336
      %v1640 = vpop.f32.mrf.mxu0
      %v1641 = vadd.f32 %v1080, %v1640
      %v1642 = vpop.f32.mrf.mxu0
      %v1643 = vpop.f32.mrf.mxu0
      %v1644 = vadd.f32 %v1083, %v1643
      %v1645 = vpop.f32.mrf.mxu0
      %1646 = vmatprep.mubr.bf16.mxu0 %v1340
      %1647 = vmatmul.mubr.bf16.gmra.mxu0 %v1339
      %v1648 = vpop.f32.mrf.mxu0
      %v1649 = vadd.f32 %v1088, %v1648
      %v1650 = vpop.f32.mrf.mxu0
      %v1651 = vpop.f32.mrf.mxu0
      %v1652 = vadd.f32 %v1091, %v1651
      %v1653 = vpop.f32.mrf.mxu0
      %1654 = vmatprep.mubr.bf16.mxu0 %v1343
      %1655 = vmatmul.mubr.bf16.gmra.mxu0 %v1342
      %v1656 = vpop.f32.mrf.mxu0
      %v1657 = vadd.f32 %v1096, %v1656
      %v1658 = vpop.f32.mrf.mxu0
      %v1659 = vpop.f32.mrf.mxu0
      %v1660 = vadd.f32 %v1099, %v1659
      %v1661 = vpop.f32.mrf.mxu0
      %1662 = vmatprep.mubr.bf16.mxu0 %v1346
      %1663 = vmatmul.mubr.bf16.gmra.mxu0 %v1345
      %v1664 = vpop.f32.mrf.mxu0
      %v1665 = vadd.f32 %v1104, %v1664
      %v1666 = vpop.f32.mrf.mxu0
      %v1667 = vpop.f32.mrf.mxu0
      %v1668 = vadd.f32 %v1107, %v1667
      %v1669 = vpop.f32.mrf.mxu0
      %1670 = vmatprep.mubr.bf16.mxu0 %v1349
      %1671 = vmatmul.mubr.bf16.gmra.mxu0 %v1348
      %v1672 = vpop.f32.mrf.mxu0
      %v1673 = vadd.f32 %v1112, %v1672
      %v1674 = vpop.f32.mrf.mxu0
      %v1675 = vpop.f32.mrf.mxu0
      %v1676 = vadd.f32 %v1115, %v1675
      %v1677 = vpop.f32.mrf.mxu0
      %1678 = vmatprep.mubr.bf16.mxu0 %v1352
      %1679 = vmatmul.mubr.bf16.gmra.mxu0 %v1351
      %v1680 = vpop.f32.mrf.mxu0
      %v1681 = vadd.f32 %v1120, %v1680
      %v1682 = vpop.f32.mrf.mxu0
      %v1683 = vpop.f32.mrf.mxu0
      %v1684 = vadd.f32 %v1123, %v1683
      %v1685 = vpop.f32.mrf.mxu0
      %1686 = vmatprep.mubr.bf16.mxu0 %v1355
      %1687 = vmatmul.mubr.bf16.gmra.mxu0 %v1354
      %v1688 = vpop.f32.mrf.mxu0
      %v1689 = vadd.f32 %v1128, %v1688
      %v1690 = vpop.f32.mrf.mxu0
      %v1691 = vpop.f32.mrf.mxu0
      %v1692 = vadd.f32 %v1131, %v1691
      %v1693 = vpop.f32.mrf.mxu0
      %1694 = vmatprep.mubr.bf16.mxu0 %v1358
      %1695 = vmatmul.mubr.bf16.gmra.mxu0 %v1357
      %v1696 = vpop.f32.mrf.mxu0
      %v1697 = vadd.f32 %v1136, %v1696
      %v1698 = vpop.f32.mrf.mxu0
      %v1699 = vpop.f32.mrf.mxu0
      %v1700 = vadd.f32 %v1139, %v1699
      %v1701 = vpop.f32.mrf.mxu0
      %1702 = vmatprep.mubr.bf16.mxu0 %v1361
      %1703 = vmatmul.mubr.bf16.gmra.mxu0 %v1360
      %v1704 = vpop.f32.mrf.mxu0
      %v1705 = vadd.f32 %v1144, %v1704
      %v1706 = vpop.f32.mrf.mxu0
      %v1707 = vpop.f32.mrf.mxu0
      %v1708 = vadd.f32 %v1147, %v1707
      %v1709 = vpop.f32.mrf.mxu0
      %1710 = vmatprep.mubr.bf16.mxu0 %v1364
      %1711 = vmatmul.mubr.bf16.gmra.mxu0 %v1363
      %v1712 = vpop.f32.mrf.mxu0
      %v1713 = vadd.f32 %v1152, %v1712
      %v1714 = vpop.f32.mrf.mxu0
      %v1715 = vpop.f32.mrf.mxu0
      %v1716 = vadd.f32 %v1155, %v1715
      %v1717 = vpop.f32.mrf.mxu0
      %1718 = vdwg.mxu0
      %1719 = vmatprep.subr.bf16.mxu0 0
      %1720 = vmatpush1.bf16.msra.mxu0 %v1533
      %1721 = vmatprep.subr.bf16.mxu0 0
      %1722 = vmatpush1.bf16.msra.mxu0 %v1532
      %1723 = vmatprep.subr.bf16.mxu0 0
      %1724 = vmatpush1.bf16.msra.mxu0 %v1531
      %1725 = vmatprep.subr.bf16.mxu0 0
      %1726 = vmatpush1.bf16.msra.mxu0 %v1530
      %1727 = vmatprep.subr.bf16.mxu0 0
      %1728 = vmatpush1.bf16.msra.mxu0 %v1529
      %1729 = vmatprep.subr.bf16.mxu0 0
      %1730 = vmatpush1.bf16.msra.mxu0 %v1528
      %1731 = vmatprep.subr.bf16.mxu0 0
      %1732 = vmatpush1.bf16.msra.mxu0 %v1527
      %1733 = vmatprep.subr.bf16.mxu0 0
      %1734 = vmatpush1.bf16.msra.mxu0 %v1526
      %1735 = vmatprep.subr.bf16.mxu0 0
      %1736 = vmatpush2.bf16.msra.mxu0 0
      %1737 = vmatprep.subr.bf16.mxu0 0
      %1738 = vmatpush2.bf16.msra.mxu0 0
      %1739 = vmatprep.subr.bf16.mxu0 0
      %1740 = vmatpush2.bf16.msra.mxu0 0
      %1741 = vmatprep.subr.bf16.mxu0 0
      %1742 = vmatpush2.bf16.msra.mxu0 0
      %1743 = vmatprep.subr.bf16.mxu0 0
      %1744 = vmatpush2.bf16.msra.mxu0 0
      %1745 = vmatprep.subr.bf16.mxu0 0
      %1746 = vmatpush2.bf16.msra.mxu0 0
      %1747 = vmatprep.subr.bf16.mxu0 0
      %1748 = vmatpush2.bf16.msra.mxu0 0
      %1749 = vmatprep.subr.bf16.mxu0 0
      %1750 = vmatpush2.bf16.msra.mxu0 0
      %1751 = vmatprep.mubr.bf16.mxu0 0
      %1752 = vmatmul.mubr.bf16.gmra.mxu0 %v1320
      %v1753 = vpop.f32.mrf.mxu0
      %v1754 = vadd.f32 %v1593, %v1753
      %v1755 = vpop.f32.mrf.mxu0
      %v1756 = vpop.f32.mrf.mxu0
      %v1757 = vadd.f32 %v1596, %v1756
      %v1758 = vpop.f32.mrf.mxu0
      %1759 = vmatprep.mubr.bf16.mxu0 0
      %1760 = vmatmul.mubr.bf16.gmra.mxu0 %v1323
      %v1761 = vpop.f32.mrf.mxu0
      %v1762 = vadd.f32 %v1601, %v1761
      %v1763 = vpop.f32.mrf.mxu0
      %v1764 = vpop.f32.mrf.mxu0
      %v1765 = vadd.f32 %v1604, %v1764
      %v1766 = vpop.f32.mrf.mxu0
      %1767 = vmatprep.mubr.bf16.mxu0 0
      %1768 = vmatmul.mubr.bf16.gmra.mxu0 %v1326
      %v1769 = vpop.f32.mrf.mxu0
      %v1770 = vadd.f32 %v1609, %v1769
      %v1771 = vpop.f32.mrf.mxu0
      %v1772 = vpop.f32.mrf.mxu0
      %v1773 = vadd.f32 %v1612, %v1772
      %v1774 = vpop.f32.mrf.mxu0
      %1775 = vmatprep.mubr.bf16.mxu0 0
      %1776 = vmatmul.mubr.bf16.gmra.mxu0 %v1329
      %v1777 = vpop.f32.mrf.mxu0
      %v1778 = vadd.f32 %v1617, %v1777
      %v1779 = vpop.f32.mrf.mxu0
      %v1780 = vpop.f32.mrf.mxu0
      %v1781 = vadd.f32 %v1620, %v1780
      %v1782 = vpop.f32.mrf.mxu0
      %1783 = vmatprep.mubr.bf16.mxu0 0
      %1784 = vmatmul.mubr.bf16.gmra.mxu0 %v1332
      %v1785 = vpop.f32.mrf.mxu0
      %v1786 = vadd.f32 %v1625, %v1785
      %v1787 = vpop.f32.mrf.mxu0
      %v1788 = vpop.f32.mrf.mxu0
      %v1789 = vadd.f32 %v1628, %v1788
      %v1790 = vpop.f32.mrf.mxu0
      %1791 = vmatprep.mubr.bf16.mxu0 0
      %1792 = vmatmul.mubr.bf16.gmra.mxu0 %v1335
      %v1793 = vpop.f32.mrf.mxu0
      %v1794 = vadd.f32 %v1633, %v1793
      %v1795 = vpop.f32.mrf.mxu0
      %v1796 = vpop.f32.mrf.mxu0
      %v1797 = vadd.f32 %v1636, %v1796
      %v1798 = vpop.f32.mrf.mxu0
      %1799 = vmatprep.mubr.bf16.mxu0 0
      %1800 = vmatmul.mubr.bf16.gmra.mxu0 %v1338
      %v1801 = vpop.f32.mrf.mxu0
      %v1802 = vadd.f32 %v1641, %v1801
      %v1803 = vpop.f32.mrf.mxu0
      %v1804 = vpop.f32.mrf.mxu0
      %v1805 = vadd.f32 %v1644, %v1804
      %v1806 = vpop.f32.mrf.mxu0
      %1807 = vmatprep.mubr.bf16.mxu0 0
      %1808 = vmatmul.mubr.bf16.gmra.mxu0 %v1341
      %v1809 = vpop.f32.mrf.mxu0
      %v1810 = vadd.f32 %v1649, %v1809
      %v1811 = vpop.f32.mrf.mxu0
      %v1812 = vpop.f32.mrf.mxu0
      %v1813 = vadd.f32 %v1652, %v1812
      %v1814 = vpop.f32.mrf.mxu0
      %1815 = vmatprep.mubr.bf16.mxu0 0
      %1816 = vmatmul.mubr.bf16.gmra.mxu0 %v1344
      %v1817 = vpop.f32.mrf.mxu0
      %v1818 = vadd.f32 %v1657, %v1817
      %v1819 = vpop.f32.mrf.mxu0
      %v1820 = vpop.f32.mrf.mxu0
      %v1821 = vadd.f32 %v1660, %v1820
      %v1822 = vpop.f32.mrf.mxu0
      %1823 = vmatprep.mubr.bf16.mxu0 0
      %1824 = vmatmul.mubr.bf16.gmra.mxu0 %v1347
      %v1825 = vpop.f32.mrf.mxu0
      %v1826 = vadd.f32 %v1665, %v1825
      %v1827 = vpop.f32.mrf.mxu0
      %v1828 = vpop.f32.mrf.mxu0
      %v1829 = vadd.f32 %v1668, %v1828
      %v1830 = vpop.f32.mrf.mxu0
      %1831 = vmatprep.mubr.bf16.mxu0 0
      %1832 = vmatmul.mubr.bf16.gmra.mxu0 %v1350
      %v1833 = vpop.f32.mrf.mxu0
      %v1834 = vadd.f32 %v1673, %v1833
      %v1835 = vpop.f32.mrf.mxu0
      %v1836 = vpop.f32.mrf.mxu0
      %v1837 = vadd.f32 %v1676, %v1836
      %v1838 = vpop.f32.mrf.mxu0
      %1839 = vmatprep.mubr.bf16.mxu0 0
      %1840 = vmatmul.mubr.bf16.gmra.mxu0 %v1353
      %v1841 = vpop.f32.mrf.mxu0
      %v1842 = vadd.f32 %v1681, %v1841
      %v1843 = vpop.f32.mrf.mxu0
      %v1844 = vpop.f32.mrf.mxu0
      %v1845 = vadd.f32 %v1684, %v1844
      %v1846 = vpop.f32.mrf.mxu0
      %1847 = vmatprep.mubr.bf16.mxu0 0
      %1848 = vmatmul.mubr.bf16.gmra.mxu0 %v1356
      %v1849 = vpop.f32.mrf.mxu0
      %v1850 = vadd.f32 %v1689, %v1849
      %v1851 = vpop.f32.mrf.mxu0
      %v1852 = vpop.f32.mrf.mxu0
      %v1853 = vadd.f32 %v1692, %v1852
      %v1854 = vpop.f32.mrf.mxu0
      %1855 = vmatprep.mubr.bf16.mxu0 0
      %1856 = vmatmul.mubr.bf16.gmra.mxu0 %v1359
      %v1857 = vpop.f32.mrf.mxu0
      %v1858 = vadd.f32 %v1697, %v1857
      %v1859 = vpop.f32.mrf.mxu0
      %v1860 = vpop.f32.mrf.mxu0
      %v1861 = vadd.f32 %v1700, %v1860
      %v1862 = vpop.f32.mrf.mxu0
      %1863 = vmatprep.mubr.bf16.mxu0 0
      %1864 = vmatmul.mubr.bf16.gmra.mxu0 %v1362
      %v1865 = vpop.f32.mrf.mxu0
      %v1866 = vadd.f32 %v1705, %v1865
      %v1867 = vpop.f32.mrf.mxu0
      %v1868 = vpop.f32.mrf.mxu0
      %v1869 = vadd.f32 %v1708, %v1868
      %v1870 = vpop.f32.mrf.mxu0
      %1871 = vmatprep.mubr.bf16.mxu0 0
      %1872 = vmatmul.mubr.bf16.gmra.mxu0 %v1365
      %v1873 = vpop.f32.mrf.mxu0
      %v1874 = vadd.f32 %v1713, %v1873
      %v1875 = vpop.f32.mrf.mxu0
      %v1876 = vpop.f32.mrf.mxu0
      %v1877 = vadd.f32 %v1716, %v1876
      %v1878 = vpop.f32.mrf.mxu0
      %1879 = vdwg.mxu0
      %s1880 = scalar_lea.vmem %s199, 48
      %v1881 = vld [vmem:[%s1880] sm:$0xff]
      %v1882 = vld [vmem:[%s1880 + $0x8] sm:$0xf]
      %v1883 = vld [vmem:[%s1880 + $0xc] sm:$0xff]
      %v1884 = vld [vmem:[%s1880 + $0x14] sm:$0xf]
      %v1885 = vld [vmem:[%s1880 + $0x18] sm:$0xff]
      %v1886 = vld [vmem:[%s1880 + $0x20] sm:$0xf]
      %v1887 = vld [vmem:[%s1880 + $0x24] sm:$0xff]
      %v1888 = vld [vmem:[%s1880 + $0x2c] sm:$0xf]
      %v1889 = vld [vmem:[%s1880 + $0x30] sm:$0xff]
      %v1890 = vld [vmem:[%s1880 + $0x38] sm:$0xf]
      %v1891 = vld [vmem:[%s1880 + $0x3c] sm:$0xff]
      %v1892 = vld [vmem:[%s1880 + $0x44] sm:$0xf]
      %v1893 = vld [vmem:[%s1880 + $0x48] sm:$0xff]
      %v1894 = vld [vmem:[%s1880 + $0x50] sm:$0xf]
      %v1895 = vld [vmem:[%s1880 + $0x54] sm:$0xff]
      %v1896 = vld [vmem:[%s1880 + $0x5c] sm:$0xf]
      %v1897 = vld [vmem:[%s1880 + $0x60] sm:$0xff]
      %v1898 = vld [vmem:[%s1880 + $0x68] sm:$0xf]
      %v1899 = vld [vmem:[%s1880 + $0x6c] sm:$0xff]
      %v1900 = vld [vmem:[%s1880 + $0x74] sm:$0xf]
      %v1901 = vld [vmem:[%s1880 + $0x78] sm:$0xff]
      %v1902 = vld [vmem:[%s1880 + $0x80] sm:$0xf]
      %v1903 = vld [vmem:[%s1880 + $0x84] sm:$0xff]
      %v1904 = vld [vmem:[%s1880 + $0x8c] sm:$0xf]
      %v1905 = vld [vmem:[%s1880 + $0x90] sm:$0xff]
      %v1906 = vld [vmem:[%s1880 + $0x98] sm:$0xf]
      %v1907 = vld [vmem:[%s1880 + $0x9c] sm:$0xff]
      %v1908 = vld [vmem:[%s1880 + $0xa4] sm:$0xf]
      %v1909 = vld [vmem:[%s1880 + $0xa8] sm:$0xff]
      %v1910 = vld [vmem:[%s1880 + $0xb0] sm:$0xf]
      %v1911 = vld [vmem:[%s1880 + $0xb4] sm:$0xff]
      %v1912 = vld [vmem:[%s1880 + $0xbc] sm:$0xf]
      %v1913 = vld [vmem:[%s1880 + $0xc0] sm:$0xff]
      %v1914 = vld [vmem:[%s1880 + $0xc8] sm:$0xf]
      %v1915 = vld [vmem:[%s1880 + $0xcc] sm:$0xff]
      %v1916 = vld [vmem:[%s1880 + $0xd4] sm:$0xf]
      %v1917 = vld [vmem:[%s1880 + $0xd8] sm:$0xff]
      %v1918 = vld [vmem:[%s1880 + $0xe0] sm:$0xf]
      %v1919 = vld [vmem:[%s1880 + $0xe4] sm:$0xff]
      %v1920 = vld [vmem:[%s1880 + $0xec] sm:$0xf]
      %v1921 = vld [vmem:[%s1880 + $0xf0] sm:$0xff]
      %v1922 = vld [vmem:[%s1880 + $0xf8] sm:$0xf]
      %v1923 = vld [vmem:[%s1880 + $0xfc] sm:$0xff]
      %v1924 = vld [vmem:[%s1880 + $0x104] sm:$0xf]
      %v1925 = vld [vmem:[%s1880 + $0x108] sm:$0xff]
      %v1926 = vld [vmem:[%s1880 + $0x110] sm:$0xf]
      %v1927 = vld [vmem:[%s1880 + $0x114] sm:$0xff]
      %v1928 = vld [vmem:[%s1880 + $0x11c] sm:$0xf]
      %v1929 = vld [vmem:[%s1880 + $0x120] sm:$0xff]
      %v1930 = vld [vmem:[%s1880 + $0x128] sm:$0xf]
      %v1931 = vld [vmem:[%s1880 + $0x12c] sm:$0xff]
      %v1932 = vld [vmem:[%s1880 + $0x134] sm:$0xf]
      %v1933 = vld [vmem:[%s1880 + $0x138] sm:$0xff]
      %v1934 = vld [vmem:[%s1880 + $0x140] sm:$0xf]
      %v1935 = vld [vmem:[%s1880 + $0x144] sm:$0xff]
      %v1936 = vld [vmem:[%s1880 + $0x14c] sm:$0xf]
      %v1937 = vld [vmem:[%s1880 + $0x150] sm:$0xff]
      %v1938 = vld [vmem:[%s1880 + $0x158] sm:$0xf]
      %v1939 = vld [vmem:[%s1880 + $0x15c] sm:$0xff]
      %v1940 = vld [vmem:[%s1880 + $0x164] sm:$0xf]
      %v1941 = vld [vmem:[%s1880 + $0x168] sm:$0xff]
      %v1942 = vld [vmem:[%s1880 + $0x170] sm:$0xf]
      %v1943 = vld [vmem:[%s1880 + $0x174] sm:$0xff]
      %v1944 = vld [vmem:[%s1880 + $0x17c] sm:$0xf]
      %s1945 = scalar_lea.vmem %s1, 384
      %v1946 = vld [vmem:[%s1945] sm:$0xf]
      %v1947 = vld [vmem:[%s1945 + $0x4] sm:$0xf]
      %v1948 = vld [vmem:[%s1945 + $0x8] sm:$0xf]
      %v1949 = vld [vmem:[%s1945 + $0xc] sm:$0xf]
      %v1950 = vld [vmem:[%s1945 + $0x10] sm:$0xf]
      %v1951 = vld [vmem:[%s1945 + $0x14] sm:$0xf]
      %v1952 = vld [vmem:[%s1945 + $0x18] sm:$0xf]
      %v1953 = vld [vmem:[%s1945 + $0x1c] sm:$0xf]
      %v1954 = vld [vmem:[%s1945 + $0x20] sm:$0xf]
      %v1955 = vld [vmem:[%s1945 + $0x24] sm:$0xf]
      %v1956 = vld [vmem:[%s1945 + $0x28] sm:$0xf]
      %v1957 = vld [vmem:[%s1945 + $0x2c] sm:$0xf]
      %v1958 = vld [vmem:[%s1945 + $0x30] sm:$0xf]
      %v1959 = vld [vmem:[%s1945 + $0x34] sm:$0xf]
      %v1960 = vld [vmem:[%s1945 + $0x38] sm:$0xf]
      %v1961 = vld [vmem:[%s1945 + $0x3c] sm:$0xf]
      %v1962 = vld [vmem:[%s1945 + $0x40] sm:$0xf]
      %v1963 = vld [vmem:[%s1945 + $0x44] sm:$0xf]
      %v1964 = vld [vmem:[%s1945 + $0x48] sm:$0xf]
      %v1965 = vld [vmem:[%s1945 + $0x4c] sm:$0xf]
      %v1966 = vld [vmem:[%s1945 + $0x50] sm:$0xf]
      %v1967 = vld [vmem:[%s1945 + $0x54] sm:$0xf]
      %v1968 = vld [vmem:[%s1945 + $0x58] sm:$0xf]
      %v1969 = vld [vmem:[%s1945 + $0x5c] sm:$0xf]
      %v1970 = vld [vmem:[%s1945 + $0x60] sm:$0xf]
      %v1971 = vld [vmem:[%s1945 + $0x64] sm:$0xf]
      %v1972 = vld [vmem:[%s1945 + $0x68] sm:$0xf]
      %v1973 = vld [vmem:[%s1945 + $0x6c] sm:$0xf]
      %v1974 = vld [vmem:[%s1945 + $0x70] sm:$0xf]
      %v1975 = vld [vmem:[%s1945 + $0x74] sm:$0xf]
      %v1976 = vld [vmem:[%s1945 + $0x78] sm:$0xf]
      %v1977 = vld [vmem:[%s1945 + $0x7c] sm:$0xf]
      %v1978 = vld [vmem:[%s1945 + $0x80] sm:$0xf]
      %v1979 = vld [vmem:[%s1945 + $0x84] sm:$0xf]
      %v1980 = vld [vmem:[%s1945 + $0x88] sm:$0xf]
      %v1981 = vld [vmem:[%s1945 + $0x8c] sm:$0xf]
      %v1982 = vld [vmem:[%s1945 + $0x90] sm:$0xf]
      %v1983 = vld [vmem:[%s1945 + $0x94] sm:$0xf]
      %v1984 = vld [vmem:[%s1945 + $0x98] sm:$0xf]
      %v1985 = vld [vmem:[%s1945 + $0x9c] sm:$0xf]
      %v1986 = vld [vmem:[%s1945 + $0xa0] sm:$0xf]
      %v1987 = vld [vmem:[%s1945 + $0xa4] sm:$0xf]
      %v1988 = vld [vmem:[%s1945 + $0xa8] sm:$0xf]
      %v1989 = vld [vmem:[%s1945 + $0xac] sm:$0xf]
      %v1990 = vld [vmem:[%s1945 + $0xb0] sm:$0xf]
      %v1991 = vld [vmem:[%s1945 + $0xb4] sm:$0xf]
      %v1992 = vld [vmem:[%s1945 + $0xb8] sm:$0xf]
      %v1993 = vld [vmem:[%s1945 + $0xbc] sm:$0xf]
      %v2058 = vunpack.c.l.b16 %v1881
      %v2059 = vunpack.c.h.b16 %v1881
      %v2060 = vunpack.c.l.b16 %v1882
      %v2061 = vunpack.c.l.b16 %v1883
      %v2062 = vunpack.c.h.b16 %v1883
      %v2063 = vunpack.c.l.b16 %v1884
      %v2064 = vunpack.c.l.b16 %v1885
      %v2065 = vunpack.c.h.b16 %v1885
      %v2066 = vunpack.c.l.b16 %v1886
      %v2067 = vunpack.c.l.b16 %v1887
      %v2068 = vunpack.c.h.b16 %v1887
      %v2069 = vunpack.c.l.b16 %v1888
      %v2070 = vunpack.c.l.b16 %v1889
      %v2071 = vunpack.c.h.b16 %v1889
      %v2072 = vunpack.c.l.b16 %v1890
      %v2073 = vunpack.c.l.b16 %v1891
      %v2074 = vunpack.c.h.b16 %v1891
      %v2075 = vunpack.c.l.b16 %v1892
      %v2076 = vunpack.c.l.b16 %v1893
      %v2077 = vunpack.c.h.b16 %v1893
      %v2078 = vunpack.c.l.b16 %v1894
      %v2079 = vunpack.c.l.b16 %v1895
      %v2080 = vunpack.c.h.b16 %v1895
      %v2081 = vunpack.c.l.b16 %v1896
      %v2082 = vunpack.c.l.b16 %v1897
      %v2083 = vunpack.c.h.b16 %v1897
      %v2084 = vunpack.c.l.b16 %v1898
      %v2085 = vunpack.c.l.b16 %v1899
      %v2086 = vunpack.c.h.b16 %v1899
      %v2087 = vunpack.c.l.b16 %v1900
      %v2088 = vunpack.c.l.b16 %v1901
      %v2089 = vunpack.c.h.b16 %v1901
      %v2090 = vunpack.c.l.b16 %v1902
      %v2091 = vunpack.c.l.b16 %v1903
      %v2092 = vunpack.c.h.b16 %v1903
      %v2093 = vunpack.c.l.b16 %v1904
      %v2094 = vunpack.c.l.b16 %v1905
      %v2095 = vunpack.c.h.b16 %v1905
      %v2096 = vunpack.c.l.b16 %v1906
      %v2097 = vunpack.c.l.b16 %v1907
      %v2098 = vunpack.c.h.b16 %v1907
      %v2099 = vunpack.c.l.b16 %v1908
      %v2100 = vunpack.c.l.b16 %v1909
      %v2101 = vunpack.c.h.b16 %v1909
      %v2102 = vunpack.c.l.b16 %v1910
      %v2103 = vunpack.c.l.b16 %v1911
      %v2104 = vunpack.c.h.b16 %v1911
      %v2105 = vunpack.c.l.b16 %v1912
      %v2106 = vunpack.c.l.b16 %v1913
      %v2107 = vunpack.c.h.b16 %v1913
      %v2108 = vunpack.c.l.b16 %v1914
      %v2109 = vunpack.c.l.b16 %v1915
      %v2110 = vunpack.c.h.b16 %v1915
      %v2111 = vunpack.c.l.b16 %v1916
      %v2112 = vunpack.c.l.b16 %v1917
      %v2113 = vunpack.c.h.b16 %v1917
      %v2114 = vunpack.c.l.b16 %v1918
      %v2115 = vunpack.c.l.b16 %v1919
      %v2116 = vunpack.c.h.b16 %v1919
      %v2117 = vunpack.c.l.b16 %v1920
      %v2118 = vunpack.c.l.b16 %v1921
      %v2119 = vunpack.c.h.b16 %v1921
      %v2120 = vunpack.c.l.b16 %v1922
      %v2121 = vunpack.c.l.b16 %v1923
      %v2122 = vunpack.c.h.b16 %v1923
      %v2123 = vunpack.c.l.b16 %v1924
      %v2124 = vunpack.c.l.b16 %v1925
      %v2125 = vunpack.c.h.b16 %v1925
      %v2126 = vunpack.c.l.b16 %v1926
      %v2127 = vunpack.c.l.b16 %v1927
      %v2128 = vunpack.c.h.b16 %v1927
      %v2129 = vunpack.c.l.b16 %v1928
      %v2130 = vunpack.c.l.b16 %v1929
      %v2131 = vunpack.c.h.b16 %v1929
      %v2132 = vunpack.c.l.b16 %v1930
      %v2133 = vunpack.c.l.b16 %v1931
      %v2134 = vunpack.c.h.b16 %v1931
      %v2135 = vunpack.c.l.b16 %v1932
      %v2136 = vunpack.c.l.b16 %v1933
      %v2137 = vunpack.c.h.b16 %v1933
      %v2138 = vunpack.c.l.b16 %v1934
      %v2139 = vunpack.c.l.b16 %v1935
      %v2140 = vunpack.c.h.b16 %v1935
      %v2141 = vunpack.c.l.b16 %v1936
      %v2142 = vunpack.c.l.b16 %v1937
      %v2143 = vunpack.c.h.b16 %v1937
      %v2144 = vunpack.c.l.b16 %v1938
      %v2145 = vunpack.c.l.b16 %v1939
      %v2146 = vunpack.c.h.b16 %v1939
      %v2147 = vunpack.c.l.b16 %v1940
      %v2148 = vunpack.c.l.b16 %v1941
      %v2149 = vunpack.c.h.b16 %v1941
      %v2150 = vunpack.c.l.b16 %v1942
      %v2151 = vunpack.c.l.b16 %v1943
      %v2152 = vunpack.c.h.b16 %v1943
      %v2153 = vunpack.c.l.b16 %v1944
      %v2154 = vpack.c.b16 %v2061, %v2058
      %v2155 = vpack.c.b16 %v2062, %v2059
      %v2156 = vpack.c.b16 %v2063, %v2060
      %v2157 = vpack.c.b16 %v2067, %v2064
      %v2158 = vpack.c.b16 %v2068, %v2065
      %v2159 = vpack.c.b16 %v2069, %v2066
      %v2160 = vpack.c.b16 %v2073, %v2070
      %v2161 = vpack.c.b16 %v2074, %v2071
      %v2162 = vpack.c.b16 %v2075, %v2072
      %v2163 = vpack.c.b16 %v2079, %v2076
      %v2164 = vpack.c.b16 %v2080, %v2077
      %v2165 = vpack.c.b16 %v2081, %v2078
      %v2166 = vpack.c.b16 %v2085, %v2082
      %v2167 = vpack.c.b16 %v2086, %v2083
      %v2168 = vpack.c.b16 %v2087, %v2084
      %v2169 = vpack.c.b16 %v2091, %v2088
      %v2170 = vpack.c.b16 %v2092, %v2089
      %v2171 = vpack.c.b16 %v2093, %v2090
      %v2172 = vpack.c.b16 %v2097, %v2094
      %v2173 = vpack.c.b16 %v2098, %v2095
      %v2174 = vpack.c.b16 %v2099, %v2096
      %v2175 = vpack.c.b16 %v2103, %v2100
      %v2176 = vpack.c.b16 %v2104, %v2101
      %v2177 = vpack.c.b16 %v2105, %v2102
      %v2178 = vpack.c.b16 %v2109, %v2106
      %v2179 = vpack.c.b16 %v2110, %v2107
      %v2180 = vpack.c.b16 %v2111, %v2108
      %v2181 = vpack.c.b16 %v2115, %v2112
      %v2182 = vpack.c.b16 %v2116, %v2113
      %v2183 = vpack.c.b16 %v2117, %v2114
      %v2184 = vpack.c.b16 %v2121, %v2118
      %v2185 = vpack.c.b16 %v2122, %v2119
      %v2186 = vpack.c.b16 %v2123, %v2120
      %v2187 = vpack.c.b16 %v2127, %v2124
      %v2188 = vpack.c.b16 %v2128, %v2125
      %v2189 = vpack.c.b16 %v2129, %v2126
      %v2190 = vpack.c.b16 %v2133, %v2130
      %v2191 = vpack.c.b16 %v2134, %v2131
      %v2192 = vpack.c.b16 %v2135, %v2132
      %v2193 = vpack.c.b16 %v2139, %v2136
      %v2194 = vpack.c.b16 %v2140, %v2137
      %v2195 = vpack.c.b16 %v2141, %v2138
      %v2196 = vpack.c.b16 %v2145, %v2142
      %v2197 = vpack.c.b16 %v2146, %v2143
      %v2198 = vpack.c.b16 %v2147, %v2144
      %v2199 = vpack.c.b16 %v2151, %v2148
      %v2200 = vpack.c.b16 %v2152, %v2149
      %v2201 = vpack.c.b16 %v2153, %v2150
      %v2298 = vunpack.c.l.b16 %v1946
      %v2299 = vunpack.c.l.b16 %v1947
      %v2300 = vunpack.c.l.b16 %v1948
      %v2301 = vunpack.c.l.b16 %v1949
      %v2302 = vunpack.c.l.b16 %v1950
      %v2303 = vunpack.c.l.b16 %v1951
      %v2304 = vunpack.c.l.b16 %v1952
      %v2305 = vunpack.c.l.b16 %v1953
      %v2306 = vunpack.c.l.b16 %v1954
      %v2307 = vunpack.c.l.b16 %v1955
      %v2308 = vunpack.c.l.b16 %v1956
      %v2309 = vunpack.c.l.b16 %v1957
      %v2310 = vunpack.c.l.b16 %v1958
      %v2311 = vunpack.c.l.b16 %v1959
      %v2312 = vunpack.c.l.b16 %v1960
      %v2313 = vunpack.c.l.b16 %v1961
      %v2314 = vunpack.c.l.b16 %v1962
      %v2315 = vunpack.c.l.b16 %v1963
      %v2316 = vunpack.c.l.b16 %v1964
      %v2317 = vunpack.c.l.b16 %v1965
      %v2318 = vunpack.c.l.b16 %v1966
      %v2319 = vunpack.c.l.b16 %v1967
      %v2320 = vunpack.c.l.b16 %v1968
      %v2321 = vunpack.c.l.b16 %v1969
      %v2322 = vunpack.c.l.b16 %v1970
      %v2323 = vunpack.c.l.b16 %v1971
      %v2324 = vunpack.c.l.b16 %v1972
      %v2325 = vunpack.c.l.b16 %v1973
      %v2326 = vunpack.c.l.b16 %v1974
      %v2327 = vunpack.c.l.b16 %v1975
      %v2328 = vunpack.c.l.b16 %v1976
      %v2329 = vunpack.c.l.b16 %v1977
      %v2330 = vunpack.c.l.b16 %v1978
      %v2331 = vunpack.c.l.b16 %v1979
      %v2332 = vunpack.c.l.b16 %v1980
      %v2333 = vunpack.c.l.b16 %v1981
      %v2334 = vunpack.c.l.b16 %v1982
      %v2335 = vunpack.c.l.b16 %v1983
      %v2336 = vunpack.c.l.b16 %v1984
      %v2337 = vunpack.c.l.b16 %v1985
      %v2338 = vunpack.c.l.b16 %v1986
      %v2339 = vunpack.c.l.b16 %v1987
      %v2340 = vunpack.c.l.b16 %v1988
      %v2341 = vunpack.c.l.b16 %v1989
      %v2342 = vunpack.c.l.b16 %v1990
      %v2343 = vunpack.c.l.b16 %v1991
      %v2344 = vunpack.c.l.b16 %v1992
      %v2345 = vunpack.c.l.b16 %v1993
      %v2346 = vpack.c.b16 %v2299, %v2298
      %v2347 = vpack.c.b16 %v2301, %v2300
      %v2348 = vpack.c.b16 %v2303, %v2302
      %v2349 = vpack.c.b16 %v2305, %v2304
      %v2350 = vpack.c.b16 %v2307, %v2306
      %v2351 = vpack.c.b16 %v2309, %v2308
      %v2352 = vpack.c.b16 %v2311, %v2310
      %v2353 = vpack.c.b16 %v2313, %v2312
      %v2354 = vpack.c.b16 %v2315, %v2314
      %v2355 = vpack.c.b16 %v2317, %v2316
      %v2356 = vpack.c.b16 %v2319, %v2318
      %v2357 = vpack.c.b16 %v2321, %v2320
      %v2358 = vpack.c.b16 %v2323, %v2322
      %v2359 = vpack.c.b16 %v2325, %v2324
      %v2360 = vpack.c.b16 %v2327, %v2326
      %v2361 = vpack.c.b16 %v2329, %v2328
      %v2362 = vpack.c.b16 %v2331, %v2330
      %v2363 = vpack.c.b16 %v2333, %v2332
      %v2364 = vpack.c.b16 %v2335, %v2334
      %v2365 = vpack.c.b16 %v2337, %v2336
      %v2366 = vpack.c.b16 %v2339, %v2338
      %v2367 = vpack.c.b16 %v2341, %v2340
      %v2368 = vpack.c.b16 %v2343, %v2342
      %v2369 = vpack.c.b16 %v2345, %v2344
      %2394 = vmatprep.subr.bf16.mxu0 0
      %2395 = vmatpush1.bf16.msra.mxu0 %v2353
      %2396 = vmatprep.subr.bf16.mxu0 0
      %2397 = vmatpush1.bf16.msra.mxu0 %v2352
      %2398 = vmatprep.subr.bf16.mxu0 0
      %2399 = vmatpush1.bf16.msra.mxu0 %v2351
      %2400 = vmatprep.subr.bf16.mxu0 0
      %2401 = vmatpush1.bf16.msra.mxu0 %v2350
      %2402 = vmatprep.subr.bf16.mxu0 0
      %2403 = vmatpush1.bf16.msra.mxu0 %v2349
      %2404 = vmatprep.subr.bf16.mxu0 0
      %2405 = vmatpush1.bf16.msra.mxu0 %v2348
      %2406 = vmatprep.subr.bf16.mxu0 0
      %2407 = vmatpush1.bf16.msra.mxu0 %v2347
      %2408 = vmatprep.subr.bf16.mxu0 0
      %2409 = vmatpush1.bf16.msra.mxu0 %v2346
      %2410 = vmatprep.subr.bf16.mxu0 0
      %2411 = vmatpush2.bf16.msra.mxu0 %v2361
      %2412 = vmatprep.subr.bf16.mxu0 0
      %2413 = vmatpush2.bf16.msra.mxu0 %v2360
      %2414 = vmatprep.subr.bf16.mxu0 0
      %2415 = vmatpush2.bf16.msra.mxu0 %v2359
      %2416 = vmatprep.subr.bf16.mxu0 0
      %2417 = vmatpush2.bf16.msra.mxu0 %v2358
      %2418 = vmatprep.subr.bf16.mxu0 0
      %2419 = vmatpush2.bf16.msra.mxu0 %v2357
      %2420 = vmatprep.subr.bf16.mxu0 0
      %2421 = vmatpush2.bf16.msra.mxu0 %v2356
      %2422 = vmatprep.subr.bf16.mxu0 0
      %2423 = vmatpush2.bf16.msra.mxu0 %v2355
      %2424 = vmatprep.subr.bf16.mxu0 0
      %2425 = vmatpush2.bf16.msra.mxu0 %v2354
      %2426 = vmatprep.mubr.bf16.mxu0 %v2155
      %2427 = vmatmul.mubr.bf16.gmra.mxu0 %v2154
      %v2428 = vpop.f32.mrf.mxu0
      %v2429 = vadd.f32 0.0, %v2428
      %v2430 = vpop.f32.mrf.mxu0
      %v2431 = vpop.f32.mrf.mxu0
      %v2432 = vadd.f32 0.0, %v2431
      %v2433 = vpop.f32.mrf.mxu0
      %2434 = vmatprep.mubr.bf16.mxu0 %v2158
      %2435 = vmatmul.mubr.bf16.gmra.mxu0 %v2157
      %v2436 = vpop.f32.mrf.mxu0
      %v2437 = vadd.f32 0.0, %v2436
      %v2438 = vpop.f32.mrf.mxu0
      %v2439 = vpop.f32.mrf.mxu0
      %v2440 = vadd.f32 0.0, %v2439
      %v2441 = vpop.f32.mrf.mxu0
      %2442 = vmatprep.mubr.bf16.mxu0 %v2161
      %2443 = vmatmul.mubr.bf16.gmra.mxu0 %v2160
      %v2444 = vpop.f32.mrf.mxu0
      %v2445 = vadd.f32 0.0, %v2444
      %v2446 = vpop.f32.mrf.mxu0
      %v2447 = vpop.f32.mrf.mxu0
      %v2448 = vadd.f32 0.0, %v2447
      %v2449 = vpop.f32.mrf.mxu0
      %2450 = vmatprep.mubr.bf16.mxu0 %v2164
      %2451 = vmatmul.mubr.bf16.gmra.mxu0 %v2163
      %v2452 = vpop.f32.mrf.mxu0
      %v2453 = vadd.f32 0.0, %v2452
      %v2454 = vpop.f32.mrf.mxu0
      %v2455 = vpop.f32.mrf.mxu0
      %v2456 = vadd.f32 0.0, %v2455
      %v2457 = vpop.f32.mrf.mxu0
      %2458 = vmatprep.mubr.bf16.mxu0 %v2167
      %2459 = vmatmul.mubr.bf16.gmra.mxu0 %v2166
      %v2460 = vpop.f32.mrf.mxu0
      %v2461 = vadd.f32 0.0, %v2460
      %v2462 = vpop.f32.mrf.mxu0
      %v2463 = vpop.f32.mrf.mxu0
      %v2464 = vadd.f32 0.0, %v2463
      %v2465 = vpop.f32.mrf.mxu0
      %2466 = vmatprep.mubr.bf16.mxu0 %v2170
      %2467 = vmatmul.mubr.bf16.gmra.mxu0 %v2169
      %v2468 = vpop.f32.mrf.mxu0
      %v2469 = vadd.f32 0.0, %v2468
      %v2470 = vpop.f32.mrf.mxu0
      %v2471 = vpop.f32.mrf.mxu0
      %v2472 = vadd.f32 0.0, %v2471
      %v2473 = vpop.f32.mrf.mxu0
      %2474 = vmatprep.mubr.bf16.mxu0 %v2173
      %2475 = vmatmul.mubr.bf16.gmra.mxu0 %v2172
      %v2476 = vpop.f32.mrf.mxu0
      %v2477 = vadd.f32 0.0, %v2476
      %v2478 = vpop.f32.mrf.mxu0
      %v2479 = vpop.f32.mrf.mxu0
      %v2480 = vadd.f32 0.0, %v2479
      %v2481 = vpop.f32.mrf.mxu0
      %2482 = vmatprep.mubr.bf16.mxu0 %v2176
      %2483 = vmatmul.mubr.bf16.gmra.mxu0 %v2175
      %v2484 = vpop.f32.mrf.mxu0
      %v2485 = vadd.f32 0.0, %v2484
      %v2486 = vpop.f32.mrf.mxu0
      %v2487 = vpop.f32.mrf.mxu0
      %v2488 = vadd.f32 0.0, %v2487
      %v2489 = vpop.f32.mrf.mxu0
      %2490 = vmatprep.mubr.bf16.mxu0 %v2179
      %2491 = vmatmul.mubr.bf16.gmra.mxu0 %v2178
      %v2492 = vpop.f32.mrf.mxu0
      %v2493 = vadd.f32 0.0, %v2492
      %v2494 = vpop.f32.mrf.mxu0
      %v2495 = vpop.f32.mrf.mxu0
      %v2496 = vadd.f32 0.0, %v2495
      %v2497 = vpop.f32.mrf.mxu0
      %2498 = vmatprep.mubr.bf16.mxu0 %v2182
      %2499 = vmatmul.mubr.bf16.gmra.mxu0 %v2181
      %v2500 = vpop.f32.mrf.mxu0
      %v2501 = vadd.f32 0.0, %v2500
      %v2502 = vpop.f32.mrf.mxu0
      %v2503 = vpop.f32.mrf.mxu0
      %v2504 = vadd.f32 0.0, %v2503
      %v2505 = vpop.f32.mrf.mxu0
      %2506 = vmatprep.mubr.bf16.mxu0 %v2185
      %2507 = vmatmul.mubr.bf16.gmra.mxu0 %v2184
      %v2508 = vpop.f32.mrf.mxu0
      %v2509 = vadd.f32 0.0, %v2508
      %v2510 = vpop.f32.mrf.mxu0
      %v2511 = vpop.f32.mrf.mxu0
      %v2512 = vadd.f32 0.0, %v2511
      %v2513 = vpop.f32.mrf.mxu0
      %2514 = vmatprep.mubr.bf16.mxu0 %v2188
      %2515 = vmatmul.mubr.bf16.gmra.mxu0 %v2187
      %v2516 = vpop.f32.mrf.mxu0
      %v2517 = vadd.f32 0.0, %v2516
      %v2518 = vpop.f32.mrf.mxu0
      %v2519 = vpop.f32.mrf.mxu0
      %v2520 = vadd.f32 0.0, %v2519
      %v2521 = vpop.f32.mrf.mxu0
      %2522 = vmatprep.mubr.bf16.mxu0 %v2191
      %2523 = vmatmul.mubr.bf16.gmra.mxu0 %v2190
      %v2524 = vpop.f32.mrf.mxu0
      %v2525 = vadd.f32 0.0, %v2524
      %v2526 = vpop.f32.mrf.mxu0
      %v2527 = vpop.f32.mrf.mxu0
      %v2528 = vadd.f32 0.0, %v2527
      %v2529 = vpop.f32.mrf.mxu0
      %2530 = vmatprep.mubr.bf16.mxu0 %v2194
      %2531 = vmatmul.mubr.bf16.gmra.mxu0 %v2193
      %v2532 = vpop.f32.mrf.mxu0
      %v2533 = vadd.f32 0.0, %v2532
      %v2534 = vpop.f32.mrf.mxu0
      %v2535 = vpop.f32.mrf.mxu0
      %v2536 = vadd.f32 0.0, %v2535
      %v2537 = vpop.f32.mrf.mxu0
      %2538 = vmatprep.mubr.bf16.mxu0 %v2197
      %2539 = vmatmul.mubr.bf16.gmra.mxu0 %v2196
      %v2540 = vpop.f32.mrf.mxu0
      %v2541 = vadd.f32 0.0, %v2540
      %v2542 = vpop.f32.mrf.mxu0
      %v2543 = vpop.f32.mrf.mxu0
      %v2544 = vadd.f32 0.0, %v2543
      %v2545 = vpop.f32.mrf.mxu0
      %2546 = vmatprep.mubr.bf16.mxu0 %v2200
      %2547 = vmatmul.mubr.bf16.gmra.mxu0 %v2199
      %v2548 = vpop.f32.mrf.mxu0
      %v2549 = vadd.f32 0.0, %v2548
      %v2550 = vpop.f32.mrf.mxu0
      %v2551 = vpop.f32.mrf.mxu0
      %v2552 = vadd.f32 0.0, %v2551
      %v2553 = vpop.f32.mrf.mxu0
      %2554 = vdwg.mxu0
      %2555 = vmatprep.subr.bf16.mxu0 0
      %2556 = vmatpush1.bf16.msra.mxu0 %v2369
      %2557 = vmatprep.subr.bf16.mxu0 0
      %2558 = vmatpush1.bf16.msra.mxu0 %v2368
      %2559 = vmatprep.subr.bf16.mxu0 0
      %2560 = vmatpush1.bf16.msra.mxu0 %v2367
      %2561 = vmatprep.subr.bf16.mxu0 0
      %2562 = vmatpush1.bf16.msra.mxu0 %v2366
      %2563 = vmatprep.subr.bf16.mxu0 0
      %2564 = vmatpush1.bf16.msra.mxu0 %v2365
      %2565 = vmatprep.subr.bf16.mxu0 0
      %2566 = vmatpush1.bf16.msra.mxu0 %v2364
      %2567 = vmatprep.subr.bf16.mxu0 0
      %2568 = vmatpush1.bf16.msra.mxu0 %v2363
      %2569 = vmatprep.subr.bf16.mxu0 0
      %2570 = vmatpush1.bf16.msra.mxu0 %v2362
      %2571 = vmatprep.subr.bf16.mxu0 0
      %2572 = vmatpush2.bf16.msra.mxu0 0
      %2573 = vmatprep.subr.bf16.mxu0 0
      %2574 = vmatpush2.bf16.msra.mxu0 0
      %2575 = vmatprep.subr.bf16.mxu0 0
      %2576 = vmatpush2.bf16.msra.mxu0 0
      %2577 = vmatprep.subr.bf16.mxu0 0
      %2578 = vmatpush2.bf16.msra.mxu0 0
      %2579 = vmatprep.subr.bf16.mxu0 0
      %2580 = vmatpush2.bf16.msra.mxu0 0
      %2581 = vmatprep.subr.bf16.mxu0 0
      %2582 = vmatpush2.bf16.msra.mxu0 0
      %2583 = vmatprep.subr.bf16.mxu0 0
      %2584 = vmatpush2.bf16.msra.mxu0 0
      %2585 = vmatprep.subr.bf16.mxu0 0
      %2586 = vmatpush2.bf16.msra.mxu0 0
      %2587 = vmatprep.mubr.bf16.mxu0 0
      %2588 = vmatmul.mubr.bf16.gmra.mxu0 %v2156
      %v2589 = vpop.f32.mrf.mxu0
      %v2590 = vadd.f32 %v2429, %v2589
      %v2591 = vpop.f32.mrf.mxu0
      %v2592 = vpop.f32.mrf.mxu0
      %v2593 = vadd.f32 %v2432, %v2592
      %v2594 = vpop.f32.mrf.mxu0
      %2595 = vmatprep.mubr.bf16.mxu0 0
      %2596 = vmatmul.mubr.bf16.gmra.mxu0 %v2159
      %v2597 = vpop.f32.mrf.mxu0
      %v2598 = vadd.f32 %v2437, %v2597
      %v2599 = vpop.f32.mrf.mxu0
      %v2600 = vpop.f32.mrf.mxu0
      %v2601 = vadd.f32 %v2440, %v2600
      %v2602 = vpop.f32.mrf.mxu0
      %2603 = vmatprep.mubr.bf16.mxu0 0
      %2604 = vmatmul.mubr.bf16.gmra.mxu0 %v2162
      %v2605 = vpop.f32.mrf.mxu0
      %v2606 = vadd.f32 %v2445, %v2605
      %v2607 = vpop.f32.mrf.mxu0
      %v2608 = vpop.f32.mrf.mxu0
      %v2609 = vadd.f32 %v2448, %v2608
      %v2610 = vpop.f32.mrf.mxu0
      %2611 = vmatprep.mubr.bf16.mxu0 0
      %2612 = vmatmul.mubr.bf16.gmra.mxu0 %v2165
      %v2613 = vpop.f32.mrf.mxu0
      %v2614 = vadd.f32 %v2453, %v2613
      %v2615 = vpop.f32.mrf.mxu0
      %v2616 = vpop.f32.mrf.mxu0
      %v2617 = vadd.f32 %v2456, %v2616
      %v2618 = vpop.f32.mrf.mxu0
      %2619 = vmatprep.mubr.bf16.mxu0 0
      %2620 = vmatmul.mubr.bf16.gmra.mxu0 %v2168
      %v2621 = vpop.f32.mrf.mxu0
      %v2622 = vadd.f32 %v2461, %v2621
      %v2623 = vpop.f32.mrf.mxu0
      %v2624 = vpop.f32.mrf.mxu0
      %v2625 = vadd.f32 %v2464, %v2624
      %v2626 = vpop.f32.mrf.mxu0
      %2627 = vmatprep.mubr.bf16.mxu0 0
      %2628 = vmatmul.mubr.bf16.gmra.mxu0 %v2171
      %v2629 = vpop.f32.mrf.mxu0
      %v2630 = vadd.f32 %v2469, %v2629
      %v2631 = vpop.f32.mrf.mxu0
      %v2632 = vpop.f32.mrf.mxu0
      %v2633 = vadd.f32 %v2472, %v2632
      %v2634 = vpop.f32.mrf.mxu0
      %2635 = vmatprep.mubr.bf16.mxu0 0
      %2636 = vmatmul.mubr.bf16.gmra.mxu0 %v2174
      %v2637 = vpop.f32.mrf.mxu0
      %v2638 = vadd.f32 %v2477, %v2637
      %v2639 = vpop.f32.mrf.mxu0
      %v2640 = vpop.f32.mrf.mxu0
      %v2641 = vadd.f32 %v2480, %v2640
      %v2642 = vpop.f32.mrf.mxu0
      %2643 = vmatprep.mubr.bf16.mxu0 0
      %2644 = vmatmul.mubr.bf16.gmra.mxu0 %v2177
      %v2645 = vpop.f32.mrf.mxu0
      %v2646 = vadd.f32 %v2485, %v2645
      %v2647 = vpop.f32.mrf.mxu0
      %v2648 = vpop.f32.mrf.mxu0
      %v2649 = vadd.f32 %v2488, %v2648
      %v2650 = vpop.f32.mrf.mxu0
      %2651 = vmatprep.mubr.bf16.mxu0 0
      %2652 = vmatmul.mubr.bf16.gmra.mxu0 %v2180
      %v2653 = vpop.f32.mrf.mxu0
      %v2654 = vadd.f32 %v2493, %v2653
      %v2655 = vpop.f32.mrf.mxu0
      %v2656 = vpop.f32.mrf.mxu0
      %v2657 = vadd.f32 %v2496, %v2656
      %v2658 = vpop.f32.mrf.mxu0
      %2659 = vmatprep.mubr.bf16.mxu0 0
      %2660 = vmatmul.mubr.bf16.gmra.mxu0 %v2183
      %v2661 = vpop.f32.mrf.mxu0
      %v2662 = vadd.f32 %v2501, %v2661
      %v2663 = vpop.f32.mrf.mxu0
      %v2664 = vpop.f32.mrf.mxu0
      %v2665 = vadd.f32 %v2504, %v2664
      %v2666 = vpop.f32.mrf.mxu0
      %2667 = vmatprep.mubr.bf16.mxu0 0
      %2668 = vmatmul.mubr.bf16.gmra.mxu0 %v2186
      %v2669 = vpop.f32.mrf.mxu0
      %v2670 = vadd.f32 %v2509, %v2669
      %v2671 = vpop.f32.mrf.mxu0
      %v2672 = vpop.f32.mrf.mxu0
      %v2673 = vadd.f32 %v2512, %v2672
      %v2674 = vpop.f32.mrf.mxu0
      %2675 = vmatprep.mubr.bf16.mxu0 0
      %2676 = vmatmul.mubr.bf16.gmra.mxu0 %v2189
      %v2677 = vpop.f32.mrf.mxu0
      %v2678 = vadd.f32 %v2517, %v2677
      %v2679 = vpop.f32.mrf.mxu0
      %v2680 = vpop.f32.mrf.mxu0
      %v2681 = vadd.f32 %v2520, %v2680
      %v2682 = vpop.f32.mrf.mxu0
      %2683 = vmatprep.mubr.bf16.mxu0 0
      %2684 = vmatmul.mubr.bf16.gmra.mxu0 %v2192
      %v2685 = vpop.f32.mrf.mxu0
      %v2686 = vadd.f32 %v2525, %v2685
      %v2687 = vpop.f32.mrf.mxu0
      %v2688 = vpop.f32.mrf.mxu0
      %v2689 = vadd.f32 %v2528, %v2688
      %v2690 = vpop.f32.mrf.mxu0
      %2691 = vmatprep.mubr.bf16.mxu0 0
      %2692 = vmatmul.mubr.bf16.gmra.mxu0 %v2195
      %v2693 = vpop.f32.mrf.mxu0
      %v2694 = vadd.f32 %v2533, %v2693
      %v2695 = vpop.f32.mrf.mxu0
      %v2696 = vpop.f32.mrf.mxu0
      %v2697 = vadd.f32 %v2536, %v2696
      %v2698 = vpop.f32.mrf.mxu0
      %2699 = vmatprep.mubr.bf16.mxu0 0
      %2700 = vmatmul.mubr.bf16.gmra.mxu0 %v2198
      %v2701 = vpop.f32.mrf.mxu0
      %v2702 = vadd.f32 %v2541, %v2701
      %v2703 = vpop.f32.mrf.mxu0
      %v2704 = vpop.f32.mrf.mxu0
      %v2705 = vadd.f32 %v2544, %v2704
      %v2706 = vpop.f32.mrf.mxu0
      %2707 = vmatprep.mubr.bf16.mxu0 0
      %2708 = vmatmul.mubr.bf16.gmra.mxu0 %v2201
      %v2709 = vpop.f32.mrf.mxu0
      %v2710 = vadd.f32 %v2549, %v2709
      %v2711 = vpop.f32.mrf.mxu0
      %v2712 = vpop.f32.mrf.mxu0
      %v2713 = vadd.f32 %v2552, %v2712
      %v2714 = vpop.f32.mrf.mxu0
      %2715 = vdwg.mxu0
      %v2716 = vadd.f32 %v1754, %v2590
      %v2717 = vadd.f32 %v1757, %v2593
      %v2718 = vadd.f32 %v1762, %v2598
      %v2719 = vadd.f32 %v1765, %v2601
      %v2720 = vadd.f32 %v1770, %v2606
      %v2721 = vadd.f32 %v1773, %v2609
      %v2722 = vadd.f32 %v1778, %v2614
      %v2723 = vadd.f32 %v1781, %v2617
      %v2724 = vadd.f32 %v1786, %v2622
      %v2725 = vadd.f32 %v1789, %v2625
      %v2726 = vadd.f32 %v1794, %v2630
      %v2727 = vadd.f32 %v1797, %v2633
      %v2728 = vadd.f32 %v1802, %v2638
      %v2729 = vadd.f32 %v1805, %v2641
      %v2730 = vadd.f32 %v1810, %v2646
      %v2731 = vadd.f32 %v1813, %v2649
      %v2732 = vadd.f32 %v1818, %v2654
      %v2733 = vadd.f32 %v1821, %v2657
      %v2734 = vadd.f32 %v1826, %v2662
      %v2735 = vadd.f32 %v1829, %v2665
      %v2736 = vadd.f32 %v1834, %v2670
      %v2737 = vadd.f32 %v1837, %v2673
      %v2738 = vadd.f32 %v1842, %v2678
      %v2739 = vadd.f32 %v1845, %v2681
      %v2740 = vadd.f32 %v1850, %v2686
      %v2741 = vadd.f32 %v1853, %v2689
      %v2742 = vadd.f32 %v1858, %v2694
      %v2743 = vadd.f32 %v1861, %v2697
      %v2744 = vadd.f32 %v1866, %v2702
      %v2745 = vadd.f32 %v1869, %v2705
      %v2746 = vadd.f32 %v1874, %v2710
      %v2747 = vadd.f32 %v1877, %v2713
      %v2748 = vld [vmem:[%s2] sm:$0x1]
      %v2750 = vlaneseq
      %v2751 = vshrl.u32 %v2750, 7
      %v2752 = vsub.s32 0, %v2751
      %v2753 = vrot.slane %v2748, %v2752
      %v2755 = vadd.f32 %v2716, %v2753
      %v2756 = vadd.f32 %v2717, %v2753
      %v2757 = vadd.f32 %v2718, %v2753
      %v2758 = vadd.f32 %v2719, %v2753
      %v2759 = vadd.f32 %v2720, %v2753
      %v2760 = vadd.f32 %v2721, %v2753
      %v2761 = vadd.f32 %v2722, %v2753
      %v2762 = vadd.f32 %v2723, %v2753
      %v2763 = vadd.f32 %v2724, %v2753
      %v2764 = vadd.f32 %v2725, %v2753
      %v2765 = vadd.f32 %v2726, %v2753
      %v2766 = vadd.f32 %v2727, %v2753
      %v2767 = vadd.f32 %v2728, %v2753
      %v2768 = vadd.f32 %v2729, %v2753
      %v2769 = vadd.f32 %v2730, %v2753
      %v2770 = vadd.f32 %v2731, %v2753
      %v2771 = vadd.f32 %v2732, %v2753
      %v2772 = vadd.f32 %v2733, %v2753
      %v2773 = vadd.f32 %v2734, %v2753
      %v2774 = vadd.f32 %v2735, %v2753
      %v2775 = vadd.f32 %v2736, %v2753
      %v2776 = vadd.f32 %v2737, %v2753
      %v2777 = vadd.f32 %v2738, %v2753
      %v2778 = vadd.f32 %v2739, %v2753
      %v2779 = vadd.f32 %v2740, %v2753
      %v2780 = vadd.f32 %v2741, %v2753
      %v2781 = vadd.f32 %v2742, %v2753
      %v2782 = vadd.f32 %v2743, %v2753
      %v2783 = vadd.f32 %v2744, %v2753
      %v2784 = vadd.f32 %v2745, %v2753
      %v2785 = vadd.f32 %v2746, %v2753
      %v2786 = vadd.f32 %v2747, %v2753
      %2787 = vst [vmem:[%s204] sm:$0xff] %v2755
      %2788 = vst [vmem:[%s204 + $0x8] sm:$0xff] %v2756
      %2789 = vst [vmem:[%s204 + $0x10] sm:$0xff] %v2757
      %2790 = vst [vmem:[%s204 + $0x18] sm:$0xff] %v2758
      %2791 = vst [vmem:[%s204 + $0x20] sm:$0xff] %v2759
      %2792 = vst [vmem:[%s204 + $0x28] sm:$0xff] %v2760
      %2793 = vst [vmem:[%s204 + $0x30] sm:$0xff] %v2761
      %2794 = vst [vmem:[%s204 + $0x38] sm:$0xff] %v2762
      %2795 = vst [vmem:[%s204 + $0x40] sm:$0xff] %v2763
      %2796 = vst [vmem:[%s204 + $0x48] sm:$0xff] %v2764
      %2797 = vst [vmem:[%s204 + $0x50] sm:$0xff] %v2765
      %2798 = vst [vmem:[%s204 + $0x58] sm:$0xff] %v2766
      %2799 = vst [vmem:[%s204 + $0x60] sm:$0xff] %v2767
      %2800 = vst [vmem:[%s204 + $0x68] sm:$0xff] %v2768
      %2801 = vst [vmem:[%s204 + $0x70] sm:$0xff] %v2769
      %2802 = vst [vmem:[%s204 + $0x78] sm:$0xff] %v2770
      %2803 = vst [vmem:[%s204 + $0x80] sm:$0xff] %v2771
      %2804 = vst [vmem:[%s204 + $0x88] sm:$0xff] %v2772
      %2805 = vst [vmem:[%s204 + $0x90] sm:$0xff] %v2773
      %2806 = vst [vmem:[%s204 + $0x98] sm:$0xff] %v2774
      %2807 = vst [vmem:[%s204 + $0xa0] sm:$0xff] %v2775
      %2808 = vst [vmem:[%s204 + $0xa8] sm:$0xff] %v2776
      %2809 = vst [vmem:[%s204 + $0xb0] sm:$0xff] %v2777
      %2810 = vst [vmem:[%s204 + $0xb8] sm:$0xff] %v2778
      %2811 = vst [vmem:[%s204 + $0xc0] sm:$0xff] %v2779
      %2812 = vst [vmem:[%s204 + $0xc8] sm:$0xff] %v2780
      %2813 = vst [vmem:[%s204 + $0xd0] sm:$0xff] %v2781
      %2814 = vst [vmem:[%s204 + $0xd8] sm:$0xff] %v2782
      %2815 = vst [vmem:[%s204 + $0xe0] sm:$0xff] %v2783
      %2816 = vst [vmem:[%s204 + $0xe8] sm:$0xff] %v2784
      %2817 = vst [vmem:[%s204 + $0xf0] sm:$0xff] %v2785
      %2818 = vst [vmem:[%s204 + $0xf8] sm:$0xff] %v2786
      %v2819 = vadd.f32 %v2755, %v2756
      %v2820 = vadd.f32 %v2819, %v2757
      %v2821 = vadd.f32 %v2820, %v2758
      %v2822 = vadd.f32 %v2821, %v2759
      %v2823 = vadd.f32 %v2822, %v2760
      %v2824 = vadd.f32 %v2823, %v2761
      %v2825 = vadd.f32 %v2824, %v2762
      %v2826 = vadd.f32 %v2825, %v2763
      %v2827 = vadd.f32 %v2826, %v2764
      %v2828 = vadd.f32 %v2827, %v2765
      %v2829 = vadd.f32 %v2828, %v2766
      %v2830 = vadd.f32 %v2829, %v2767
      %v2831 = vadd.f32 %v2830, %v2768
      %v2832 = vadd.f32 %v2831, %v2769
      %v2833 = vadd.f32 %v2832, %v2770
      %v2834 = vadd.f32 %v2833, %v2771
      %v2835 = vadd.f32 %v2834, %v2772
      %v2836 = vadd.f32 %v2835, %v2773
      %v2837 = vadd.f32 %v2836, %v2774
      %v2838 = vadd.f32 %v2837, %v2775
      %v2839 = vadd.f32 %v2838, %v2776
      %v2840 = vadd.f32 %v2839, %v2777
      %v2841 = vadd.f32 %v2840, %v2778
      %v2842 = vadd.f32 %v2841, %v2779
      %v2843 = vadd.f32 %v2842, %v2780
      %v2844 = vadd.f32 %v2843, %v2781
      %v2845 = vadd.f32 %v2844, %v2782
      %v2846 = vadd.f32 %v2845, %v2783
      %v2847 = vadd.f32 %v2846, %v2784
      %v2848 = vadd.f32 %v2847, %v2785
      %v2849 = vadd.f32 %v2848, %v2786
      %v2850 = vrot.slane %v2849, 4
      %v2851 = vadd.f32 %v2849, %v2850
      %v2852 = vrot.slane %v2851, 2
      %v2853 = vadd.f32 %v2851, %v2852
      %v2854 = vrot.slane %v2853, 1
      %v2855 = vadd.f32 %v2853, %v2854
      %v2856 = vmul.f32 %v2755, %v2755
      %v2857 = vmul.f32 %v2756, %v2756
      %v2858 = vmul.f32 %v2757, %v2757
      %v2859 = vmul.f32 %v2758, %v2758
      %v2860 = vmul.f32 %v2759, %v2759
      %v2861 = vmul.f32 %v2760, %v2760
      %v2862 = vmul.f32 %v2761, %v2761
      %v2863 = vmul.f32 %v2762, %v2762
      %v2864 = vmul.f32 %v2763, %v2763
      %v2865 = vmul.f32 %v2764, %v2764
      %v2866 = vmul.f32 %v2765, %v2765
      %v2867 = vmul.f32 %v2766, %v2766
      %v2868 = vmul.f32 %v2767, %v2767
      %v2869 = vmul.f32 %v2768, %v2768
      %v2870 = vmul.f32 %v2769, %v2769
      %v2871 = vmul.f32 %v2770, %v2770
      %v2872 = vmul.f32 %v2771, %v2771
      %v2873 = vmul.f32 %v2772, %v2772
      %v2874 = vmul.f32 %v2773, %v2773
      %v2875 = vmul.f32 %v2774, %v2774
      %v2876 = vmul.f32 %v2775, %v2775
      %v2877 = vmul.f32 %v2776, %v2776
      %v2878 = vmul.f32 %v2777, %v2777
      %v2879 = vmul.f32 %v2778, %v2778
      %v2880 = vmul.f32 %v2779, %v2779
      %v2881 = vmul.f32 %v2780, %v2780
      %v2882 = vmul.f32 %v2781, %v2781
      %v2883 = vmul.f32 %v2782, %v2782
      %v2884 = vmul.f32 %v2783, %v2783
      %v2885 = vmul.f32 %v2784, %v2784
      %v2886 = vmul.f32 %v2785, %v2785
      %v2887 = vmul.f32 %v2786, %v2786
      %v2888 = vadd.f32 %v2856, %v2857
      %v2889 = vadd.f32 %v2888, %v2858
      %v2890 = vadd.f32 %v2889, %v2859
      %v2891 = vadd.f32 %v2890, %v2860
      %v2892 = vadd.f32 %v2891, %v2861
      %v2893 = vadd.f32 %v2892, %v2862
      %v2894 = vadd.f32 %v2893, %v2863
      %v2895 = vadd.f32 %v2894, %v2864
      %v2896 = vadd.f32 %v2895, %v2865
      %v2897 = vadd.f32 %v2896, %v2866
      %v2898 = vadd.f32 %v2897, %v2867
      %v2899 = vadd.f32 %v2898, %v2868
      %v2900 = vadd.f32 %v2899, %v2869
      %v2901 = vadd.f32 %v2900, %v2870
      %v2902 = vadd.f32 %v2901, %v2871
      %v2903 = vadd.f32 %v2902, %v2872
      %v2904 = vadd.f32 %v2903, %v2873
      %v2905 = vadd.f32 %v2904, %v2874
      %v2906 = vadd.f32 %v2905, %v2875
      %v2907 = vadd.f32 %v2906, %v2876
      %v2908 = vadd.f32 %v2907, %v2877
      %v2909 = vadd.f32 %v2908, %v2878
      %v2910 = vadd.f32 %v2909, %v2879
      %v2911 = vadd.f32 %v2910, %v2880
      %v2912 = vadd.f32 %v2911, %v2881
      %v2913 = vadd.f32 %v2912, %v2882
      %v2914 = vadd.f32 %v2913, %v2883
      %v2915 = vadd.f32 %v2914, %v2884
      %v2916 = vadd.f32 %v2915, %v2885
      %v2917 = vadd.f32 %v2916, %v2886
      %v2918 = vadd.f32 %v2917, %v2887
      %v2919 = vrot.slane %v2918, 4
      %v2920 = vadd.f32 %v2918, %v2919
      %v2921 = vrot.slane %v2920, 2
      %v2922 = vadd.f32 %v2920, %v2921
      %v2923 = vrot.slane %v2922, 1
      %v2924 = vadd.f32 %v2922, %v2923
      %vm2925 = vcmask 1040384
      %v2926 = vsel %vm2925, %v2855, %v2924
      %2927 = vst [vmem:[%s208] sm:$0x3] %v2926
      %p2928 = scmp.lt.s32.totalorder %s16, 1
      %s2929 = scalar_select %p2928, %s16, 1
      %s2930 = smul.addr %s2929, 32
      %s2931 = smul.addr %s2930, 8
      %s2932 = scalar_lea.vmem %s3, %s2931
      %p2933 = scmp.lt.s32.totalorder %s16, 1
      %s2934 = scalar_select %p2933, %s16, 1
      %s2935 = smul.addr %s2934, 2
      %s2936 = scalar_lea.vmem %s4, %s2935
      // Predicated region
      $region33: #{double_conv_forward.4} parent=31 // pred_check
        %p2937 = pneg %p102
      $region34: #{double_conv_forward.4} parent=31 // pred_check_branch
        %2939 = sbr.rel (%p2937) target = $region36
      $region35: #{double_conv_forward.4} parent=31 // pred_region
        _
      $region36: #{double_conv_forward.4} parent=31 // pred_fallthru
        _
      // Predicated region
      $region37: #{double_conv_forward.4} parent=31 // pred_check
        %p2940 = pneg %p128
      $region38: #{double_conv_forward.4} parent=31 // pred_check_branch
        %2942 = sbr.rel (%p2940) target = $region40
      $region39: #{double_conv_forward.4} parent=31 // pred_region
        _
      $region40: #{double_conv_forward.4} parent=31 // pred_fallthru
        _
    $region32: #{double_conv_forward.4} parent=5 // pred_fallthru
      _
    %p2943 = scmp.le.s32.totalorder 2, %s11
    // Predicated region
    $region41: #{double_conv_forward.4} parent=5 // pred_check
      %p2944 = pneg %p2943
    $region42: #{double_conv_forward.4} parent=5 // pred_check_branch
      %2946 = sbr.rel (%p2944) target = $region44
    $region43: #{double_conv_forward.4} parent=5 // pred_region
      %s2947 = ssub.s32 %s11, 2
      // Predicated region
      $region45: #{double_conv_forward.4} parent=43 // pred_check
        %p2948 = pneg %p108
      $region46: #{double_conv_forward.4} parent=43 // pred_check_branch
        %2950 = sbr.rel (%p2948) target = $region48
      $region47: #{double_conv_forward.4} parent=43 // pred_region
        %p2951 = scmp.lt.s32.totalorder %s17, 1
        %s2952 = scalar_select %p2951, %s17, 1
        %s2953 = smul.addr %s2952, 32
        %s2954 = smul.addr %s2953, 8
        %s2955 = scalar_lea.vmem %s3, %s2954
      $region48: #{double_conv_forward.4} parent=43 // pred_fallthru
        _
      // Predicated region
      $region49: #{double_conv_forward.4} parent=43 // pred_check
        %p2956 = pneg %p134
      $region50: #{double_conv_forward.4} parent=43 // pred_check_branch
        %2958 = sbr.rel (%p2956) target = $region52
      $region51: #{double_conv_forward.4} parent=43 // pred_region
        %p2959 = scmp.lt.s32.totalorder %s17, 1
        %s2960 = scalar_select %p2959, %s17, 1
        %s2961 = smul.addr %s2960, 2
        %s2962 = scalar_lea.vmem %s4, %s2961
      $region52: #{double_conv_forward.4} parent=43 // pred_fallthru
        _
    $region44: #{double_conv_forward.4} parent=5 // pred_fallthru
      _
  $region6: #{double_conv_forward.4} parent=0 // loop_footer
    %s15 = sadd.s32 1, %s11
  $region7: #{double_conv_forward.4} parent=0 // loop_footer_branch
    %10 = sbr.rel target = $region3
  $region8: #{double_conv_forward.4} parent=0 // loop_exit
    _

</llo_original>
